<compile_context>
chip_gen: v7x
topology: tpu7x:2x2x1
jax: 0.10.0
libtpu: 0.0.40
codegen_flags: <defaults>
</compile_context>

<pallas_src>
import jax
import jax.numpy as jnp
from jax.experimental import pallas as pl
from jax.experimental.pallas import tpu as pltpu

# ------------------------- configuration (scaled-down MoCov2) ----------------
DIM      = 128     # projection output dim (matches real MoCo dim=128)
K_QUEUE  = 256     # queue size            (stands in for 65536)
M_MOM    = 0.999   # key-encoder momentum
T_TEMP   = 0.2     # softmax temperature
FEAT     = 128     # backbone feature dim  (stands in for 2048)
HIDDEN   = 128     # projection hidden dim (stands in for 2048)
BN_EPS   = 1e-5
NORM_EPS = 1e-12   # F.normalize eps

# padded logits width: 1 (l_pos) + K_QUEUE (l_neg), rounded up to 128 lanes
K_PAD = ((1 + K_QUEUE + 127) // 128) * 128           # = 384

# rows of the packed "small params" block (all are width-128 row vectors;
# requires FEAT == HIDDEN == DIM == 128)
R_EB, R_B1, R_G, R_BE, R_B2 = 0, 1, 2, 3, 4
SMALL_ROWS = 8                                        # pad to one (8,128) tile

VMEM_SPEC = pl.BlockSpec(memory_space=pltpu.MemorySpace.VMEM)
SMEM_SPEC = pl.BlockSpec(memory_space=pltpu.MemorySpace.SMEM)


# ------------------------------ fused kernel ---------------------------------
def _mocov2_kernel(
    # inputs
    xq_ref, xk_ref, ptr_ref, queue_ref,
    eqw_ref, qw1_ref, qw2_ref, qsm_ref,       # query params (weights + packed rows)
    ekw_ref, kw1_ref, kw2_ref, ksm_ref,       # key   params (weights + packed rows)
    # outputs
    qfeat_ref, logits_ref, queue_out_ref,
    ekw_out, kw1_out, kw2_out, ksm_out,
):
    inv_t = 1.0 / T_TEMP

    def encode(x, w, b):
        # synthetic encoder: Linear + ReLU   (TODO(synk): full ResNet50 omitted)
        h = jnp.dot(x, w, preferred_element_type=jnp.float32) + b
        return jnp.maximum(h, 0.0)

    def project(x, w1, w2, small):
        # Linear -> BatchNorm1d (training-mode batch stats, biased variance)
        # -> ReLU -> Linear -> L2 normalize along dim=1
        b1 = small[R_B1:R_B1 + 1, :]
        g  = small[R_G:R_G + 1, :]
        be = small[R_BE:R_BE + 1, :]
        b2 = small[R_B2:R_B2 + 1, :]
        h = jnp.dot(x, w1, preferred_element_type=jnp.float32) + b1
        mean = jnp.mean(h, axis=0, keepdims=True)
        var = jnp.mean(jnp.square(h - mean), axis=0, keepdims=True)
        h = (h - mean) * jax.lax.rsqrt(var + BN_EPS) * g + be
        h = jnp.maximum(h, 0.0)
        z = jnp.dot(h, w2, preferred_element_type=jnp.float32) + b2
        # F.normalize: z / max(||z||, eps)  ==  z * rsqrt(max(sum z^2, eps^2))
        inv_norm = jax.lax.rsqrt(
            jnp.maximum(jnp.sum(z * z, axis=1, keepdims=True), NORM_EPS * NORM_EPS))
        return z * inv_norm

    # ---- query branch (backbone + projection fused) --------------------------
    qsm = qsm_ref[...]
    q = encode(xq_ref[...], eqw_ref[...], qsm[R_EB:R_EB + 1, :])
    qfeat_ref[...] = q
    q_proj = project(q, qw1_ref[...], qw2_ref[...], qsm)

    # ---- momentum (EMA) update of ALL key parameters, fused ------------------
    def ema(pq, pk):
        return pk * M_MOM + pq * (1.0 - M_MOM)

    ekw = ema(eqw_ref[...], ekw_ref[...]); ekw_out[...] = ekw
    kw1 = ema(qw1_ref[...], kw1_ref[...]); kw1_out[...] = kw1
    kw2 = ema(qw2_ref[...], kw2_ref[...]); kw2_out[...] = kw2
    ksm = ema(qsm,          ksm_ref[...]); ksm_out[...] = ksm

    # ---- key branch with the freshly updated key parameters (no_grad branch) -
    k = encode(xk_ref[...], ekw, ksm[R_EB:R_EB + 1, :])
    k_proj = project(k, kw1, kw2, ksm)

    # ---- contrastive logits: single lane-dense padded (N, K_PAD) store -------
    # queue layout: (K_PAD, DIM), row 0 unused (zero), rows 1..K = keys,
    # rows > K zero.  So q_proj @ queue^T already puts l_neg in columns 1..K
    # and zeros in column 0; column 0 is then replaced by l_pos.
    n = q_proj.shape[0]
    queue_vals = queue_ref[...]                                     # (K_PAD, DIM)
    l_pos = jnp.sum(q_proj * k_proj, axis=1, keepdims=True)         # (n, 1)
    l_neg = jax.lax.dot_general(                                    # (n, K_PAD)
        q_proj, queue_vals, (((1,), (1,)), ((), ())),
        preferred_element_type=jnp.float32)
    col = jax.lax.broadcasted_iota(jnp.int32, (n, K_PAD), 1)
    logits_ref[...] = jnp.where(col == 0, l_pos, l_neg) * inv_t

    # ---- dequeue & enqueue (aliased queue) ------------------------------------
    # Single vectorized scatter instead of an n-pass where loop:
    #   S[i, r] = (r == row0 + i)  ->  scatter = S^T @ k_proj  (tiny MXU matmul)
    #   new_queue = in_window ? scatter : old_queue
    ptr = ptr_ref[0]
    row0 = ptr + 1                                  # payload starts at row 1
    r_idx = jax.lax.broadcasted_iota(jnp.int32, (n, K_PAD), 1)      # (n, K_PAD)
    i_idx = jax.lax.broadcasted_iota(jnp.int32, (n, K_PAD), 0)      # (n, K_PAD)
    sel = (r_idx == i_idx + row0).astype(jnp.float32)               # one-hot rows
    scatter = jax.lax.dot_general(                                  # (K_PAD, DIM)
        sel, k_proj, (((0,), (0,)), ((), ())),
        preferred_element_type=jnp.float32)
    qrow = jax.lax.broadcasted_iota(jnp.int32, (K_PAD, 1), 0)       # (K_PAD, 1)
    in_window = jnp.logical_and(qrow >= row0, qrow < row0 + n)
    queue_out_ref[...] = jnp.where(in_window, scatter, queue_vals)


# ------------------------------- model ---------------------------------------
def init_state(key, in_features):
    ks = jax.random.split(key, 4)
    eqw = jax.random.normal(ks[0], (in_features, FEAT), jnp.float32) * 0.02
    qw1 = jax.random.normal(ks[1], (FEAT, HIDDEN), jnp.float32) * 0.05
    qw2 = jax.random.normal(ks[2], (HIDDEN, DIM), jnp.float32) * 0.05
    # packed row params: [enc bias, b1, gamma, beta, b2, 0, 0, 0]
    q_small = jnp.zeros((SMALL_ROWS, HIDDEN), jnp.float32).at[R_G, :].set(1.0)

    # encoder_k / projection_k initialized as exact copies of the query nets
    ekw, kw1, kw2 = jnp.array(eqw), jnp.array(qw1), jnp.array(qw2)
    k_small = jnp.array(q_small)

    # queue stored transposed + padded: (K_PAD, DIM); row 0 unused, rows 1..K
    # hold the (unit-normalized) keys, rows > K stay zero forever.
    q0 = jax.random.normal(ks[3], (K_QUEUE, DIM), jnp.float32)
    q0 = q0 / jnp.maximum(jnp.linalg.norm(q0, axis=1, keepdims=True), NORM_EPS)
    queue = jnp.zeros((K_PAD, DIM), jnp.float32).at[1:1 + K_QUEUE, :].set(q0)

    return {"eqw": eqw, "qw1": qw1, "qw2": qw2, "q_small": q_small,
            "ekw": ekw, "kw1": kw1, "kw2": kw2, "k_small": k_small,
            "queue": queue, "queue_ptr": jnp.zeros((1,), jnp.int32)}


def mocov2_forward(im_q, im_k, state):
    n = im_q.shape[0]
    xq = im_q.reshape(n, -1)          # NCHW -> (N, C*H*W), matches torch.flatten
    xk = im_k.reshape(n, -1)

    out_shape = (
        jax.ShapeDtypeStruct((n, FEAT), jnp.float32),          # 0: q features
        jax.ShapeDtypeStruct((n, K_PAD), jnp.float32),         # 1: padded logits
        jax.ShapeDtypeStruct((K_PAD, DIM), jnp.float32),       # 2: updated queue
        jax.ShapeDtypeStruct(state["ekw"].shape, jnp.float32), # 3: new enc_k W
        jax.ShapeDtypeStruct(state["kw1"].shape, jnp.float32), # 4: new proj_k W1
        jax.ShapeDtypeStruct(state["kw2"].shape, jnp.float32), # 5: new proj_k W2
        jax.ShapeDtypeStruct(state["k_small"].shape, jnp.float32),  # 6: new packed rows
    )

    outs = pl.pallas_call(
        _mocov2_kernel,
        out_shape=out_shape,
        in_specs=[VMEM_SPEC, VMEM_SPEC, SMEM_SPEC, VMEM_SPEC] + [VMEM_SPEC] * 8,
        out_specs=tuple([VMEM_SPEC] * 7),
        # queue and every key parameter are updated in place
        input_output_aliases={3: 2, 8: 3, 9: 4, 10: 5, 11: 6},
    )(xq, xk, state["queue_ptr"], state["queue"],
      state["eqw"], state["qw1"], state["qw2"], state["q_small"],
      state["ekw"], state["kw1"], state["kw2"], state["k_small"])

    q_feats, logits_pad, new_queue, nekw, nkw1, nkw2, nksm = outs

    logits = logits_pad[:, :1 + K_QUEUE]            # drop lane padding (glue)
    labels = jnp.zeros((n,), dtype=jnp.int32)

    # TODO(synk): wrap-around branch (ptr + batch > K) not needed: ptr starts
    #             at 0 and the batch size divides K (simple path of reference).
    new_ptr = ((state["queue_ptr"] + n) % K_QUEUE).astype(jnp.int32)

    new_state = dict(state, ekw=nekw, kw1=nkw1, kw2=nkw2, k_small=nksm,
                     queue=new_queue, queue_ptr=new_ptr)
    return (logits, labels, q_feats), new_state


# --------------------------- pure-JAX reference -------------------------------
def reference_forward(im_q, im_k, state):
    n = im_q.shape[0]
    xq = im_q.reshape(n, -1)
    xk = im_k.reshape(n, -1)

    def enc(x, w, sm):
        return jnp.maximum(x @ w + sm[R_EB:R_EB + 1, :], 0.0)

    def proj(x, w1, w2, sm):
        h = x @ w1 + sm[R_B1:R_B1 + 1, :]
        mean = jnp.mean(h, axis=0, keepdims=True)
        var = jnp.mean(jnp.square(h - mean), axis=0, keepdims=True)
        h = (h - mean) * jax.lax.rsqrt(var + BN_EPS) * sm[R_G:R_G + 1, :] \
            + sm[R_BE:R_BE + 1, :]
        h = jnp.maximum(h, 0.0)
        z = h @ w2 + sm[R_B2:R_B2 + 1, :]
        return z * jax.lax.rsqrt(
            jnp.maximum(jnp.sum(z * z, axis=1, keepdims=True), NORM_EPS ** 2))

    ema = lambda a, b: b * M_MOM + a * (1.0 - M_MOM)

    q = enc(xq, state["eqw"], state["q_small"])
    q_proj = proj(q, state["qw1"], state["qw2"], state["q_small"])
    ekw = ema(state["eqw"], state["ekw"])
    kw1 = ema(state["qw1"], state["kw1"])
    kw2 = ema(state["qw2"], state["kw2"])
    ksm = ema(state["q_small"], state["k_small"])
    k = enc(xk, ekw, ksm)
    k_proj = proj(k, kw1, kw2, ksm)

    queue_logical = state["queue"][1:1 + K_QUEUE, :]          # (K, DIM)
    l_pos = jnp.sum(q_proj * k_proj, axis=1, keepdims=True)
    l_neg = q_proj @ queue_logical.T
    logits = jnp.concatenate([l_pos, l_neg], axis=1) * (1.0 / T_TEMP)
    return logits, q, k_proj


# ------------------------------- main -----------------------------------------
if __name__ == "__main__":
    key = jax.random.PRNGKey(0)
    k_imq, k_imk, k_state = jax.random.split(key, 3)

    N, C, H, W = 8, 4, 16, 16
    im_q = jax.random.normal(k_imq, (N, C, H, W), jnp.float32)
    im_k = jax.random.normal(k_imk, (N, C, H, W), jnp.float32)

    state = init_state(k_state, C * H * W)

    fwd = jax.jit(mocov2_forward)
    (logits, labels, q_feats), new_state = fwd(im_q, im_k, state)
    jax.block_until_ready((logits, labels, q_feats, new_state["queue"]))

    # shape / sanity checks
    assert logits.shape == (N, 1 + K_QUEUE)
    assert labels.shape == (N,)
    assert q_feats.shape == (N, FEAT)
    assert bool(jnp.all(jnp.isfinite(logits)))

    # correctness vs. pure-JAX reference (generous tol: matmul precision diffs)
    ref_logits, ref_q, ref_k_proj = reference_forward(im_q, im_k, state)
    assert bool(jnp.allclose(q_feats, ref_q, atol=5e-2, rtol=5e-2))
    assert bool(jnp.allclose(logits, ref_logits, atol=5e-2, rtol=5e-2))

    ptr = int(state["queue_ptr"][0])
    # enqueued rows hold k_proj; untouched rows passed through exactly
    assert bool(jnp.allclose(new_state["queue"][1 + ptr:1 + ptr + N, :],
                             ref_k_proj, atol=5e-2, rtol=5e-2))
    assert bool(jnp.allclose(new_state["queue"][1 + ptr + N:1 + K_QUEUE, :],
                             state["queue"][1 + ptr + N:1 + K_QUEUE, :]))
    assert int(new_state["queue_ptr"][0]) == (ptr + N) % K_QUEUE

    print("KERNEL_OK")
</pallas_src>

<mosaic_0001>
module attributes {stable_mosaic.version = 11 : i64} {
  func.func @_mocov2_kernel(%arg0: memref<8x1024xf32, #tpu.memory_space<vmem>>, %arg1: memref<8x1024xf32, #tpu.memory_space<vmem>>, %arg2: memref<1xi32, #tpu.memory_space<smem>>, %arg3: memref<384x128xf32, #tpu.memory_space<vmem>>, %arg4: memref<1024x128xf32, #tpu.memory_space<vmem>>, %arg5: memref<128x128xf32, #tpu.memory_space<vmem>>, %arg6: memref<128x128xf32, #tpu.memory_space<vmem>>, %arg7: memref<8x128xf32, #tpu.memory_space<vmem>>, %arg8: memref<1024x128xf32, #tpu.memory_space<vmem>>, %arg9: memref<128x128xf32, #tpu.memory_space<vmem>>, %arg10: memref<128x128xf32, #tpu.memory_space<vmem>>, %arg11: memref<8x128xf32, #tpu.memory_space<vmem>>, %arg12: memref<8x128xf32, #tpu.memory_space<vmem>>, %arg13: memref<8x384xf32, #tpu.memory_space<vmem>>, %arg14: memref<384x128xf32, #tpu.memory_space<vmem>>, %arg15: memref<1024x128xf32, #tpu.memory_space<vmem>>, %arg16: memref<128x128xf32, #tpu.memory_space<vmem>>, %arg17: memref<128x128xf32, #tpu.memory_space<vmem>>, %arg18: memref<8x128xf32, #tpu.memory_space<vmem>>) attributes {dimension_semantics = [], scalar_prefetch = 0 : i64, scratch_operands = 0 : i64, tpu.core_type = #tpu.core_type<tc>} {
    %c0 = arith.constant 0 : index
    %c0_0 = arith.constant 0 : index
    %0 = vector.load %arg7[%c0, %c0_0] : memref<8x128xf32, #tpu.memory_space<vmem>>, vector<8x128xf32>
    %c0_1 = arith.constant 0 : index
    %c0_2 = arith.constant 0 : index
    %1 = vector.load %arg0[%c0_1, %c0_2] : memref<8x1024xf32, #tpu.memory_space<vmem>>, vector<8x1024xf32>
    %c0_3 = arith.constant 0 : index
    %c0_4 = arith.constant 0 : index
    %2 = vector.load %arg4[%c0_3, %c0_4] : memref<1024x128xf32, #tpu.memory_space<vmem>>, vector<1024x128xf32>
    %3 = vector.extract_strided_slice %0 {offsets = [0, 0], sizes = [1, 128], strides = [1, 1]} : vector<8x128xf32> to vector<1x128xf32>
    %cst = arith.constant dense<0.000000e+00> : vector<8x128xf32>
    %4 = tpu.matmul %1, %2, %cst {dimension_numbers = #tpu.dot_dimension_numbers<[1], [0], [0], [1], [0, 0, 1, 1], [], []>} : vector<8x1024xf32>, vector<1024x128xf32>, vector<8x128xf32> -> vector<8x128xf32>
    %5 = vector.broadcast %3 : vector<1x128xf32> to vector<8x128xf32>
    %6 = arith.addf %4, %5 : vector<8x128xf32>
    %cst_5 = arith.constant 0.000000e+00 : f32
    %7 = vector.broadcast %cst_5 : f32 to vector<8x128xf32>
    %8 = arith.maximumf %6, %7 : vector<8x128xf32>
    %c0_6 = arith.constant 0 : index
    %c0_7 = arith.constant 0 : index
    %9 = vector.load %arg12[%c0_6, %c0_7] : memref<8x128xf32, #tpu.memory_space<vmem>>, vector<8x128xf32>
    tpu.vector_store %arg12[%c0_6, %c0_7], %8 {strides = array<i32>} : memref<8x128xf32, #tpu.memory_space<vmem>>, vector<8x128xf32>,
    %c0_8 = arith.constant 0 : index
    %c0_9 = arith.constant 0 : index
    %10 = vector.load %arg5[%c0_8, %c0_9] : memref<128x128xf32, #tpu.memory_space<vmem>>, vector<128x128xf32>
    %c0_10 = arith.constant 0 : index
    %c0_11 = arith.constant 0 : index
    %11 = vector.load %arg6[%c0_10, %c0_11] : memref<128x128xf32, #tpu.memory_space<vmem>>, vector<128x128xf32>
    %12 = vector.extract_strided_slice %0 {offsets = [1, 0], sizes = [1, 128], strides = [1, 1]} : vector<8x128xf32> to vector<1x128xf32>
    %13 = vector.extract_strided_slice %0 {offsets = [2, 0], sizes = [1, 128], strides = [1, 1]} : vector<8x128xf32> to vector<1x128xf32>
    %14 = vector.extract_strided_slice %0 {offsets = [3, 0], sizes = [1, 128], strides = [1, 1]} : vector<8x128xf32> to vector<1x128xf32>
    %15 = vector.extract_strided_slice %0 {offsets = [4, 0], sizes = [1, 128], strides = [1, 1]} : vector<8x128xf32> to vector<1x128xf32>
    %cst_12 = arith.constant dense<0.000000e+00> : vector<8x128xf32>
    %16 = tpu.matmul %8, %10, %cst_12 {dimension_numbers = #tpu.dot_dimension_numbers<[1], [0], [0], [1], [0, 0, 1, 1], [], []>} : vector<8x128xf32>, vector<128x128xf32>, vector<8x128xf32> -> vector<8x128xf32>
    %17 = vector.broadcast %12 : vector<1x128xf32> to vector<8x128xf32>
    %18 = arith.addf %16, %17 : vector<8x128xf32>
    %cst_13 = arith.constant dense<0.000000e+00> : vector<128xf32>
    %19 = vector.multi_reduction <add>, %18, %cst_13 [0] : vector<8x128xf32> to vector<128xf32>
    %20 = vector.shape_cast %19 : vector<128xf32> to vector<1x128xf32>
    %cst_14 = arith.constant 8.000000e+00 : f32
    %21 = vector.broadcast %cst_14 : f32 to vector<1x128xf32>
    %22 = arith.divf %20, %21 : vector<1x128xf32>
    %23 = vector.broadcast %22 : vector<1x128xf32> to vector<8x128xf32>
    %24 = arith.subf %18, %23 : vector<8x128xf32>
    %25 = arith.mulf %24, %24 : vector<8x128xf32>
    %cst_15 = arith.constant dense<0.000000e+00> : vector<128xf32>
    %26 = vector.multi_reduction <add>, %25, %cst_15 [0] : vector<8x128xf32> to vector<128xf32>
    %27 = vector.shape_cast %26 : vector<128xf32> to vector<1x128xf32>
    %cst_16 = arith.constant 8.000000e+00 : f32
    %28 = vector.broadcast %cst_16 : f32 to vector<1x128xf32>
    %29 = arith.divf %27, %28 : vector<1x128xf32>
    %30 = vector.broadcast %22 : vector<1x128xf32> to vector<8x128xf32>
    %31 = arith.subf %18, %30 : vector<8x128xf32>
    %cst_17 = arith.constant 9.99999974E-6 : f32
    %32 = vector.broadcast %cst_17 : f32 to vector<1x128xf32>
    %33 = arith.addf %29, %32 : vector<1x128xf32>
    %34 = math.rsqrt %33 : vector<1x128xf32>
    %35 = vector.broadcast %34 : vector<1x128xf32> to vector<8x128xf32>
    %36 = arith.mulf %31, %35 : vector<8x128xf32>
    %37 = vector.broadcast %13 : vector<1x128xf32> to vector<8x128xf32>
    %38 = arith.mulf %36, %37 : vector<8x128xf32>
    %39 = vector.broadcast %14 : vector<1x128xf32> to vector<8x128xf32>
    %40 = arith.addf %38, %39 : vector<8x128xf32>
    %cst_18 = arith.constant 0.000000e+00 : f32
    %41 = vector.broadcast %cst_18 : f32 to vector<8x128xf32>
    %42 = arith.maximumf %40, %41 : vector<8x128xf32>
    %cst_19 = arith.constant dense<0.000000e+00> : vector<8x128xf32>
    %43 = tpu.matmul %42, %11, %cst_19 {dimension_numbers = #tpu.dot_dimension_numbers<[1], [0], [0], [1], [0, 0, 1, 1], [], []>} : vector<8x128xf32>, vector<128x128xf32>, vector<8x128xf32> -> vector<8x128xf32>
    %44 = vector.broadcast %15 : vector<1x128xf32> to vector<8x128xf32>
    %45 = arith.addf %43, %44 : vector<8x128xf32>
    %46 = arith.mulf %45, %45 : vector<8x128xf32>
    %cst_20 = arith.constant dense<0.000000e+00> : vector<8xf32>
    %47 = vector.multi_reduction <add>, %46, %cst_20 [1] : vector<8x128xf32> to vector<8xf32>
    %48 = vector.shape_cast %47 : vector<8xf32> to vector<8x1xf32>
    %cst_21 = arith.constant 1.000000e-24 : f32
    %49 = vector.broadcast %cst_21 : f32 to vector<8x1xf32>
    %50 = arith.maximumf %48, %49 : vector<8x1xf32>
    %51 = math.rsqrt %50 : vector<8x1xf32>
    %52 = vector.broadcast %51 : vector<8x1xf32> to vector<8x128xf32>
    %53 = arith.mulf %45, %52 : vector<8x128xf32>
    %c0_22 = arith.constant 0 : index
    %c0_23 = arith.constant 0 : index
    %54 = vector.load %arg4[%c0_22, %c0_23] : memref<1024x128xf32, #tpu.memory_space<vmem>>, vector<1024x128xf32>
    %c0_24 = arith.constant 0 : index
    %c0_25 = arith.constant 0 : index
    %55 = vector.load %arg8[%c0_24, %c0_25] : memref<1024x128xf32, #tpu.memory_space<vmem>>, vector<1024x128xf32>
    %cst_26 = arith.constant 9.990000e-01 : f32
    %56 = vector.broadcast %cst_26 : f32 to vector<1024x128xf32>
    %57 = arith.mulf %55, %56 : vector<1024x128xf32>
    %cst_27 = arith.constant 1.000000e-03 : f32
    %58 = vector.broadcast %cst_27 : f32 to vector<1024x128xf32>
    %59 = arith.mulf %54, %58 : vector<1024x128xf32>
    %60 = arith.addf %57, %59 : vector<1024x128xf32>
    %c0_28 = arith.constant 0 : index
    %c0_29 = arith.constant 0 : index
    %61 = vector.load %arg15[%c0_28, %c0_29] : memref<1024x128xf32, #tpu.memory_space<vmem>>, vector<1024x128xf32>
    tpu.vector_store %arg15[%c0_28, %c0_29], %60 {strides = array<i32>} : memref<1024x128xf32, #tpu.memory_space<vmem>>, vector<1024x128xf32>,
    %c0_30 = arith.constant 0 : index
    %c0_31 = arith.constant 0 : index
    %62 = vector.load %arg5[%c0_30, %c0_31] : memref<128x128xf32, #tpu.memory_space<vmem>>, vector<128x128xf32>
    %c0_32 = arith.constant 0 : index
    %c0_33 = arith.constant 0 : index
    %63 = vector.load %arg9[%c0_32, %c0_33] : memref<128x128xf32, #tpu.memory_space<vmem>>, vector<128x128xf32>
    %cst_34 = arith.constant 9.990000e-01 : f32
    %64 = vector.broadcast %cst_34 : f32 to vector<128x128xf32>
    %65 = arith.mulf %63, %64 : vector<128x128xf32>
    %cst_35 = arith.constant 1.000000e-03 : f32
    %66 = vector.broadcast %cst_35 : f32 to vector<128x128xf32>
    %67 = arith.mulf %62, %66 : vector<128x128xf32>
    %68 = arith.addf %65, %67 : vector<128x128xf32>
    %c0_36 = arith.constant 0 : index
    %c0_37 = arith.constant 0 : index
    %69 = vector.load %arg16[%c0_36, %c0_37] : memref<128x128xf32, #tpu.memory_space<vmem>>, vector<128x128xf32>
    tpu.vector_store %arg16[%c0_36, %c0_37], %68 {strides = array<i32>} : memref<128x128xf32, #tpu.memory_space<vmem>>, vector<128x128xf32>,
    %c0_38 = arith.constant 0 : index
    %c0_39 = arith.constant 0 : index
    %70 = vector.load %arg6[%c0_38, %c0_39] : memref<128x128xf32, #tpu.memory_space<vmem>>, vector<128x128xf32>
    %c0_40 = arith.constant 0 : index
    %c0_41 = arith.constant 0 : index
    %71 = vector.load %arg10[%c0_40, %c0_41] : memref<128x128xf32, #tpu.memory_space<vmem>>, vector<128x128xf32>
    %cst_42 = arith.constant 9.990000e-01 : f32
    %72 = vector.broadcast %cst_42 : f32 to vector<128x128xf32>
    %73 = arith.mulf %71, %72 : vector<128x128xf32>
    %cst_43 = arith.constant 1.000000e-03 : f32
    %74 = vector.broadcast %cst_43 : f32 to vector<128x128xf32>
    %75 = arith.mulf %70, %74 : vector<128x128xf32>
    %76 = arith.addf %73, %75 : vector<128x128xf32>
    %c0_44 = arith.constant 0 : index
    %c0_45 = arith.constant 0 : index
    %77 = vector.load %arg17[%c0_44, %c0_45] : memref<128x128xf32, #tpu.memory_space<vmem>>, vector<128x128xf32>
    tpu.vector_store %arg17[%c0_44, %c0_45], %76 {strides = array<i32>} : memref<128x128xf32, #tpu.memory_space<vmem>>, vector<128x128xf32>,
    %c0_46 = arith.constant 0 : index
    %c0_47 = arith.constant 0 : index
    %78 = vector.load %arg11[%c0_46, %c0_47] : memref<8x128xf32, #tpu.memory_space<vmem>>, vector<8x128xf32>
    %cst_48 = arith.constant 9.990000e-01 : f32
    %79 = vector.broadcast %cst_48 : f32 to vector<8x128xf32>
    %80 = arith.mulf %78, %79 : vector<8x128xf32>
    %cst_49 = arith.constant 1.000000e-03 : f32
    %81 = vector.broadcast %cst_49 : f32 to vector<8x128xf32>
    %82 = arith.mulf %0, %81 : vector<8x128xf32>
    %83 = arith.addf %80, %82 : vector<8x128xf32>
    %c0_50 = arith.constant 0 : index
    %c0_51 = arith.constant 0 : index
    %84 = vector.load %arg18[%c0_50, %c0_51] : memref<8x128xf32, #tpu.memory_space<vmem>>, vector<8x128xf32>
    tpu.vector_store %arg18[%c0_50, %c0_51], %83 {strides = array<i32>} : memref<8x128xf32, #tpu.memory_space<vmem>>, vector<8x128xf32>,
    %c0_52 = arith.constant 0 : index
    %c0_53 = arith.constant 0 : index
    %85 = vector.load %arg1[%c0_52, %c0_53] : memref<8x1024xf32, #tpu.memory_space<vmem>>, vector<8x1024xf32>
    %86 = vector.extract_strided_slice %83 {offsets = [0, 0], sizes = [1, 128], strides = [1, 1]} : vector<8x128xf32> to vector<1x128xf32>
    %cst_54 = arith.constant dense<0.000000e+00> : vector<8x128xf32>
    %87 = tpu.matmul %85, %60, %cst_54 {dimension_numbers = #tpu.dot_dimension_numbers<[1], [0], [0], [1], [0, 0, 1, 1], [], []>} : vector<8x1024xf32>, vector<1024x128xf32>, vector<8x128xf32> -> vector<8x128xf32>
    %88 = vector.broadcast %86 : vector<1x128xf32> to vector<8x128xf32>
    %89 = arith.addf %87, %88 : vector<8x128xf32>
    %cst_55 = arith.constant 0.000000e+00 : f32
    %90 = vector.broadcast %cst_55 : f32 to vector<8x128xf32>
    %91 = arith.maximumf %89, %90 : vector<8x128xf32>
    %92 = vector.extract_strided_slice %83 {offsets = [1, 0], sizes = [1, 128], strides = [1, 1]} : vector<8x128xf32> to vector<1x128xf32>
    %93 = vector.extract_strided_slice %83 {offsets = [2, 0], sizes = [1, 128], strides = [1, 1]} : vector<8x128xf32> to vector<1x128xf32>
    %94 = vector.extract_strided_slice %83 {offsets = [3, 0], sizes = [1, 128], strides = [1, 1]} : vector<8x128xf32> to vector<1x128xf32>
    %95 = vector.extract_strided_slice %83 {offsets = [4, 0], sizes = [1, 128], strides = [1, 1]} : vector<8x128xf32> to vector<1x128xf32>
    %cst_56 = arith.constant dense<0.000000e+00> : vector<8x128xf32>
    %96 = tpu.matmul %91, %68, %cst_56 {dimension_numbers = #tpu.dot_dimension_numbers<[1], [0], [0], [1], [0, 0, 1, 1], [], []>} : vector<8x128xf32>, vector<128x128xf32>, vector<8x128xf32> -> vector<8x128xf32>
    %97 = vector.broadcast %92 : vector<1x128xf32> to vector<8x128xf32>
    %98 = arith.addf %96, %97 : vector<8x128xf32>
    %cst_57 = arith.constant dense<0.000000e+00> : vector<128xf32>
    %99 = vector.multi_reduction <add>, %98, %cst_57 [0] : vector<8x128xf32> to vector<128xf32>
    %100 = vector.shape_cast %99 : vector<128xf32> to vector<1x128xf32>
    %cst_58 = arith.constant 8.000000e+00 : f32
    %101 = vector.broadcast %cst_58 : f32 to vector<1x128xf32>
    %102 = arith.divf %100, %101 : vector<1x128xf32>
    %103 = vector.broadcast %102 : vector<1x128xf32> to vector<8x128xf32>
    %104 = arith.subf %98, %103 : vector<8x128xf32>
    %105 = arith.mulf %104, %104 : vector<8x128xf32>
    %cst_59 = arith.constant dense<0.000000e+00> : vector<128xf32>
    %106 = vector.multi_reduction <add>, %105, %cst_59 [0] : vector<8x128xf32> to vector<128xf32>
    %107 = vector.shape_cast %106 : vector<128xf32> to vector<1x128xf32>
    %cst_60 = arith.constant 8.000000e+00 : f32
    %108 = vector.broadcast %cst_60 : f32 to vector<1x128xf32>
    %109 = arith.divf %107, %108 : vector<1x128xf32>
    %110 = vector.broadcast %102 : vector<1x128xf32> to vector<8x128xf32>
    %111 = arith.subf %98, %110 : vector<8x128xf32>
    %cst_61 = arith.constant 9.99999974E-6 : f32
    %112 = vector.broadcast %cst_61 : f32 to vector<1x128xf32>
    %113 = arith.addf %109, %112 : vector<1x128xf32>
    %114 = math.rsqrt %113 : vector<1x128xf32>
    %115 = vector.broadcast %114 : vector<1x128xf32> to vector<8x128xf32>
    %116 = arith.mulf %111, %115 : vector<8x128xf32>
    %117 = vector.broadcast %93 : vector<1x128xf32> to vector<8x128xf32>
    %118 = arith.mulf %116, %117 : vector<8x128xf32>
    %119 = vector.broadcast %94 : vector<1x128xf32> to vector<8x128xf32>
    %120 = arith.addf %118, %119 : vector<8x128xf32>
    %cst_62 = arith.constant 0.000000e+00 : f32
    %121 = vector.broadcast %cst_62 : f32 to vector<8x128xf32>
    %122 = arith.maximumf %120, %121 : vector<8x128xf32>
    %cst_63 = arith.constant dense<0.000000e+00> : vector<8x128xf32>
    %123 = tpu.matmul %122, %76, %cst_63 {dimension_numbers = #tpu.dot_dimension_numbers<[1], [0], [0], [1], [0, 0, 1, 1], [], []>} : vector<8x128xf32>, vector<128x128xf32>, vector<8x128xf32> -> vector<8x128xf32>
    %124 = vector.broadcast %95 : vector<1x128xf32> to vector<8x128xf32>
    %125 = arith.addf %123, %124 : vector<8x128xf32>
    %126 = arith.mulf %125, %125 : vector<8x128xf32>
    %cst_64 = arith.constant dense<0.000000e+00> : vector<8xf32>
    %127 = vector.multi_reduction <add>, %126, %cst_64 [1] : vector<8x128xf32> to vector<8xf32>
    %128 = vector.shape_cast %127 : vector<8xf32> to vector<8x1xf32>
    %cst_65 = arith.constant 1.000000e-24 : f32
    %129 = vector.broadcast %cst_65 : f32 to vector<8x1xf32>
    %130 = arith.maximumf %128, %129 : vector<8x1xf32>
    %131 = math.rsqrt %130 : vector<8x1xf32>
    %132 = vector.broadcast %131 : vector<8x1xf32> to vector<8x128xf32>
    %133 = arith.mulf %125, %132 : vector<8x128xf32>
    %c0_66 = arith.constant 0 : index
    %c0_67 = arith.constant 0 : index
    %134 = vector.load %arg3[%c0_66, %c0_67] : memref<384x128xf32, #tpu.memory_space<vmem>>, vector<384x128xf32>
    %135 = arith.mulf %53, %133 : vector<8x128xf32>
    %cst_68 = arith.constant dense<0.000000e+00> : vector<8xf32>
    %136 = vector.multi_reduction <add>, %135, %cst_68 [1] : vector<8x128xf32> to vector<8xf32>
    %137 = vector.shape_cast %136 : vector<8xf32> to vector<8x1xf32>
    %cst_69 = arith.constant dense<0.000000e+00> : vector<8x384xf32>
    %138 = tpu.matmul %53, %134, %cst_69 {dimension_numbers = #tpu.dot_dimension_numbers<[1], [1], [0], [0], [0, 0, 1, 0], [], []>} : vector<8x128xf32>, vector<384x128xf32>, vector<8x384xf32> -> vector<8x384xf32>
    %139 = tpu.iota {dimensions = array<i32: 1>} : vector<8x384xi32>
    %c0_i32 = arith.constant 0 : i32
    %140 = vector.broadcast %c0_i32 : i32 to vector<8x384xi32>
    %141 = arith.cmpi eq, %139, %140 : vector<8x384xi32>
    %142 = vector.shape_cast %137 : vector<8x1xf32> to vector<8x1xf32>
    %143 = vector.broadcast %142 : vector<8x1xf32> to vector<8x384xf32>
    %144 = arith.select %141, %143, %138 : vector<8x384xi1>, vector<8x384xf32>
    %cst_70 = arith.constant 5.000000e+00 : f32
    %145 = vector.broadcast %cst_70 : f32 to vector<8x384xf32>
    %146 = arith.mulf %144, %145 : vector<8x384xf32>
    %c0_71 = arith.constant 0 : index
    %c0_72 = arith.constant 0 : index
    %147 = vector.load %arg13[%c0_71, %c0_72] : memref<8x384xf32, #tpu.memory_space<vmem>>, vector<8x384xf32>
    tpu.vector_store %arg13[%c0_71, %c0_72], %146 {strides = array<i32>} : memref<8x384xf32, #tpu.memory_space<vmem>>, vector<8x384xf32>,
    %c0_73 = arith.constant 0 : index
    %148 = memref.load %arg2[%c0_73] : memref<1xi32, #tpu.memory_space<smem>>
    %c1_i32 = arith.constant 1 : i32
    %149 = arith.addi %148, %c1_i32 : i32
    %150 = tpu.iota {dimensions = array<i32: 1>} : vector<8x384xi32>
    %151 = tpu.iota {dimensions = array<i32: 0>} : vector<8x384xi32>
    %152 = vector.broadcast %149 : i32 to vector<8x384xi32>
    %153 = arith.addi %151, %152 : vector<8x384xi32>
    %154 = arith.cmpi eq, %150, %153 : vector<8x384xi32>
    %155 = arith.extui %154 : vector<8x384xi1> to vector<8x384xi32>
    %156 = arith.sitofp %155 : vector<8x384xi32> to vector<8x384xf32>
    %cst_74 = arith.constant dense<0.000000e+00> : vector<384x128xf32>
    %157 = tpu.matmul %156, %133, %cst_74 {dimension_numbers = #tpu.dot_dimension_numbers<[0], [0], [1], [1], [0, 1, 1, 1], [], []>} : vector<8x384xf32>, vector<8x128xf32>, vector<384x128xf32> -> vector<384x128xf32>
    %158 = tpu.iota {dimensions = array<i32: 0>} : vector<384x1xi32>
    %159 = vector.broadcast %149 : i32 to vector<384x1xi32>
    %160 = arith.cmpi sge, %158, %159 : vector<384x1xi32>
    %c8_i32 = arith.constant 8 : i32
    %161 = arith.addi %149, %c8_i32 : i32
    %162 = vector.broadcast %161 : i32 to vector<384x1xi32>
    %163 = arith.cmpi slt, %158, %162 : vector<384x1xi32>
    %164 = arith.andi %160, %163 : vector<384x1xi1>
    %165 = vector.shape_cast %164 : vector<384x1xi1> to vector<384x1xi1>
    %166 = vector.broadcast %165 : vector<384x1xi1> to vector<384x128xi1>
    %167 = arith.select %166, %157, %134 : vector<384x128xi1>, vector<384x128xf32>
    %c0_75 = arith.constant 0 : index
    %c0_76 = arith.constant 0 : index
    %168 = vector.load %arg14[%c0_75, %c0_76] : memref<384x128xf32, #tpu.memory_space<vmem>>, vector<384x128xf32>
    tpu.vector_store %arg14[%c0_75, %c0_76], %167 {strides = array<i32>} : memref<384x128xf32, #tpu.memory_space<vmem>>, vector<384x128xf32>,
    return
  }
}

</mosaic_0001>

<llo_original>
// kernel: mocov2_forward.1
$region0: #{mocov2_forward.1}
  #allocation0 [shape = 'u32[]', space=smem, size = 0x4, offset = 0x4, fixed_abs, tag = 'smem constant byte address 0x4 - core index']
  #allocation1 [shape = 'u32[144,128]{1,0:T(1,128)}', space=vmem, size = 0x12000, scoped, tag = 'internal scratch']
  #allocation2 [shape = 's32[1]{0:T(128)S(6)}', space=smem, size = 0x200, scoped, tag = 'scoped memory for mocov2_forward.1']
  %s0 = inlined_call_operand.vmem [shape: f32[8,1024], index: 0, kind: input, shape index: {}]
  %s1 = inlined_call_operand.vmem [shape: f32[8,1024], index: 1, kind: input, shape index: {}]
  %s2 = inlined_call_operand.<no memory space> [shape: s32[1], index: 2, kind: input, shape index: {}]
  %s3 = inlined_call_operand.vmem [shape: f32[384,128], index: 3, kind: input, shape index: {}, may-alias: {3,14}]
  %s4 = inlined_call_operand.vmem [shape: f32[1024,128], index: 4, kind: input, shape index: {}]
  %s5 = inlined_call_operand.vmem [shape: f32[128,128], index: 5, kind: input, shape index: {}]
  %s6 = inlined_call_operand.vmem [shape: f32[128,128], index: 6, kind: input, shape index: {}]
  %s7 = inlined_call_operand.vmem [shape: f32[8,128], index: 7, kind: input, shape index: {}]
  %s8 = inlined_call_operand.vmem [shape: f32[1024,128], index: 8, kind: input, shape index: {}, may-alias: {8,15}]
  %s9 = inlined_call_operand.vmem [shape: f32[128,128], index: 9, kind: input, shape index: {}, may-alias: {9,16}]
  %s10 = inlined_call_operand.vmem [shape: f32[128,128], index: 10, kind: input, shape index: {}, may-alias: {10,17}]
  %s11 = inlined_call_operand.vmem [shape: f32[8,128], index: 11, kind: input, shape index: {}, may-alias: {11,18}]
  %s12 = inlined_call_operand.hbm [shape: f32[8,128], index: 12, kind: output, shape index: {0}]
  %s13 = inlined_call_operand.hbm [shape: f32[8,384], index: 13, kind: output, shape index: {1}]
  %s14 = inlined_call_operand.vmem [shape: f32[384,128], index: 14, kind: output, shape index: {2}, may-alias: {3,14}]
  %s15 = inlined_call_operand.vmem [shape: f32[1024,128], index: 15, kind: output, shape index: {3}, may-alias: {8,15}]
  %s16 = inlined_call_operand.vmem [shape: f32[128,128], index: 16, kind: output, shape index: {4}, may-alias: {9,16}]
  %s17 = inlined_call_operand.vmem [shape: f32[128,128], index: 17, kind: output, shape index: {5}, may-alias: {10,17}]
  %s18 = inlined_call_operand.vmem [shape: f32[8,128], index: 18, kind: output, shape index: {6}, may-alias: {11,18}]
  %19 = xla_tuple %s12, %s13, %s14, %s15, %s16, %s17, %s18
  %s20 = sld [smem:[#allocation0]]
  $region106: #{mocov2_forward.1} parent=0
    _
  %s22 = ssub.s32 1, %s20
  %s23 = scalar_select 0, %s22, %s20
  %24 = sst [smem:[#allocation2]] %s2
  $region1: #{mocov2_forward.1} parent=0
    #allocation3 [shape = 'u8[4096]{0}', space=vmem, size = 0x1000, scoped, tag = 'output window, operand 0, single buffered']
    #allocation4 [shape = 's32[1]{0}', space=sflag, size = 0x4, scoped, tag = 'scoped memory for mocov2_forward.1']
    #allocation5 [shape = 'u8[12288]{0}', space=vmem, size = 0x3000, scoped, tag = 'output window, operand 1, single buffered']
    #allocation6 [shape = 's32[1]{0}', space=sflag, size = 0x4, scoped, tag = 'scoped memory for mocov2_forward.1']
    %25 = vsyncpa [#allocation4], 0
    %26 = vsyncpa [#allocation6], 0
    // Predicated region
    $region2: #{mocov2_forward.1} parent=1 // pred_check
      _
    $region3: #{mocov2_forward.1} parent=1 // pred_check_branch
      %28 = sbr.rel (0) target = $region5
    $region4: #{mocov2_forward.1} parent=1 // pred_region
      _
    $region5: #{mocov2_forward.1} parent=1 // pred_fallthru
      _
    // Predicated region
    $region6: #{mocov2_forward.1} parent=1 // pred_check
      _
    $region7: #{mocov2_forward.1} parent=1 // pred_check_branch
      %30 = sbr.rel (0) target = $region9
    $region8: #{mocov2_forward.1} parent=1 // pred_region
      _
    $region9: #{mocov2_forward.1} parent=1 // pred_fallthru
      _
    // Predicated region
    $region10: #{mocov2_forward.1} parent=1 // pred_check
      _
    $region11: #{mocov2_forward.1} parent=1 // pred_check_branch
      %32 = sbr.rel (0) target = $region13
    $region12: #{mocov2_forward.1} parent=1 // pred_region
      _
    $region13: #{mocov2_forward.1} parent=1 // pred_fallthru
      _
    // Predicated region
    $region14: #{mocov2_forward.1} parent=1 // pred_check
      _
    $region15: #{mocov2_forward.1} parent=1 // pred_check_branch
      %34 = sbr.rel (0) target = $region17
    $region16: #{mocov2_forward.1} parent=1 // pred_region
      _
    $region17: #{mocov2_forward.1} parent=1 // pred_fallthru
      _
    // Predicated region
    $region18: #{mocov2_forward.1} parent=1 // pred_check
      _
    $region19: #{mocov2_forward.1} parent=1 // pred_check_branch
      %36 = sbr.rel (0) target = $region21
    $region20: #{mocov2_forward.1} parent=1 // pred_region
      _
    $region21: #{mocov2_forward.1} parent=1 // pred_fallthru
      _
    // Predicated region
    $region22: #{mocov2_forward.1} parent=1 // pred_check
      _
    $region23: #{mocov2_forward.1} parent=1 // pred_check_branch
      %38 = sbr.rel (0) target = $region25
    $region24: #{mocov2_forward.1} parent=1 // pred_region
      _
    $region25: #{mocov2_forward.1} parent=1 // pred_fallthru
      _
    // Predicated region
    $region26: #{mocov2_forward.1} parent=1 // pred_check
      _
    $region27: #{mocov2_forward.1} parent=1 // pred_check_branch
      %40 = sbr.rel (0) target = $region29
    $region28: #{mocov2_forward.1} parent=1 // pred_region
      _
    $region29: #{mocov2_forward.1} parent=1 // pred_fallthru
      _
    // Predicated region
    $region30: #{mocov2_forward.1} parent=1 // pred_check
      _
    $region31: #{mocov2_forward.1} parent=1 // pred_check_branch
      %42 = sbr.rel (0) target = $region33
    $region32: #{mocov2_forward.1} parent=1 // pred_region
      _
    $region33: #{mocov2_forward.1} parent=1 // pred_fallthru
      _
    // Predicated region
    $region34: #{mocov2_forward.1} parent=1 // pred_check
      _
    $region35: #{mocov2_forward.1} parent=1 // pred_check_branch
      %44 = sbr.rel (0) target = $region37
    $region36: #{mocov2_forward.1} parent=1 // pred_region
      _
    $region37: #{mocov2_forward.1} parent=1 // pred_fallthru
      _
    // Predicated region
    $region38: #{mocov2_forward.1} parent=1 // pred_check
      _
    $region39: #{mocov2_forward.1} parent=1 // pred_check_branch
      %46 = sbr.rel (0) target = $region41
    $region40: #{mocov2_forward.1} parent=1 // pred_region
      _
    $region41: #{mocov2_forward.1} parent=1 // pred_fallthru
      _
    // Predicated region
    $region42: #{mocov2_forward.1} parent=1 // pred_check
      _
    $region43: #{mocov2_forward.1} parent=1 // pred_check_branch
      %48 = sbr.rel (0) target = $region45
    $region44: #{mocov2_forward.1} parent=1 // pred_region
      _
    $region45: #{mocov2_forward.1} parent=1 // pred_fallthru
      _
    // Predicated region
    $region46: #{mocov2_forward.1} parent=1 // pred_check
      _
    $region47: #{mocov2_forward.1} parent=1 // pred_check_branch
      %50 = sbr.rel (0) target = $region49
    $region48: #{mocov2_forward.1} parent=1 // pred_region
      _
    $region49: #{mocov2_forward.1} parent=1 // pred_fallthru
      _
    %v51 = vld [vmem:[%s7] sm:$0xff]
    %v52 = vld [vmem:[%s0] sm:$0xff]
    %v53 = vld [vmem:[%s0 + $0x8] sm:$0xff]
    %v54 = vld [vmem:[%s0 + $0x10] sm:$0xff]
    %v55 = vld [vmem:[%s0 + $0x18] sm:$0xff]
    %v56 = vld [vmem:[%s0 + $0x20] sm:$0xff]
    %v57 = vld [vmem:[%s0 + $0x28] sm:$0xff]
    %v58 = vld [vmem:[%s0 + $0x30] sm:$0xff]
    %v59 = vld [vmem:[%s0 + $0x38] sm:$0xff]
    %v60 = vld [vmem:[%s4] sm:$0xff]
    %v61 = vld [vmem:[%s4 + $0x8] sm:$0xff]
    %v62 = vld [vmem:[%s4 + $0x10] sm:$0xff]
    %v63 = vld [vmem:[%s4 + $0x18] sm:$0xff]
    %v64 = vld [vmem:[%s4 + $0x20] sm:$0xff]
    %v65 = vld [vmem:[%s4 + $0x28] sm:$0xff]
    %v66 = vld [vmem:[%s4 + $0x30] sm:$0xff]
    %v67 = vld [vmem:[%s4 + $0x38] sm:$0xff]
    %v68 = vld [vmem:[%s4 + $0x40] sm:$0xff]
    %v69 = vld [vmem:[%s4 + $0x48] sm:$0xff]
    %v70 = vld [vmem:[%s4 + $0x50] sm:$0xff]
    %v71 = vld [vmem:[%s4 + $0x58] sm:$0xff]
    %v72 = vld [vmem:[%s4 + $0x60] sm:$0xff]
    %v73 = vld [vmem:[%s4 + $0x68] sm:$0xff]
    %v74 = vld [vmem:[%s4 + $0x70] sm:$0xff]
    %v75 = vld [vmem:[%s4 + $0x78] sm:$0xff]
    %v76 = vld [vmem:[%s4 + $0x80] sm:$0xff]
    %v77 = vld [vmem:[%s4 + $0x88] sm:$0xff]
    %v78 = vld [vmem:[%s4 + $0x90] sm:$0xff]
    %v79 = vld [vmem:[%s4 + $0x98] sm:$0xff]
    %v80 = vld [vmem:[%s4 + $0xa0] sm:$0xff]
    %v81 = vld [vmem:[%s4 + $0xa8] sm:$0xff]
    %v82 = vld [vmem:[%s4 + $0xb0] sm:$0xff]
    %v83 = vld [vmem:[%s4 + $0xb8] sm:$0xff]
    %v84 = vld [vmem:[%s4 + $0xc0] sm:$0xff]
    %v85 = vld [vmem:[%s4 + $0xc8] sm:$0xff]
    %v86 = vld [vmem:[%s4 + $0xd0] sm:$0xff]
    %v87 = vld [vmem:[%s4 + $0xd8] sm:$0xff]
    %v88 = vld [vmem:[%s4 + $0xe0] sm:$0xff]
    %v89 = vld [vmem:[%s4 + $0xe8] sm:$0xff]
    %v90 = vld [vmem:[%s4 + $0xf0] sm:$0xff]
    %v91 = vld [vmem:[%s4 + $0xf8] sm:$0xff]
    %v92 = vld [vmem:[%s4 + $0x100] sm:$0xff]
    %v93 = vld [vmem:[%s4 + $0x108] sm:$0xff]
    %v94 = vld [vmem:[%s4 + $0x110] sm:$0xff]
    %v95 = vld [vmem:[%s4 + $0x118] sm:$0xff]
    %v96 = vld [vmem:[%s4 + $0x120] sm:$0xff]
    %v97 = vld [vmem:[%s4 + $0x128] sm:$0xff]
    %v98 = vld [vmem:[%s4 + $0x130] sm:$0xff]
    %v99 = vld [vmem:[%s4 + $0x138] sm:$0xff]
    %v100 = vld [vmem:[%s4 + $0x140] sm:$0xff]
    %v101 = vld [vmem:[%s4 + $0x148] sm:$0xff]
    %v102 = vld [vmem:[%s4 + $0x150] sm:$0xff]
    %v103 = vld [vmem:[%s4 + $0x158] sm:$0xff]
    %v104 = vld [vmem:[%s4 + $0x160] sm:$0xff]
    %v105 = vld [vmem:[%s4 + $0x168] sm:$0xff]
    %v106 = vld [vmem:[%s4 + $0x170] sm:$0xff]
    %v107 = vld [vmem:[%s4 + $0x178] sm:$0xff]
    %v108 = vld [vmem:[%s4 + $0x180] sm:$0xff]
    %v109 = vld [vmem:[%s4 + $0x188] sm:$0xff]
    %v110 = vld [vmem:[%s4 + $0x190] sm:$0xff]
    %v111 = vld [vmem:[%s4 + $0x198] sm:$0xff]
    %v112 = vld [vmem:[%s4 + $0x1a0] sm:$0xff]
    %v113 = vld [vmem:[%s4 + $0x1a8] sm:$0xff]
    %v114 = vld [vmem:[%s4 + $0x1b0] sm:$0xff]
    %v115 = vld [vmem:[%s4 + $0x1b8] sm:$0xff]
    %v116 = vld [vmem:[%s4 + $0x1c0] sm:$0xff]
    %v117 = vld [vmem:[%s4 + $0x1c8] sm:$0xff]
    %v118 = vld [vmem:[%s4 + $0x1d0] sm:$0xff]
    %v119 = vld [vmem:[%s4 + $0x1d8] sm:$0xff]
    %v120 = vld [vmem:[%s4 + $0x1e0] sm:$0xff]
    %v121 = vld [vmem:[%s4 + $0x1e8] sm:$0xff]
    %v122 = vld [vmem:[%s4 + $0x1f0] sm:$0xff]
    %v123 = vld [vmem:[%s4 + $0x1f8] sm:$0xff]
    %v124 = vld [vmem:[%s4 + $0x200] sm:$0xff]
    %v125 = vld [vmem:[%s4 + $0x208] sm:$0xff]
    %v126 = vld [vmem:[%s4 + $0x210] sm:$0xff]
    %v127 = vld [vmem:[%s4 + $0x218] sm:$0xff]
    %v128 = vld [vmem:[%s4 + $0x220] sm:$0xff]
    %v129 = vld [vmem:[%s4 + $0x228] sm:$0xff]
    %v130 = vld [vmem:[%s4 + $0x230] sm:$0xff]
    %v131 = vld [vmem:[%s4 + $0x238] sm:$0xff]
    %v132 = vld [vmem:[%s4 + $0x240] sm:$0xff]
    %v133 = vld [vmem:[%s4 + $0x248] sm:$0xff]
    %v134 = vld [vmem:[%s4 + $0x250] sm:$0xff]
    %v135 = vld [vmem:[%s4 + $0x258] sm:$0xff]
    %v136 = vld [vmem:[%s4 + $0x260] sm:$0xff]
    %v137 = vld [vmem:[%s4 + $0x268] sm:$0xff]
    %v138 = vld [vmem:[%s4 + $0x270] sm:$0xff]
    %v139 = vld [vmem:[%s4 + $0x278] sm:$0xff]
    %v140 = vld [vmem:[%s4 + $0x280] sm:$0xff]
    %v141 = vld [vmem:[%s4 + $0x288] sm:$0xff]
    %v142 = vld [vmem:[%s4 + $0x290] sm:$0xff]
    %v143 = vld [vmem:[%s4 + $0x298] sm:$0xff]
    %v144 = vld [vmem:[%s4 + $0x2a0] sm:$0xff]
    %v145 = vld [vmem:[%s4 + $0x2a8] sm:$0xff]
    %v146 = vld [vmem:[%s4 + $0x2b0] sm:$0xff]
    %v147 = vld [vmem:[%s4 + $0x2b8] sm:$0xff]
    %v148 = vld [vmem:[%s4 + $0x2c0] sm:$0xff]
    %v149 = vld [vmem:[%s4 + $0x2c8] sm:$0xff]
    %v150 = vld [vmem:[%s4 + $0x2d0] sm:$0xff]
    %v151 = vld [vmem:[%s4 + $0x2d8] sm:$0xff]
    %v152 = vld [vmem:[%s4 + $0x2e0] sm:$0xff]
    %v153 = vld [vmem:[%s4 + $0x2e8] sm:$0xff]
    %v154 = vld [vmem:[%s4 + $0x2f0] sm:$0xff]
    %v155 = vld [vmem:[%s4 + $0x2f8] sm:$0xff]
    %v156 = vld [vmem:[%s4 + $0x300] sm:$0xff]
    %v157 = vld [vmem:[%s4 + $0x308] sm:$0xff]
    %v158 = vld [vmem:[%s4 + $0x310] sm:$0xff]
    %v159 = vld [vmem:[%s4 + $0x318] sm:$0xff]
    %v160 = vld [vmem:[%s4 + $0x320] sm:$0xff]
    %v161 = vld [vmem:[%s4 + $0x328] sm:$0xff]
    %v162 = vld [vmem:[%s4 + $0x330] sm:$0xff]
    %v163 = vld [vmem:[%s4 + $0x338] sm:$0xff]
    %v164 = vld [vmem:[%s4 + $0x340] sm:$0xff]
    %v165 = vld [vmem:[%s4 + $0x348] sm:$0xff]
    %v166 = vld [vmem:[%s4 + $0x350] sm:$0xff]
    %v167 = vld [vmem:[%s4 + $0x358] sm:$0xff]
    %v168 = vld [vmem:[%s4 + $0x360] sm:$0xff]
    %v169 = vld [vmem:[%s4 + $0x368] sm:$0xff]
    %v170 = vld [vmem:[%s4 + $0x370] sm:$0xff]
    %v171 = vld [vmem:[%s4 + $0x378] sm:$0xff]
    %v172 = vld [vmem:[%s4 + $0x380] sm:$0xff]
    %v173 = vld [vmem:[%s4 + $0x388] sm:$0xff]
    %v174 = vld [vmem:[%s4 + $0x390] sm:$0xff]
    %v175 = vld [vmem:[%s4 + $0x398] sm:$0xff]
    %v176 = vld [vmem:[%s4 + $0x3a0] sm:$0xff]
    %v177 = vld [vmem:[%s4 + $0x3a8] sm:$0xff]
    %v178 = vld [vmem:[%s4 + $0x3b0] sm:$0xff]
    %v179 = vld [vmem:[%s4 + $0x3b8] sm:$0xff]
    %v180 = vld [vmem:[%s4 + $0x3c0] sm:$0xff]
    %v181 = vld [vmem:[%s4 + $0x3c8] sm:$0xff]
    %v182 = vld [vmem:[%s4 + $0x3d0] sm:$0xff]
    %v183 = vld [vmem:[%s4 + $0x3d8] sm:$0xff]
    %v184 = vld [vmem:[%s4 + $0x3e0] sm:$0xff]
    %v185 = vld [vmem:[%s4 + $0x3e8] sm:$0xff]
    %v186 = vld [vmem:[%s4 + $0x3f0] sm:$0xff]
    %v187 = vld [vmem:[%s4 + $0x3f8] sm:$0xff]
    %v188 = vlaneseq
    %v189 = vshrl.u32 %v188, 7
    %v190 = vsub.s32 0, %v189
    %v191 = vrot.slane %v51, %v190
    %192 = vmatprep.subr.mxu0 0.0
    %193 = vmatpush1.msra.mxu0 %v60
    %194 = vmatprep.subr.mxu0 0.0
    %195 = vmatpush1.msra.mxu0 %v61
    %196 = vmatprep.subr.mxu0 0.0
    %197 = vmatpush1.msra.mxu0 %v62
    %198 = vmatprep.subr.mxu0 0.0
    %199 = vmatpush1.msra.mxu0 %v63
    %200 = vmatprep.subr.mxu0 0.0
    %201 = vmatpush1.msra.mxu0 %v64
    %202 = vmatprep.subr.mxu0 0.0
    %203 = vmatpush1.msra.mxu0 %v65
    %204 = vmatprep.subr.mxu0 0.0
    %205 = vmatpush1.msra.mxu0 %v66
    %206 = vmatprep.subr.mxu0 0.0
    %207 = vmatpush1.msra.mxu0 %v67
    %208 = vmatprep.subr.mxu0 0.0
    %209 = vmatpush1.msra.mxu0 %v68
    %210 = vmatprep.subr.mxu0 0.0
    %211 = vmatpush1.msra.mxu0 %v69
    %212 = vmatprep.subr.mxu0 0.0
    %213 = vmatpush1.msra.mxu0 %v70
    %214 = vmatprep.subr.mxu0 0.0
    %215 = vmatpush1.msra.mxu0 %v71
    %216 = vmatprep.subr.mxu0 0.0
    %217 = vmatpush1.msra.mxu0 %v72
    %218 = vmatprep.subr.mxu0 0.0
    %219 = vmatpush1.msra.mxu0 %v73
    %220 = vmatprep.subr.mxu0 0.0
    %221 = vmatpush1.msra.mxu0 %v74
    %222 = vmatprep.subr.mxu0 0.0
    %223 = vmatpush1.msra.mxu0 %v75
    %224 = vmatprep.subr.mxu0 0.0
    %225 = vmatpush1.msra.mxu0 %v76
    %226 = vmatprep.subr.mxu0 0.0
    %227 = vmatpush1.msra.mxu0 %v77
    %228 = vmatprep.subr.mxu0 0.0
    %229 = vmatpush1.msra.mxu0 %v78
    %230 = vmatprep.subr.mxu0 0.0
    %231 = vmatpush1.msra.mxu0 %v79
    %232 = vmatprep.subr.mxu0 0.0
    %233 = vmatpush1.msra.mxu0 %v80
    %234 = vmatprep.subr.mxu0 0.0
    %235 = vmatpush1.msra.mxu0 %v81
    %236 = vmatprep.subr.mxu0 0.0
    %237 = vmatpush1.msra.mxu0 %v82
    %238 = vmatprep.subr.mxu0 0.0
    %239 = vmatpush1.msra.mxu0 %v83
    %240 = vmatprep.subr.mxu0 0.0
    %241 = vmatpush1.msra.mxu0 %v84
    %242 = vmatprep.subr.mxu0 0.0
    %243 = vmatpush1.msra.mxu0 %v85
    %244 = vmatprep.subr.mxu0 0.0
    %245 = vmatpush1.msra.mxu0 %v86
    %246 = vmatprep.subr.mxu0 0.0
    %247 = vmatpush1.msra.mxu0 %v87
    %248 = vmatprep.subr.mxu0 0.0
    %249 = vmatpush1.msra.mxu0 %v88
    %250 = vmatprep.subr.mxu0 0.0
    %251 = vmatpush1.msra.mxu0 %v89
    %252 = vmatprep.subr.mxu0 0.0
    %253 = vmatpush1.msra.mxu0 %v90
    %254 = vmatprep.subr.mxu0 0.0
    %255 = vmatpush1.msra.mxu0 %v91
    %256 = vmatprep.mubr.f32.mxu0 %v53
    %257 = vmatmul.mubr.f32.gmra.mrb[0].mxu0 %v52
    %v258 = vpop.f32.mrb[0].mxu0
    %v259 = vadd.f32 %v191, %v258
    %v260 = vpop.f32.mrb[0].mxu0
    %261 = vdwg.mxu0
    %262 = vmatprep.subr.mxu0 0.0
    %263 = vmatpush1.msra.mxu0 %v92
    %264 = vmatprep.subr.mxu0 0.0
    %265 = vmatpush1.msra.mxu0 %v93
    %266 = vmatprep.subr.mxu0 0.0
    %267 = vmatpush1.msra.mxu0 %v94
    %268 = vmatprep.subr.mxu0 0.0
    %269 = vmatpush1.msra.mxu0 %v95
    %270 = vmatprep.subr.mxu0 0.0
    %271 = vmatpush1.msra.mxu0 %v96
    %272 = vmatprep.subr.mxu0 0.0
    %273 = vmatpush1.msra.mxu0 %v97
    %274 = vmatprep.subr.mxu0 0.0
    %275 = vmatpush1.msra.mxu0 %v98
    %276 = vmatprep.subr.mxu0 0.0
    %277 = vmatpush1.msra.mxu0 %v99
    %278 = vmatprep.subr.mxu0 0.0
    %279 = vmatpush1.msra.mxu0 %v100
    %280 = vmatprep.subr.mxu0 0.0
    %281 = vmatpush1.msra.mxu0 %v101
    %282 = vmatprep.subr.mxu0 0.0
    %283 = vmatpush1.msra.mxu0 %v102
    %284 = vmatprep.subr.mxu0 0.0
    %285 = vmatpush1.msra.mxu0 %v103
    %286 = vmatprep.subr.mxu0 0.0
    %287 = vmatpush1.msra.mxu0 %v104
    %288 = vmatprep.subr.mxu0 0.0
    %289 = vmatpush1.msra.mxu0 %v105
    %290 = vmatprep.subr.mxu0 0.0
    %291 = vmatpush1.msra.mxu0 %v106
    %292 = vmatprep.subr.mxu0 0.0
    %293 = vmatpush1.msra.mxu0 %v107
    %294 = vmatprep.subr.mxu0 0.0
    %295 = vmatpush1.msra.mxu0 %v108
    %296 = vmatprep.subr.mxu0 0.0
    %297 = vmatpush1.msra.mxu0 %v109
    %298 = vmatprep.subr.mxu0 0.0
    %299 = vmatpush1.msra.mxu0 %v110
    %300 = vmatprep.subr.mxu0 0.0
    %301 = vmatpush1.msra.mxu0 %v111
    %302 = vmatprep.subr.mxu0 0.0
    %303 = vmatpush1.msra.mxu0 %v112
    %304 = vmatprep.subr.mxu0 0.0
    %305 = vmatpush1.msra.mxu0 %v113
    %306 = vmatprep.subr.mxu0 0.0
    %307 = vmatpush1.msra.mxu0 %v114
    %308 = vmatprep.subr.mxu0 0.0
    %309 = vmatpush1.msra.mxu0 %v115
    %310 = vmatprep.subr.mxu0 0.0
    %311 = vmatpush1.msra.mxu0 %v116
    %312 = vmatprep.subr.mxu0 0.0
    %313 = vmatpush1.msra.mxu0 %v117
    %314 = vmatprep.subr.mxu0 0.0
    %315 = vmatpush1.msra.mxu0 %v118
    %316 = vmatprep.subr.mxu0 0.0
    %317 = vmatpush1.msra.mxu0 %v119
    %318 = vmatprep.subr.mxu0 0.0
    %319 = vmatpush1.msra.mxu0 %v120
    %320 = vmatprep.subr.mxu0 0.0
    %321 = vmatpush1.msra.mxu0 %v121
    %322 = vmatprep.subr.mxu0 0.0
    %323 = vmatpush1.msra.mxu0 %v122
    %324 = vmatprep.subr.mxu0 0.0
    %325 = vmatpush1.msra.mxu0 %v123
    %326 = vmatprep.mubr.f32.mxu0 %v55
    %327 = vmatmul.mubr.f32.gmra.mrb[0].mxu0 %v54
    %v328 = vpop.f32.mrb[0].mxu0
    %v329 = vadd.f32 %v259, %v328
    %v330 = vpop.f32.mrb[0].mxu0
    %331 = vdwg.mxu0
    %332 = vmatprep.subr.mxu0 0.0
    %333 = vmatpush1.msra.mxu0 %v124
    %334 = vmatprep.subr.mxu0 0.0
    %335 = vmatpush1.msra.mxu0 %v125
    %336 = vmatprep.subr.mxu0 0.0
    %337 = vmatpush1.msra.mxu0 %v126
    %338 = vmatprep.subr.mxu0 0.0
    %339 = vmatpush1.msra.mxu0 %v127
    %340 = vmatprep.subr.mxu0 0.0
    %341 = vmatpush1.msra.mxu0 %v128
    %342 = vmatprep.subr.mxu0 0.0
    %343 = vmatpush1.msra.mxu0 %v129
    %344 = vmatprep.subr.mxu0 0.0
    %345 = vmatpush1.msra.mxu0 %v130
    %346 = vmatprep.subr.mxu0 0.0
    %347 = vmatpush1.msra.mxu0 %v131
    %348 = vmatprep.subr.mxu0 0.0
    %349 = vmatpush1.msra.mxu0 %v132
    %350 = vmatprep.subr.mxu0 0.0
    %351 = vmatpush1.msra.mxu0 %v133
    %352 = vmatprep.subr.mxu0 0.0
    %353 = vmatpush1.msra.mxu0 %v134
    %354 = vmatprep.subr.mxu0 0.0
    %355 = vmatpush1.msra.mxu0 %v135
    %356 = vmatprep.subr.mxu0 0.0
    %357 = vmatpush1.msra.mxu0 %v136
    %358 = vmatprep.subr.mxu0 0.0
    %359 = vmatpush1.msra.mxu0 %v137
    %360 = vmatprep.subr.mxu0 0.0
    %361 = vmatpush1.msra.mxu0 %v138
    %362 = vmatprep.subr.mxu0 0.0
    %363 = vmatpush1.msra.mxu0 %v139
    %364 = vmatprep.subr.mxu0 0.0
    %365 = vmatpush1.msra.mxu0 %v140
    %366 = vmatprep.subr.mxu0 0.0
    %367 = vmatpush1.msra.mxu0 %v141
    %368 = vmatprep.subr.mxu0 0.0
    %369 = vmatpush1.msra.mxu0 %v142
    %370 = vmatprep.subr.mxu0 0.0
    %371 = vmatpush1.msra.mxu0 %v143
    %372 = vmatprep.subr.mxu0 0.0
    %373 = vmatpush1.msra.mxu0 %v144
    %374 = vmatprep.subr.mxu0 0.0
    %375 = vmatpush1.msra.mxu0 %v145
    %376 = vmatprep.subr.mxu0 0.0
    %377 = vmatpush1.msra.mxu0 %v146
    %378 = vmatprep.subr.mxu0 0.0
    %379 = vmatpush1.msra.mxu0 %v147
    %380 = vmatprep.subr.mxu0 0.0
    %381 = vmatpush1.msra.mxu0 %v148
    %382 = vmatprep.subr.mxu0 0.0
    %383 = vmatpush1.msra.mxu0 %v149
    %384 = vmatprep.subr.mxu0 0.0
    %385 = vmatpush1.msra.mxu0 %v150
    %386 = vmatprep.subr.mxu0 0.0
    %387 = vmatpush1.msra.mxu0 %v151
    %388 = vmatprep.subr.mxu0 0.0
    %389 = vmatpush1.msra.mxu0 %v152
    %390 = vmatprep.subr.mxu0 0.0
    %391 = vmatpush1.msra.mxu0 %v153
    %392 = vmatprep.subr.mxu0 0.0
    %393 = vmatpush1.msra.mxu0 %v154
    %394 = vmatprep.subr.mxu0 0.0
    %395 = vmatpush1.msra.mxu0 %v155
    %396 = vmatprep.mubr.f32.mxu0 %v57
    %397 = vmatmul.mubr.f32.gmra.mrb[0].mxu0 %v56
    %v398 = vpop.f32.mrb[0].mxu0
    %v399 = vadd.f32 %v329, %v398
    %v400 = vpop.f32.mrb[0].mxu0
    %401 = vdwg.mxu0
    %402 = vmatprep.subr.mxu0 0.0
    %403 = vmatpush1.msra.mxu0 %v156
    %404 = vmatprep.subr.mxu0 0.0
    %405 = vmatpush1.msra.mxu0 %v157
    %406 = vmatprep.subr.mxu0 0.0
    %407 = vmatpush1.msra.mxu0 %v158
    %408 = vmatprep.subr.mxu0 0.0
    %409 = vmatpush1.msra.mxu0 %v159
    %410 = vmatprep.subr.mxu0 0.0
    %411 = vmatpush1.msra.mxu0 %v160
    %412 = vmatprep.subr.mxu0 0.0
    %413 = vmatpush1.msra.mxu0 %v161
    %414 = vmatprep.subr.mxu0 0.0
    %415 = vmatpush1.msra.mxu0 %v162
    %416 = vmatprep.subr.mxu0 0.0
    %417 = vmatpush1.msra.mxu0 %v163
    %418 = vmatprep.subr.mxu0 0.0
    %419 = vmatpush1.msra.mxu0 %v164
    %420 = vmatprep.subr.mxu0 0.0
    %421 = vmatpush1.msra.mxu0 %v165
    %422 = vmatprep.subr.mxu0 0.0
    %423 = vmatpush1.msra.mxu0 %v166
    %424 = vmatprep.subr.mxu0 0.0
    %425 = vmatpush1.msra.mxu0 %v167
    %426 = vmatprep.subr.mxu0 0.0
    %427 = vmatpush1.msra.mxu0 %v168
    %428 = vmatprep.subr.mxu0 0.0
    %429 = vmatpush1.msra.mxu0 %v169
    %430 = vmatprep.subr.mxu0 0.0
    %431 = vmatpush1.msra.mxu0 %v170
    %432 = vmatprep.subr.mxu0 0.0
    %433 = vmatpush1.msra.mxu0 %v171
    %434 = vmatprep.subr.mxu0 0.0
    %435 = vmatpush1.msra.mxu0 %v172
    %436 = vmatprep.subr.mxu0 0.0
    %437 = vmatpush1.msra.mxu0 %v173
    %438 = vmatprep.subr.mxu0 0.0
    %439 = vmatpush1.msra.mxu0 %v174
    %440 = vmatprep.subr.mxu0 0.0
    %441 = vmatpush1.msra.mxu0 %v175
    %442 = vmatprep.subr.mxu0 0.0
    %443 = vmatpush1.msra.mxu0 %v176
    %444 = vmatprep.subr.mxu0 0.0
    %445 = vmatpush1.msra.mxu0 %v177
    %446 = vmatprep.subr.mxu0 0.0
    %447 = vmatpush1.msra.mxu0 %v178
    %448 = vmatprep.subr.mxu0 0.0
    %449 = vmatpush1.msra.mxu0 %v179
    %450 = vmatprep.subr.mxu0 0.0
    %451 = vmatpush1.msra.mxu0 %v180
    %452 = vmatprep.subr.mxu0 0.0
    %453 = vmatpush1.msra.mxu0 %v181
    %454 = vmatprep.subr.mxu0 0.0
    %455 = vmatpush1.msra.mxu0 %v182
    %456 = vmatprep.subr.mxu0 0.0
    %457 = vmatpush1.msra.mxu0 %v183
    %458 = vmatprep.subr.mxu0 0.0
    %459 = vmatpush1.msra.mxu0 %v184
    %460 = vmatprep.subr.mxu0 0.0
    %461 = vmatpush1.msra.mxu0 %v185
    %462 = vmatprep.subr.mxu0 0.0
    %463 = vmatpush1.msra.mxu0 %v186
    %464 = vmatprep.subr.mxu0 0.0
    %465 = vmatpush1.msra.mxu0 %v187
    %466 = vmatprep.mubr.f32.mxu0 %v59
    %467 = vmatmul.mubr.f32.gmra.mrb[0].mxu0 %v58
    %v468 = vpop.f32.mrb[0].mxu0
    %v469 = vadd.f32 %v399, %v468
    %v470 = vpop.f32.mrb[0].mxu0
    %471 = vdwg.mxu0
    %v472 = vmax.f32 %v469, 0.0
    %473 = vst [vmem:[#allocation3] sm:$0xff] %v472
    %v474 = vld [vmem:[%s5] sm:$0xff]
    %v475 = vld [vmem:[%s5 + $0x8] sm:$0xff]
    %v476 = vld [vmem:[%s5 + $0x10] sm:$0xff]
    %v477 = vld [vmem:[%s5 + $0x18] sm:$0xff]
    %v478 = vld [vmem:[%s5 + $0x20] sm:$0xff]
    %v479 = vld [vmem:[%s5 + $0x28] sm:$0xff]
    %v480 = vld [vmem:[%s5 + $0x30] sm:$0xff]
    %v481 = vld [vmem:[%s5 + $0x38] sm:$0xff]
    %v482 = vld [vmem:[%s5 + $0x40] sm:$0xff]
    %v483 = vld [vmem:[%s5 + $0x48] sm:$0xff]
    %v484 = vld [vmem:[%s5 + $0x50] sm:$0xff]
    %v485 = vld [vmem:[%s5 + $0x58] sm:$0xff]
    %v486 = vld [vmem:[%s5 + $0x60] sm:$0xff]
    %v487 = vld [vmem:[%s5 + $0x68] sm:$0xff]
    %v488 = vld [vmem:[%s5 + $0x70] sm:$0xff]
    %v489 = vld [vmem:[%s5 + $0x78] sm:$0xff]
    %v490 = vld [vmem:[%s6] sm:$0xff]
    %v491 = vld [vmem:[%s6 + $0x8] sm:$0xff]
    %v492 = vld [vmem:[%s6 + $0x10] sm:$0xff]
    %v493 = vld [vmem:[%s6 + $0x18] sm:$0xff]
    %v494 = vld [vmem:[%s6 + $0x20] sm:$0xff]
    %v495 = vld [vmem:[%s6 + $0x28] sm:$0xff]
    %v496 = vld [vmem:[%s6 + $0x30] sm:$0xff]
    %v497 = vld [vmem:[%s6 + $0x38] sm:$0xff]
    %v498 = vld [vmem:[%s6 + $0x40] sm:$0xff]
    %v499 = vld [vmem:[%s6 + $0x48] sm:$0xff]
    %v500 = vld [vmem:[%s6 + $0x50] sm:$0xff]
    %v501 = vld [vmem:[%s6 + $0x58] sm:$0xff]
    %v502 = vld [vmem:[%s6 + $0x60] sm:$0xff]
    %v503 = vld [vmem:[%s6 + $0x68] sm:$0xff]
    %v504 = vld [vmem:[%s6 + $0x70] sm:$0xff]
    %v505 = vld [vmem:[%s6 + $0x78] sm:$0xff]
    %v506 = vlaneseq
    %v507 = vshrl.u32 %v506, 7
    %v508 = vsub.s32 1, %v507
    %v509 = vrot.slane %v51, %v508
    %510 = vmatprep.subr.mxu0 0.0
    %511 = vmatpush1.msra.mxu0 %v474
    %512 = vmatprep.subr.mxu0 0.0
    %513 = vmatpush1.msra.mxu0 %v475
    %514 = vmatprep.subr.mxu0 0.0
    %515 = vmatpush1.msra.mxu0 %v476
    %516 = vmatprep.subr.mxu0 0.0
    %517 = vmatpush1.msra.mxu0 %v477
    %518 = vmatprep.subr.mxu0 0.0
    %519 = vmatpush1.msra.mxu0 %v478
    %520 = vmatprep.subr.mxu0 0.0
    %521 = vmatpush1.msra.mxu0 %v479
    %522 = vmatprep.subr.mxu0 0.0
    %523 = vmatpush1.msra.mxu0 %v480
    %524 = vmatprep.subr.mxu0 0.0
    %525 = vmatpush1.msra.mxu0 %v481
    %526 = vmatprep.subr.mxu0 0.0
    %527 = vmatpush1.msra.mxu0 %v482
    %528 = vmatprep.subr.mxu0 0.0
    %529 = vmatpush1.msra.mxu0 %v483
    %530 = vmatprep.subr.mxu0 0.0
    %531 = vmatpush1.msra.mxu0 %v484
    %532 = vmatprep.subr.mxu0 0.0
    %533 = vmatpush1.msra.mxu0 %v485
    %534 = vmatprep.subr.mxu0 0.0
    %535 = vmatpush1.msra.mxu0 %v486
    %536 = vmatprep.subr.mxu0 0.0
    %537 = vmatpush1.msra.mxu0 %v487
    %538 = vmatprep.subr.mxu0 0.0
    %539 = vmatpush1.msra.mxu0 %v488
    %540 = vmatprep.subr.mxu0 0.0
    %541 = vmatpush1.msra.mxu0 %v489
    %542 = vmatprep.subr.mxu0 0.0
    %543 = vmatpush1.msra.mxu0 0.0
    %544 = vmatprep.subr.mxu0 0.0
    %545 = vmatpush1.msra.mxu0 0.0
    %546 = vmatprep.subr.mxu0 0.0
    %547 = vmatpush1.msra.mxu0 0.0
    %548 = vmatprep.subr.mxu0 0.0
    %549 = vmatpush1.msra.mxu0 0.0
    %550 = vmatprep.subr.mxu0 0.0
    %551 = vmatpush1.msra.mxu0 0.0
    %552 = vmatprep.subr.mxu0 0.0
    %553 = vmatpush1.msra.mxu0 0.0
    %554 = vmatprep.subr.mxu0 0.0
    %555 = vmatpush1.msra.mxu0 0.0
    %556 = vmatprep.subr.mxu0 0.0
    %557 = vmatpush1.msra.mxu0 0.0
    %558 = vmatprep.subr.mxu0 0.0
    %559 = vmatpush1.msra.mxu0 0.0
    %560 = vmatprep.subr.mxu0 0.0
    %561 = vmatpush1.msra.mxu0 0.0
    %562 = vmatprep.subr.mxu0 0.0
    %563 = vmatpush1.msra.mxu0 0.0
    %564 = vmatprep.subr.mxu0 0.0
    %565 = vmatpush1.msra.mxu0 0.0
    %566 = vmatprep.subr.mxu0 0.0
    %567 = vmatpush1.msra.mxu0 0.0
    %568 = vmatprep.subr.mxu0 0.0
    %569 = vmatpush1.msra.mxu0 0.0
    %570 = vmatprep.subr.mxu0 0.0
    %571 = vmatpush1.msra.mxu0 0.0
    %572 = vmatprep.subr.mxu0 0.0
    %573 = vmatpush1.msra.mxu0 0.0
    %574 = vmatprep.mubr.f32.mxu0 0.0
    %575 = vmatmul.mubr.f32.gmra.mrb[0].mxu0 %v472
    %v576 = vpop.f32.mrb[0].mxu0
    %v577 = vadd.f32 %v509, %v576
    %v578 = vpop.f32.mrb[0].mxu0
    %579 = vdwg.mxu0
    %v580 = vrot.slane %v577, 4
    %v581 = vadd.f32 %v577, %v580
    %v582 = vrot.slane %v581, 2
    %v583 = vadd.f32 %v581, %v582
    %v584 = vrot.slane %v583, 1
    %v585 = vadd.f32 %v583, %v584
    %v586 = vrcp.pop 8.0
    %v587 = vmul.f32 %v585, %v586
    %v588 = vsub.f32 %v577, %v587
    %v589 = vmul.f32 %v588, %v588
    %v590 = vrot.slane %v589, 4
    %v591 = vadd.f32 %v589, %v590
    %v592 = vrot.slane %v591, 2
    %v593 = vadd.f32 %v591, %v592
    %v594 = vrot.slane %v593, 1
    %v595 = vadd.f32 %v593, %v594
    %v596 = vmul.f32 %v595, %v586
    %v597 = vadd.f32 %v596, 1e-05
    %v598 = vrsqrt.pop %v597
    %v599 = vmul.f32 %v588, %v598
    %v600 = vlaneseq
    %v601 = vshrl.u32 %v600, 7
    %v602 = vsub.s32 2, %v601
    %v603 = vrot.slane %v51, %v602
    %v604 = vmul.f32 %v599, %v603
    %v605 = vlaneseq
    %v606 = vshrl.u32 %v605, 7
    %v607 = vsub.s32 3, %v606
    %v608 = vrot.slane %v51, %v607
    %v609 = vadd.f32 %v604, %v608
    %v610 = vmax.f32 %v609, 0.0
    %v611 = vlaneseq
    %v612 = vshrl.u32 %v611, 7
    %v613 = vsub.s32 4, %v612
    %v614 = vrot.slane %v51, %v613
    %615 = vmatprep.subr.mxu0 0.0
    %616 = vmatpush1.msra.mxu0 %v490
    %617 = vmatprep.subr.mxu0 0.0
    %618 = vmatpush1.msra.mxu0 %v491
    %619 = vmatprep.subr.mxu0 0.0
    %620 = vmatpush1.msra.mxu0 %v492
    %621 = vmatprep.subr.mxu0 0.0
    %622 = vmatpush1.msra.mxu0 %v493
    %623 = vmatprep.subr.mxu0 0.0
    %624 = vmatpush1.msra.mxu0 %v494
    %625 = vmatprep.subr.mxu0 0.0
    %626 = vmatpush1.msra.mxu0 %v495
    %627 = vmatprep.subr.mxu0 0.0
    %628 = vmatpush1.msra.mxu0 %v496
    %629 = vmatprep.subr.mxu0 0.0
    %630 = vmatpush1.msra.mxu0 %v497
    %631 = vmatprep.subr.mxu0 0.0
    %632 = vmatpush1.msra.mxu0 %v498
    %633 = vmatprep.subr.mxu0 0.0
    %634 = vmatpush1.msra.mxu0 %v499
    %635 = vmatprep.subr.mxu0 0.0
    %636 = vmatpush1.msra.mxu0 %v500
    %637 = vmatprep.subr.mxu0 0.0
    %638 = vmatpush1.msra.mxu0 %v501
    %639 = vmatprep.subr.mxu0 0.0
    %640 = vmatpush1.msra.mxu0 %v502
    %641 = vmatprep.subr.mxu0 0.0
    %642 = vmatpush1.msra.mxu0 %v503
    %643 = vmatprep.subr.mxu0 0.0
    %644 = vmatpush1.msra.mxu0 %v504
    %645 = vmatprep.subr.mxu0 0.0
    %646 = vmatpush1.msra.mxu0 %v505
    %647 = vmatprep.subr.mxu0 0.0
    %648 = vmatpush1.msra.mxu0 0.0
    %649 = vmatprep.subr.mxu0 0.0
    %650 = vmatpush1.msra.mxu0 0.0
    %651 = vmatprep.subr.mxu0 0.0
    %652 = vmatpush1.msra.mxu0 0.0
    %653 = vmatprep.subr.mxu0 0.0
    %654 = vmatpush1.msra.mxu0 0.0
    %655 = vmatprep.subr.mxu0 0.0
    %656 = vmatpush1.msra.mxu0 0.0
    %657 = vmatprep.subr.mxu0 0.0
    %658 = vmatpush1.msra.mxu0 0.0
    %659 = vmatprep.subr.mxu0 0.0
    %660 = vmatpush1.msra.mxu0 0.0
    %661 = vmatprep.subr.mxu0 0.0
    %662 = vmatpush1.msra.mxu0 0.0
    %663 = vmatprep.subr.mxu0 0.0
    %664 = vmatpush1.msra.mxu0 0.0
    %665 = vmatprep.subr.mxu0 0.0
    %666 = vmatpush1.msra.mxu0 0.0
    %667 = vmatprep.subr.mxu0 0.0
    %668 = vmatpush1.msra.mxu0 0.0
    %669 = vmatprep.subr.mxu0 0.0
    %670 = vmatpush1.msra.mxu0 0.0
    %671 = vmatprep.subr.mxu0 0.0
    %672 = vmatpush1.msra.mxu0 0.0
    %673 = vmatprep.subr.mxu0 0.0
    %674 = vmatpush1.msra.mxu0 0.0
    %675 = vmatprep.subr.mxu0 0.0
    %676 = vmatpush1.msra.mxu0 0.0
    %677 = vmatprep.subr.mxu0 0.0
    %678 = vmatpush1.msra.mxu0 0.0
    %679 = vmatprep.mubr.f32.mxu0 0.0
    %680 = vmatmul.mubr.f32.gmra.mrb[0].mxu0 %v610
    %v681 = vpop.f32.mrb[0].mxu0
    %v682 = vadd.f32 %v614, %v681
    %v683 = vpop.f32.mrb[0].mxu0
    %684 = vdwg.mxu0
    %v685 = vmul.f32 %v682, %v682
    %686 = vadd.xlane.f32.xlu0 %v685
    %v687 = vpop.xlane.xlu0 %686
    %v688 = vmax.f32 %v687, 1e-24
    %v689 = vrsqrt.pop %v688
    %v690 = vmul.f32 %v682, %v689
    %v691 = vld [vmem:[%s4] sm:$0xff]
    %v692 = vld [vmem:[%s4 + $0x8] sm:$0xff]
    %v693 = vld [vmem:[%s4 + $0x10] sm:$0xff]
    %v694 = vld [vmem:[%s4 + $0x18] sm:$0xff]
    %v695 = vld [vmem:[%s4 + $0x20] sm:$0xff]
    %v696 = vld [vmem:[%s4 + $0x28] sm:$0xff]
    %v697 = vld [vmem:[%s4 + $0x30] sm:$0xff]
    %v698 = vld [vmem:[%s4 + $0x38] sm:$0xff]
    %v699 = vld [vmem:[%s4 + $0x40] sm:$0xff]
    %v700 = vld [vmem:[%s4 + $0x48] sm:$0xff]
    %v701 = vld [vmem:[%s4 + $0x50] sm:$0xff]
    %v702 = vld [vmem:[%s4 + $0x58] sm:$0xff]
    %v703 = vld [vmem:[%s4 + $0x60] sm:$0xff]
    %v704 = vld [vmem:[%s4 + $0x68] sm:$0xff]
    %v705 = vld [vmem:[%s4 + $0x70] sm:$0xff]
    %v706 = vld [vmem:[%s4 + $0x78] sm:$0xff]
    %v707 = vld [vmem:[%s4 + $0x80] sm:$0xff]
    %v708 = vld [vmem:[%s4 + $0x88] sm:$0xff]
    %v709 = vld [vmem:[%s4 + $0x90] sm:$0xff]
    %v710 = vld [vmem:[%s4 + $0x98] sm:$0xff]
    %v711 = vld [vmem:[%s4 + $0xa0] sm:$0xff]
    %v712 = vld [vmem:[%s4 + $0xa8] sm:$0xff]
    %v713 = vld [vmem:[%s4 + $0xb0] sm:$0xff]
    %v714 = vld [vmem:[%s4 + $0xb8] sm:$0xff]
    %v715 = vld [vmem:[%s4 + $0xc0] sm:$0xff]
    %v716 = vld [vmem:[%s4 + $0xc8] sm:$0xff]
    %v717 = vld [vmem:[%s4 + $0xd0] sm:$0xff]
    %v718 = vld [vmem:[%s4 + $0xd8] sm:$0xff]
    %v719 = vld [vmem:[%s4 + $0xe0] sm:$0xff]
    %v720 = vld [vmem:[%s4 + $0xe8] sm:$0xff]
    %v721 = vld [vmem:[%s4 + $0xf0] sm:$0xff]
    %v722 = vld [vmem:[%s4 + $0xf8] sm:$0xff]
    %v723 = vld [vmem:[%s4 + $0x100] sm:$0xff]
    %v724 = vld [vmem:[%s4 + $0x108] sm:$0xff]
    %v725 = vld [vmem:[%s4 + $0x110] sm:$0xff]
    %v726 = vld [vmem:[%s4 + $0x118] sm:$0xff]
    %v727 = vld [vmem:[%s4 + $0x120] sm:$0xff]
    %v728 = vld [vmem:[%s4 + $0x128] sm:$0xff]
    %v729 = vld [vmem:[%s4 + $0x130] sm:$0xff]
    %v730 = vld [vmem:[%s4 + $0x138] sm:$0xff]
    %v731 = vld [vmem:[%s4 + $0x140] sm:$0xff]
    %v732 = vld [vmem:[%s4 + $0x148] sm:$0xff]
    %v733 = vld [vmem:[%s4 + $0x150] sm:$0xff]
    %v734 = vld [vmem:[%s4 + $0x158] sm:$0xff]
    %v735 = vld [vmem:[%s4 + $0x160] sm:$0xff]
    %v736 = vld [vmem:[%s4 + $0x168] sm:$0xff]
    %v737 = vld [vmem:[%s4 + $0x170] sm:$0xff]
    %v738 = vld [vmem:[%s4 + $0x178] sm:$0xff]
    %v739 = vld [vmem:[%s4 + $0x180] sm:$0xff]
    %v740 = vld [vmem:[%s4 + $0x188] sm:$0xff]
    %v741 = vld [vmem:[%s4 + $0x190] sm:$0xff]
    %v742 = vld [vmem:[%s4 + $0x198] sm:$0xff]
    %v743 = vld [vmem:[%s4 + $0x1a0] sm:$0xff]
    %v744 = vld [vmem:[%s4 + $0x1a8] sm:$0xff]
    %v745 = vld [vmem:[%s4 + $0x1b0] sm:$0xff]
    %v746 = vld [vmem:[%s4 + $0x1b8] sm:$0xff]
    %v747 = vld [vmem:[%s4 + $0x1c0] sm:$0xff]
    %v748 = vld [vmem:[%s4 + $0x1c8] sm:$0xff]
    %v749 = vld [vmem:[%s4 + $0x1d0] sm:$0xff]
    %v750 = vld [vmem:[%s4 + $0x1d8] sm:$0xff]
    %v751 = vld [vmem:[%s4 + $0x1e0] sm:$0xff]
    %v752 = vld [vmem:[%s4 + $0x1e8] sm:$0xff]
    %v753 = vld [vmem:[%s4 + $0x1f0] sm:$0xff]
    %v754 = vld [vmem:[%s4 + $0x1f8] sm:$0xff]
    %v755 = vld [vmem:[%s4 + $0x200] sm:$0xff]
    %v756 = vld [vmem:[%s4 + $0x208] sm:$0xff]
    %v757 = vld [vmem:[%s4 + $0x210] sm:$0xff]
    %v758 = vld [vmem:[%s4 + $0x218] sm:$0xff]
    %v759 = vld [vmem:[%s4 + $0x220] sm:$0xff]
    %v760 = vld [vmem:[%s4 + $0x228] sm:$0xff]
    %v761 = vld [vmem:[%s4 + $0x230] sm:$0xff]
    %v762 = vld [vmem:[%s4 + $0x238] sm:$0xff]
    %v763 = vld [vmem:[%s4 + $0x240] sm:$0xff]
    %v764 = vld [vmem:[%s4 + $0x248] sm:$0xff]
    %v765 = vld [vmem:[%s4 + $0x250] sm:$0xff]
    %v766 = vld [vmem:[%s4 + $0x258] sm:$0xff]
    %v767 = vld [vmem:[%s4 + $0x260] sm:$0xff]
    %v768 = vld [vmem:[%s4 + $0x268] sm:$0xff]
    %v769 = vld [vmem:[%s4 + $0x270] sm:$0xff]
    %v770 = vld [vmem:[%s4 + $0x278] sm:$0xff]
    %v771 = vld [vmem:[%s4 + $0x280] sm:$0xff]
    %v772 = vld [vmem:[%s4 + $0x288] sm:$0xff]
    %v773 = vld [vmem:[%s4 + $0x290] sm:$0xff]
    %v774 = vld [vmem:[%s4 + $0x298] sm:$0xff]
    %v775 = vld [vmem:[%s4 + $0x2a0] sm:$0xff]
    %v776 = vld [vmem:[%s4 + $0x2a8] sm:$0xff]
    %v777 = vld [vmem:[%s4 + $0x2b0] sm:$0xff]
    %v778 = vld [vmem:[%s4 + $0x2b8] sm:$0xff]
    %v779 = vld [vmem:[%s4 + $0x2c0] sm:$0xff]
    %v780 = vld [vmem:[%s4 + $0x2c8] sm:$0xff]
    %v781 = vld [vmem:[%s4 + $0x2d0] sm:$0xff]
    %v782 = vld [vmem:[%s4 + $0x2d8] sm:$0xff]
    %v783 = vld [vmem:[%s4 + $0x2e0] sm:$0xff]
    %v784 = vld [vmem:[%s4 + $0x2e8] sm:$0xff]
    %v785 = vld [vmem:[%s4 + $0x2f0] sm:$0xff]
    %v786 = vld [vmem:[%s4 + $0x2f8] sm:$0xff]
    %v787 = vld [vmem:[%s4 + $0x300] sm:$0xff]
    %v788 = vld [vmem:[%s4 + $0x308] sm:$0xff]
    %v789 = vld [vmem:[%s4 + $0x310] sm:$0xff]
    %v790 = vld [vmem:[%s4 + $0x318] sm:$0xff]
    %v791 = vld [vmem:[%s4 + $0x320] sm:$0xff]
    %v792 = vld [vmem:[%s4 + $0x328] sm:$0xff]
    %v793 = vld [vmem:[%s4 + $0x330] sm:$0xff]
    %v794 = vld [vmem:[%s4 + $0x338] sm:$0xff]
    %v795 = vld [vmem:[%s4 + $0x340] sm:$0xff]
    %v796 = vld [vmem:[%s4 + $0x348] sm:$0xff]
    %v797 = vld [vmem:[%s4 + $0x350] sm:$0xff]
    %v798 = vld [vmem:[%s4 + $0x358] sm:$0xff]
    %v799 = vld [vmem:[%s4 + $0x360] sm:$0xff]
    %v800 = vld [vmem:[%s4 + $0x368] sm:$0xff]
    %v801 = vld [vmem:[%s4 + $0x370] sm:$0xff]
    %v802 = vld [vmem:[%s4 + $0x378] sm:$0xff]
    %v803 = vld [vmem:[%s4 + $0x380] sm:$0xff]
    %v804 = vld [vmem:[%s4 + $0x388] sm:$0xff]
    %v805 = vld [vmem:[%s4 + $0x390] sm:$0xff]
    %v806 = vld [vmem:[%s4 + $0x398] sm:$0xff]
    %v807 = vld [vmem:[%s4 + $0x3a0] sm:$0xff]
    %v808 = vld [vmem:[%s4 + $0x3a8] sm:$0xff]
    %v809 = vld [vmem:[%s4 + $0x3b0] sm:$0xff]
    %v810 = vld [vmem:[%s4 + $0x3b8] sm:$0xff]
    %v811 = vld [vmem:[%s4 + $0x3c0] sm:$0xff]
    %v812 = vld [vmem:[%s4 + $0x3c8] sm:$0xff]
    %v813 = vld [vmem:[%s4 + $0x3d0] sm:$0xff]
    %v814 = vld [vmem:[%s4 + $0x3d8] sm:$0xff]
    %v815 = vld [vmem:[%s4 + $0x3e0] sm:$0xff]
    %v816 = vld [vmem:[%s4 + $0x3e8] sm:$0xff]
    %v817 = vld [vmem:[%s4 + $0x3f0] sm:$0xff]
    %v818 = vld [vmem:[%s4 + $0x3f8] sm:$0xff]
    %v819 = vld [vmem:[%s8] sm:$0xff]
    %v820 = vld [vmem:[%s8 + $0x8] sm:$0xff]
    %v821 = vld [vmem:[%s8 + $0x10] sm:$0xff]
    %v822 = vld [vmem:[%s8 + $0x18] sm:$0xff]
    %v823 = vld [vmem:[%s8 + $0x20] sm:$0xff]
    %v824 = vld [vmem:[%s8 + $0x28] sm:$0xff]
    %v825 = vld [vmem:[%s8 + $0x30] sm:$0xff]
    %v826 = vld [vmem:[%s8 + $0x38] sm:$0xff]
    %v827 = vld [vmem:[%s8 + $0x40] sm:$0xff]
    %v828 = vld [vmem:[%s8 + $0x48] sm:$0xff]
    %v829 = vld [vmem:[%s8 + $0x50] sm:$0xff]
    %v830 = vld [vmem:[%s8 + $0x58] sm:$0xff]
    %v831 = vld [vmem:[%s8 + $0x60] sm:$0xff]
    %v832 = vld [vmem:[%s8 + $0x68] sm:$0xff]
    %v833 = vld [vmem:[%s8 + $0x70] sm:$0xff]
    %v834 = vld [vmem:[%s8 + $0x78] sm:$0xff]
    %v835 = vld [vmem:[%s8 + $0x80] sm:$0xff]
    %v836 = vld [vmem:[%s8 + $0x88] sm:$0xff]
    %v837 = vld [vmem:[%s8 + $0x90] sm:$0xff]
    %v838 = vld [vmem:[%s8 + $0x98] sm:$0xff]
    %v839 = vld [vmem:[%s8 + $0xa0] sm:$0xff]
    %v840 = vld [vmem:[%s8 + $0xa8] sm:$0xff]
    %v841 = vld [vmem:[%s8 + $0xb0] sm:$0xff]
    %v842 = vld [vmem:[%s8 + $0xb8] sm:$0xff]
    %v843 = vld [vmem:[%s8 + $0xc0] sm:$0xff]
    %v844 = vld [vmem:[%s8 + $0xc8] sm:$0xff]
    %v845 = vld [vmem:[%s8 + $0xd0] sm:$0xff]
    %v846 = vld [vmem:[%s8 + $0xd8] sm:$0xff]
    %v847 = vld [vmem:[%s8 + $0xe0] sm:$0xff]
    %v848 = vld [vmem:[%s8 + $0xe8] sm:$0xff]
    %v849 = vld [vmem:[%s8 + $0xf0] sm:$0xff]
    %v850 = vld [vmem:[%s8 + $0xf8] sm:$0xff]
    %v851 = vld [vmem:[%s8 + $0x100] sm:$0xff]
    %v852 = vld [vmem:[%s8 + $0x108] sm:$0xff]
    %v853 = vld [vmem:[%s8 + $0x110] sm:$0xff]
    %v854 = vld [vmem:[%s8 + $0x118] sm:$0xff]
    %v855 = vld [vmem:[%s8 + $0x120] sm:$0xff]
    %v856 = vld [vmem:[%s8 + $0x128] sm:$0xff]
    %v857 = vld [vmem:[%s8 + $0x130] sm:$0xff]
    %v858 = vld [vmem:[%s8 + $0x138] sm:$0xff]
    %v859 = vld [vmem:[%s8 + $0x140] sm:$0xff]
    %v860 = vld [vmem:[%s8 + $0x148] sm:$0xff]
    %v861 = vld [vmem:[%s8 + $0x150] sm:$0xff]
    %v862 = vld [vmem:[%s8 + $0x158] sm:$0xff]
    %v863 = vld [vmem:[%s8 + $0x160] sm:$0xff]
    %v864 = vld [vmem:[%s8 + $0x168] sm:$0xff]
    %v865 = vld [vmem:[%s8 + $0x170] sm:$0xff]
    %v866 = vld [vmem:[%s8 + $0x178] sm:$0xff]
    %v867 = vld [vmem:[%s8 + $0x180] sm:$0xff]
    %v868 = vld [vmem:[%s8 + $0x188] sm:$0xff]
    %v869 = vld [vmem:[%s8 + $0x190] sm:$0xff]
    %v870 = vld [vmem:[%s8 + $0x198] sm:$0xff]
    %v871 = vld [vmem:[%s8 + $0x1a0] sm:$0xff]
    %v872 = vld [vmem:[%s8 + $0x1a8] sm:$0xff]
    %v873 = vld [vmem:[%s8 + $0x1b0] sm:$0xff]
    %v874 = vld [vmem:[%s8 + $0x1b8] sm:$0xff]
    %v875 = vld [vmem:[%s8 + $0x1c0] sm:$0xff]
    %v876 = vld [vmem:[%s8 + $0x1c8] sm:$0xff]
    %v877 = vld [vmem:[%s8 + $0x1d0] sm:$0xff]
    %v878 = vld [vmem:[%s8 + $0x1d8] sm:$0xff]
    %v879 = vld [vmem:[%s8 + $0x1e0] sm:$0xff]
    %v880 = vld [vmem:[%s8 + $0x1e8] sm:$0xff]
    %v881 = vld [vmem:[%s8 + $0x1f0] sm:$0xff]
    %v882 = vld [vmem:[%s8 + $0x1f8] sm:$0xff]
    %v883 = vld [vmem:[%s8 + $0x200] sm:$0xff]
    %v884 = vld [vmem:[%s8 + $0x208] sm:$0xff]
    %v885 = vld [vmem:[%s8 + $0x210] sm:$0xff]
    %v886 = vld [vmem:[%s8 + $0x218] sm:$0xff]
    %v887 = vld [vmem:[%s8 + $0x220] sm:$0xff]
    %v888 = vld [vmem:[%s8 + $0x228] sm:$0xff]
    %v889 = vld [vmem:[%s8 + $0x230] sm:$0xff]
    %v890 = vld [vmem:[%s8 + $0x238] sm:$0xff]
    %v891 = vld [vmem:[%s8 + $0x240] sm:$0xff]
    %v892 = vld [vmem:[%s8 + $0x248] sm:$0xff]
    %v893 = vld [vmem:[%s8 + $0x250] sm:$0xff]
    %v894 = vld [vmem:[%s8 + $0x258] sm:$0xff]
    %v895 = vld [vmem:[%s8 + $0x260] sm:$0xff]
    %v896 = vld [vmem:[%s8 + $0x268] sm:$0xff]
    %v897 = vld [vmem:[%s8 + $0x270] sm:$0xff]
    %v898 = vld [vmem:[%s8 + $0x278] sm:$0xff]
    %v899 = vld [vmem:[%s8 + $0x280] sm:$0xff]
    %v900 = vld [vmem:[%s8 + $0x288] sm:$0xff]
    %v901 = vld [vmem:[%s8 + $0x290] sm:$0xff]
    %v902 = vld [vmem:[%s8 + $0x298] sm:$0xff]
    %v903 = vld [vmem:[%s8 + $0x2a0] sm:$0xff]
    %v904 = vld [vmem:[%s8 + $0x2a8] sm:$0xff]
    %v905 = vld [vmem:[%s8 + $0x2b0] sm:$0xff]
    %v906 = vld [vmem:[%s8 + $0x2b8] sm:$0xff]
    %v907 = vld [vmem:[%s8 + $0x2c0] sm:$0xff]
    %v908 = vld [vmem:[%s8 + $0x2c8] sm:$0xff]
    %v909 = vld [vmem:[%s8 + $0x2d0] sm:$0xff]
    %v910 = vld [vmem:[%s8 + $0x2d8] sm:$0xff]
    %v911 = vld [vmem:[%s8 + $0x2e0] sm:$0xff]
    %v912 = vld [vmem:[%s8 + $0x2e8] sm:$0xff]
    %v913 = vld [vmem:[%s8 + $0x2f0] sm:$0xff]
    %v914 = vld [vmem:[%s8 + $0x2f8] sm:$0xff]
    %v915 = vld [vmem:[%s8 + $0x300] sm:$0xff]
    %v916 = vld [vmem:[%s8 + $0x308] sm:$0xff]
    %v917 = vld [vmem:[%s8 + $0x310] sm:$0xff]
    %v918 = vld [vmem:[%s8 + $0x318] sm:$0xff]
    %v919 = vld [vmem:[%s8 + $0x320] sm:$0xff]
    %v920 = vld [vmem:[%s8 + $0x328] sm:$0xff]
    %v921 = vld [vmem:[%s8 + $0x330] sm:$0xff]
    %v922 = vld [vmem:[%s8 + $0x338] sm:$0xff]
    %v923 = vld [vmem:[%s8 + $0x340] sm:$0xff]
    %v924 = vld [vmem:[%s8 + $0x348] sm:$0xff]
    %v925 = vld [vmem:[%s8 + $0x350] sm:$0xff]
    %v926 = vld [vmem:[%s8 + $0x358] sm:$0xff]
    %v927 = vld [vmem:[%s8 + $0x360] sm:$0xff]
    %v928 = vld [vmem:[%s8 + $0x368] sm:$0xff]
    %v929 = vld [vmem:[%s8 + $0x370] sm:$0xff]
    %v930 = vld [vmem:[%s8 + $0x378] sm:$0xff]
    %v931 = vld [vmem:[%s8 + $0x380] sm:$0xff]
    %v932 = vld [vmem:[%s8 + $0x388] sm:$0xff]
    %v933 = vld [vmem:[%s8 + $0x390] sm:$0xff]
    %v934 = vld [vmem:[%s8 + $0x398] sm:$0xff]
    %v935 = vld [vmem:[%s8 + $0x3a0] sm:$0xff]
    %v936 = vld [vmem:[%s8 + $0x3a8] sm:$0xff]
    %v937 = vld [vmem:[%s8 + $0x3b0] sm:$0xff]
    %v938 = vld [vmem:[%s8 + $0x3b8] sm:$0xff]
    %v939 = vld [vmem:[%s8 + $0x3c0] sm:$0xff]
    %v940 = vld [vmem:[%s8 + $0x3c8] sm:$0xff]
    %v941 = vld [vmem:[%s8 + $0x3d0] sm:$0xff]
    %v942 = vld [vmem:[%s8 + $0x3d8] sm:$0xff]
    %v943 = vld [vmem:[%s8 + $0x3e0] sm:$0xff]
    %v944 = vld [vmem:[%s8 + $0x3e8] sm:$0xff]
    %v945 = vld [vmem:[%s8 + $0x3f0] sm:$0xff]
    %v946 = vld [vmem:[%s8 + $0x3f8] sm:$0xff]
    %v947 = vmul.f32 %v819, 0.999
    %v948 = vmul.f32 %v820, 0.999
    %v949 = vmul.f32 %v821, 0.999
    %v950 = vmul.f32 %v822, 0.999
    %v951 = vmul.f32 %v823, 0.999
    %v952 = vmul.f32 %v824, 0.999
    %v953 = vmul.f32 %v825, 0.999
    %v954 = vmul.f32 %v826, 0.999
    %v955 = vmul.f32 %v827, 0.999
    %v956 = vmul.f32 %v828, 0.999
    %v957 = vmul.f32 %v829, 0.999
    %v958 = vmul.f32 %v830, 0.999
    %v959 = vmul.f32 %v831, 0.999
    %v960 = vmul.f32 %v832, 0.999
    %v961 = vmul.f32 %v833, 0.999
    %v962 = vmul.f32 %v834, 0.999
    %v963 = vmul.f32 %v835, 0.999
    %v964 = vmul.f32 %v836, 0.999
    %v965 = vmul.f32 %v837, 0.999
    %v966 = vmul.f32 %v838, 0.999
    %v967 = vmul.f32 %v839, 0.999
    %v968 = vmul.f32 %v840, 0.999
    %v969 = vmul.f32 %v841, 0.999
    %v970 = vmul.f32 %v842, 0.999
    %v971 = vmul.f32 %v843, 0.999
    %v972 = vmul.f32 %v844, 0.999
    %v973 = vmul.f32 %v845, 0.999
    %v974 = vmul.f32 %v846, 0.999
    %v975 = vmul.f32 %v847, 0.999
    %v976 = vmul.f32 %v848, 0.999
    %v977 = vmul.f32 %v849, 0.999
    %v978 = vmul.f32 %v850, 0.999
    %v979 = vmul.f32 %v851, 0.999
    %v980 = vmul.f32 %v852, 0.999
    %v981 = vmul.f32 %v853, 0.999
    %v982 = vmul.f32 %v854, 0.999
    %v983 = vmul.f32 %v855, 0.999
    %v984 = vmul.f32 %v856, 0.999
    %v985 = vmul.f32 %v857, 0.999
    %v986 = vmul.f32 %v858, 0.999
    %v987 = vmul.f32 %v859, 0.999
    %v988 = vmul.f32 %v860, 0.999
    %v989 = vmul.f32 %v861, 0.999
    %v990 = vmul.f32 %v862, 0.999
    %v991 = vmul.f32 %v863, 0.999
    %v992 = vmul.f32 %v864, 0.999
    %v993 = vmul.f32 %v865, 0.999
    %v994 = vmul.f32 %v866, 0.999
    %v995 = vmul.f32 %v867, 0.999
    %v996 = vmul.f32 %v868, 0.999
    %v997 = vmul.f32 %v869, 0.999
    %v998 = vmul.f32 %v870, 0.999
    %v999 = vmul.f32 %v871, 0.999
    %v1000 = vmul.f32 %v872, 0.999
    %v1001 = vmul.f32 %v873, 0.999
    %v1002 = vmul.f32 %v874, 0.999
    %v1003 = vmul.f32 %v875, 0.999
    %v1004 = vmul.f32 %v876, 0.999
    %v1005 = vmul.f32 %v877, 0.999
    %v1006 = vmul.f32 %v878, 0.999
    %v1007 = vmul.f32 %v879, 0.999
    %v1008 = vmul.f32 %v880, 0.999
    %v1009 = vmul.f32 %v881, 0.999
    %v1010 = vmul.f32 %v882, 0.999
    %v1011 = vmul.f32 %v883, 0.999
    %v1012 = vmul.f32 %v884, 0.999
    %v1013 = vmul.f32 %v885, 0.999
    %v1014 = vmul.f32 %v886, 0.999
    %v1015 = vmul.f32 %v887, 0.999
    %v1016 = vmul.f32 %v888, 0.999
    %v1017 = vmul.f32 %v889, 0.999
    %v1018 = vmul.f32 %v890, 0.999
    %v1019 = vmul.f32 %v891, 0.999
    %v1020 = vmul.f32 %v892, 0.999
    %v1021 = vmul.f32 %v893, 0.999
    %v1022 = vmul.f32 %v894, 0.999
    %v1023 = vmul.f32 %v895, 0.999
    %v1024 = vmul.f32 %v896, 0.999
    %v1025 = vmul.f32 %v897, 0.999
    %v1026 = vmul.f32 %v898, 0.999
    %v1027 = vmul.f32 %v899, 0.999
    %v1028 = vmul.f32 %v900, 0.999
    %v1029 = vmul.f32 %v901, 0.999
    %v1030 = vmul.f32 %v902, 0.999
    %v1031 = vmul.f32 %v903, 0.999
    %v1032 = vmul.f32 %v904, 0.999
    %v1033 = vmul.f32 %v905, 0.999
    %v1034 = vmul.f32 %v906, 0.999
    %v1035 = vmul.f32 %v907, 0.999
    %v1036 = vmul.f32 %v908, 0.999
    %v1037 = vmul.f32 %v909, 0.999
    %v1038 = vmul.f32 %v910, 0.999
    %v1039 = vmul.f32 %v911, 0.999
    %v1040 = vmul.f32 %v912, 0.999
    %v1041 = vmul.f32 %v913, 0.999
    %v1042 = vmul.f32 %v914, 0.999
    %v1043 = vmul.f32 %v915, 0.999
    %v1044 = vmul.f32 %v916, 0.999
    %v1045 = vmul.f32 %v917, 0.999
    %v1046 = vmul.f32 %v918, 0.999
    %v1047 = vmul.f32 %v919, 0.999
    %v1048 = vmul.f32 %v920, 0.999
    %v1049 = vmul.f32 %v921, 0.999
    %v1050 = vmul.f32 %v922, 0.999
    %v1051 = vmul.f32 %v923, 0.999
    %v1052 = vmul.f32 %v924, 0.999
    %v1053 = vmul.f32 %v925, 0.999
    %v1054 = vmul.f32 %v926, 0.999
    %v1055 = vmul.f32 %v927, 0.999
    %v1056 = vmul.f32 %v928, 0.999
    %v1057 = vmul.f32 %v929, 0.999
    %v1058 = vmul.f32 %v930, 0.999
    %v1059 = vmul.f32 %v931, 0.999
    %v1060 = vmul.f32 %v932, 0.999
    %v1061 = vmul.f32 %v933, 0.999
    %v1062 = vmul.f32 %v934, 0.999
    %v1063 = vmul.f32 %v935, 0.999
    %v1064 = vmul.f32 %v936, 0.999
    %v1065 = vmul.f32 %v937, 0.999
    %v1066 = vmul.f32 %v938, 0.999
    %v1067 = vmul.f32 %v939, 0.999
    %v1068 = vmul.f32 %v940, 0.999
    %v1069 = vmul.f32 %v941, 0.999
    %v1070 = vmul.f32 %v942, 0.999
    %v1071 = vmul.f32 %v943, 0.999
    %v1072 = vmul.f32 %v944, 0.999
    %v1073 = vmul.f32 %v945, 0.999
    %v1074 = vmul.f32 %v946, 0.999
    %v1075 = vmul.f32 %v691, 0.001
    %v1076 = vmul.f32 %v692, 0.001
    %v1077 = vmul.f32 %v693, 0.001
    %v1078 = vmul.f32 %v694, 0.001
    %v1079 = vmul.f32 %v695, 0.001
    %v1080 = vmul.f32 %v696, 0.001
    %v1081 = vmul.f32 %v697, 0.001
    %v1082 = vmul.f32 %v698, 0.001
    %v1083 = vmul.f32 %v699, 0.001
    %v1084 = vmul.f32 %v700, 0.001
    %v1085 = vmul.f32 %v701, 0.001
    %v1086 = vmul.f32 %v702, 0.001
    %v1087 = vmul.f32 %v703, 0.001
    %v1088 = vmul.f32 %v704, 0.001
    %v1089 = vmul.f32 %v705, 0.001
    %v1090 = vmul.f32 %v706, 0.001
    %v1091 = vmul.f32 %v707, 0.001
    %v1092 = vmul.f32 %v708, 0.001
    %v1093 = vmul.f32 %v709, 0.001
    %v1094 = vmul.f32 %v710, 0.001
    %v1095 = vmul.f32 %v711, 0.001
    %v1096 = vmul.f32 %v712, 0.001
    %v1097 = vmul.f32 %v713, 0.001
    %v1098 = vmul.f32 %v714, 0.001
    %v1099 = vmul.f32 %v715, 0.001
    %v1100 = vmul.f32 %v716, 0.001
    %v1101 = vmul.f32 %v717, 0.001
    %v1102 = vmul.f32 %v718, 0.001
    %v1103 = vmul.f32 %v719, 0.001
    %v1104 = vmul.f32 %v720, 0.001
    %v1105 = vmul.f32 %v721, 0.001
    %v1106 = vmul.f32 %v722, 0.001
    %v1107 = vmul.f32 %v723, 0.001
    %v1108 = vmul.f32 %v724, 0.001
    %v1109 = vmul.f32 %v725, 0.001
    %v1110 = vmul.f32 %v726, 0.001
    %v1111 = vmul.f32 %v727, 0.001
    %v1112 = vmul.f32 %v728, 0.001
    %v1113 = vmul.f32 %v729, 0.001
    %v1114 = vmul.f32 %v730, 0.001
    %v1115 = vmul.f32 %v731, 0.001
    %v1116 = vmul.f32 %v732, 0.001
    %v1117 = vmul.f32 %v733, 0.001
    %v1118 = vmul.f32 %v734, 0.001
    %v1119 = vmul.f32 %v735, 0.001
    %v1120 = vmul.f32 %v736, 0.001
    %v1121 = vmul.f32 %v737, 0.001
    %v1122 = vmul.f32 %v738, 0.001
    %v1123 = vmul.f32 %v739, 0.001
    %v1124 = vmul.f32 %v740, 0.001
    %v1125 = vmul.f32 %v741, 0.001
    %v1126 = vmul.f32 %v742, 0.001
    %v1127 = vmul.f32 %v743, 0.001
    %v1128 = vmul.f32 %v744, 0.001
    %v1129 = vmul.f32 %v745, 0.001
    %v1130 = vmul.f32 %v746, 0.001
    %v1131 = vmul.f32 %v747, 0.001
    %v1132 = vmul.f32 %v748, 0.001
    %v1133 = vmul.f32 %v749, 0.001
    %v1134 = vmul.f32 %v750, 0.001
    %v1135 = vmul.f32 %v751, 0.001
    %v1136 = vmul.f32 %v752, 0.001
    %v1137 = vmul.f32 %v753, 0.001
    %v1138 = vmul.f32 %v754, 0.001
    %v1139 = vmul.f32 %v755, 0.001
    %v1140 = vmul.f32 %v756, 0.001
    %v1141 = vmul.f32 %v757, 0.001
    %v1142 = vmul.f32 %v758, 0.001
    %v1143 = vmul.f32 %v759, 0.001
    %v1144 = vmul.f32 %v760, 0.001
    %v1145 = vmul.f32 %v761, 0.001
    %v1146 = vmul.f32 %v762, 0.001
    %v1147 = vmul.f32 %v763, 0.001
    %v1148 = vmul.f32 %v764, 0.001
    %v1149 = vmul.f32 %v765, 0.001
    %v1150 = vmul.f32 %v766, 0.001
    %v1151 = vmul.f32 %v767, 0.001
    %v1152 = vmul.f32 %v768, 0.001
    %v1153 = vmul.f32 %v769, 0.001
    %v1154 = vmul.f32 %v770, 0.001
    %v1155 = vmul.f32 %v771, 0.001
    %v1156 = vmul.f32 %v772, 0.001
    %v1157 = vmul.f32 %v773, 0.001
    %v1158 = vmul.f32 %v774, 0.001
    %v1159 = vmul.f32 %v775, 0.001
    %v1160 = vmul.f32 %v776, 0.001
    %v1161 = vmul.f32 %v777, 0.001
    %v1162 = vmul.f32 %v778, 0.001
    %v1163 = vmul.f32 %v779, 0.001
    %v1164 = vmul.f32 %v780, 0.001
    %v1165 = vmul.f32 %v781, 0.001
    %v1166 = vmul.f32 %v782, 0.001
    %v1167 = vmul.f32 %v783, 0.001
    %v1168 = vmul.f32 %v784, 0.001
    %v1169 = vmul.f32 %v785, 0.001
    %v1170 = vmul.f32 %v786, 0.001
    %v1171 = vmul.f32 %v787, 0.001
    %v1172 = vmul.f32 %v788, 0.001
    %v1173 = vmul.f32 %v789, 0.001
    %v1174 = vmul.f32 %v790, 0.001
    %v1175 = vmul.f32 %v791, 0.001
    %v1176 = vmul.f32 %v792, 0.001
    %v1177 = vmul.f32 %v793, 0.001
    %v1178 = vmul.f32 %v794, 0.001
    %v1179 = vmul.f32 %v795, 0.001
    %v1180 = vmul.f32 %v796, 0.001
    %v1181 = vmul.f32 %v797, 0.001
    %v1182 = vmul.f32 %v798, 0.001
    %v1183 = vmul.f32 %v799, 0.001
    %v1184 = vmul.f32 %v800, 0.001
    %v1185 = vmul.f32 %v801, 0.001
    %v1186 = vmul.f32 %v802, 0.001
    %v1187 = vmul.f32 %v803, 0.001
    %v1188 = vmul.f32 %v804, 0.001
    %v1189 = vmul.f32 %v805, 0.001
    %v1190 = vmul.f32 %v806, 0.001
    %v1191 = vmul.f32 %v807, 0.001
    %v1192 = vmul.f32 %v808, 0.001
    %v1193 = vmul.f32 %v809, 0.001
    %v1194 = vmul.f32 %v810, 0.001
    %v1195 = vmul.f32 %v811, 0.001
    %v1196 = vmul.f32 %v812, 0.001
    %v1197 = vmul.f32 %v813, 0.001
    %v1198 = vmul.f32 %v814, 0.001
    %v1199 = vmul.f32 %v815, 0.001
    %v1200 = vmul.f32 %v816, 0.001
    %v1201 = vmul.f32 %v817, 0.001
    %v1202 = vmul.f32 %v818, 0.001
    %v1203 = vadd.f32 %v947, %v1075
    %v1204 = vadd.f32 %v948, %v1076
    %v1205 = vadd.f32 %v949, %v1077
    %v1206 = vadd.f32 %v950, %v1078
    %v1207 = vadd.f32 %v951, %v1079
    %v1208 = vadd.f32 %v952, %v1080
    %v1209 = vadd.f32 %v953, %v1081
    %v1210 = vadd.f32 %v954, %v1082
    %v1211 = vadd.f32 %v955, %v1083
    %v1212 = vadd.f32 %v956, %v1084
    %v1213 = vadd.f32 %v957, %v1085
    %v1214 = vadd.f32 %v958, %v1086
    %v1215 = vadd.f32 %v959, %v1087
    %v1216 = vadd.f32 %v960, %v1088
    %v1217 = vadd.f32 %v961, %v1089
    %v1218 = vadd.f32 %v962, %v1090
    %v1219 = vadd.f32 %v963, %v1091
    %v1220 = vadd.f32 %v964, %v1092
    %v1221 = vadd.f32 %v965, %v1093
    %v1222 = vadd.f32 %v966, %v1094
    %v1223 = vadd.f32 %v967, %v1095
    %v1224 = vadd.f32 %v968, %v1096
    %v1225 = vadd.f32 %v969, %v1097
    %v1226 = vadd.f32 %v970, %v1098
    %v1227 = vadd.f32 %v971, %v1099
    %v1228 = vadd.f32 %v972, %v1100
    %v1229 = vadd.f32 %v973, %v1101
    %v1230 = vadd.f32 %v974, %v1102
    %v1231 = vadd.f32 %v975, %v1103
    %v1232 = vadd.f32 %v976, %v1104
    %v1233 = vadd.f32 %v977, %v1105
    %v1234 = vadd.f32 %v978, %v1106
    %v1235 = vadd.f32 %v979, %v1107
    %v1236 = vadd.f32 %v980, %v1108
    %v1237 = vadd.f32 %v981, %v1109
    %v1238 = vadd.f32 %v982, %v1110
    %v1239 = vadd.f32 %v983, %v1111
    %v1240 = vadd.f32 %v984, %v1112
    %v1241 = vadd.f32 %v985, %v1113
    %v1242 = vadd.f32 %v986, %v1114
    %v1243 = vadd.f32 %v987, %v1115
    %v1244 = vadd.f32 %v988, %v1116
    %v1245 = vadd.f32 %v989, %v1117
    %v1246 = vadd.f32 %v990, %v1118
    %v1247 = vadd.f32 %v991, %v1119
    %v1248 = vadd.f32 %v992, %v1120
    %v1249 = vadd.f32 %v993, %v1121
    %v1250 = vadd.f32 %v994, %v1122
    %v1251 = vadd.f32 %v995, %v1123
    %v1252 = vadd.f32 %v996, %v1124
    %v1253 = vadd.f32 %v997, %v1125
    %v1254 = vadd.f32 %v998, %v1126
    %v1255 = vadd.f32 %v999, %v1127
    %v1256 = vadd.f32 %v1000, %v1128
    %v1257 = vadd.f32 %v1001, %v1129
    %v1258 = vadd.f32 %v1002, %v1130
    %v1259 = vadd.f32 %v1003, %v1131
    %v1260 = vadd.f32 %v1004, %v1132
    %v1261 = vadd.f32 %v1005, %v1133
    %v1262 = vadd.f32 %v1006, %v1134
    %v1263 = vadd.f32 %v1007, %v1135
    %v1264 = vadd.f32 %v1008, %v1136
    %v1265 = vadd.f32 %v1009, %v1137
    %v1266 = vadd.f32 %v1010, %v1138
    %v1267 = vadd.f32 %v1011, %v1139
    %v1268 = vadd.f32 %v1012, %v1140
    %v1269 = vadd.f32 %v1013, %v1141
    %v1270 = vadd.f32 %v1014, %v1142
    %v1271 = vadd.f32 %v1015, %v1143
    %v1272 = vadd.f32 %v1016, %v1144
    %v1273 = vadd.f32 %v1017, %v1145
    %v1274 = vadd.f32 %v1018, %v1146
    %v1275 = vadd.f32 %v1019, %v1147
    %v1276 = vadd.f32 %v1020, %v1148
    %v1277 = vadd.f32 %v1021, %v1149
    %v1278 = vadd.f32 %v1022, %v1150
    %v1279 = vadd.f32 %v1023, %v1151
    %v1280 = vadd.f32 %v1024, %v1152
    %v1281 = vadd.f32 %v1025, %v1153
    %v1282 = vadd.f32 %v1026, %v1154
    %v1283 = vadd.f32 %v1027, %v1155
    %v1284 = vadd.f32 %v1028, %v1156
    %v1285 = vadd.f32 %v1029, %v1157
    %v1286 = vadd.f32 %v1030, %v1158
    %v1287 = vadd.f32 %v1031, %v1159
    %v1288 = vadd.f32 %v1032, %v1160
    %v1289 = vadd.f32 %v1033, %v1161
    %v1290 = vadd.f32 %v1034, %v1162
    %v1291 = vadd.f32 %v1035, %v1163
    %v1292 = vadd.f32 %v1036, %v1164
    %v1293 = vadd.f32 %v1037, %v1165
    %v1294 = vadd.f32 %v1038, %v1166
    %v1295 = vadd.f32 %v1039, %v1167
    %v1296 = vadd.f32 %v1040, %v1168
    %v1297 = vadd.f32 %v1041, %v1169
    %v1298 = vadd.f32 %v1042, %v1170
    %v1299 = vadd.f32 %v1043, %v1171
    %v1300 = vadd.f32 %v1044, %v1172
    %v1301 = vadd.f32 %v1045, %v1173
    %v1302 = vadd.f32 %v1046, %v1174
    %v1303 = vadd.f32 %v1047, %v1175
    %v1304 = vadd.f32 %v1048, %v1176
    %v1305 = vadd.f32 %v1049, %v1177
    %v1306 = vadd.f32 %v1050, %v1178
    %v1307 = vadd.f32 %v1051, %v1179
    %v1308 = vadd.f32 %v1052, %v1180
    %v1309 = vadd.f32 %v1053, %v1181
    %v1310 = vadd.f32 %v1054, %v1182
    %v1311 = vadd.f32 %v1055, %v1183
    %v1312 = vadd.f32 %v1056, %v1184
    %v1313 = vadd.f32 %v1057, %v1185
    %v1314 = vadd.f32 %v1058, %v1186
    %v1315 = vadd.f32 %v1059, %v1187
    %v1316 = vadd.f32 %v1060, %v1188
    %v1317 = vadd.f32 %v1061, %v1189
    %v1318 = vadd.f32 %v1062, %v1190
    %v1319 = vadd.f32 %v1063, %v1191
    %v1320 = vadd.f32 %v1064, %v1192
    %v1321 = vadd.f32 %v1065, %v1193
    %v1322 = vadd.f32 %v1066, %v1194
    %v1323 = vadd.f32 %v1067, %v1195
    %v1324 = vadd.f32 %v1068, %v1196
    %v1325 = vadd.f32 %v1069, %v1197
    %v1326 = vadd.f32 %v1070, %v1198
    %v1327 = vadd.f32 %v1071, %v1199
    %v1328 = vadd.f32 %v1072, %v1200
    %v1329 = vadd.f32 %v1073, %v1201
    %v1330 = vadd.f32 %v1074, %v1202
    %1331 = vst [vmem:[%s15] sm:$0xff] %v1203
    %1332 = vst [vmem:[%s15 + $0x8] sm:$0xff] %v1204
    %1333 = vst [vmem:[%s15 + $0x10] sm:$0xff] %v1205
    %1334 = vst [vmem:[%s15 + $0x18] sm:$0xff] %v1206
    %1335 = vst [vmem:[%s15 + $0x20] sm:$0xff] %v1207
    %1336 = vst [vmem:[%s15 + $0x28] sm:$0xff] %v1208
    %1337 = vst [vmem:[%s15 + $0x30] sm:$0xff] %v1209
    %1338 = vst [vmem:[%s15 + $0x38] sm:$0xff] %v1210
    %1339 = vst [vmem:[%s15 + $0x40] sm:$0xff] %v1211
    %1340 = vst [vmem:[%s15 + $0x48] sm:$0xff] %v1212
    %1341 = vst [vmem:[%s15 + $0x50] sm:$0xff] %v1213
    %1342 = vst [vmem:[%s15 + $0x58] sm:$0xff] %v1214
    %1343 = vst [vmem:[%s15 + $0x60] sm:$0xff] %v1215
    %1344 = vst [vmem:[%s15 + $0x68] sm:$0xff] %v1216
    %1345 = vst [vmem:[%s15 + $0x70] sm:$0xff] %v1217
    %1346 = vst [vmem:[%s15 + $0x78] sm:$0xff] %v1218
    %1347 = vst [vmem:[%s15 + $0x80] sm:$0xff] %v1219
    %1348 = vst [vmem:[%s15 + $0x88] sm:$0xff] %v1220
    %1349 = vst [vmem:[%s15 + $0x90] sm:$0xff] %v1221
    %1350 = vst [vmem:[%s15 + $0x98] sm:$0xff] %v1222
    %1351 = vst [vmem:[%s15 + $0xa0] sm:$0xff] %v1223
    %1352 = vst [vmem:[%s15 + $0xa8] sm:$0xff] %v1224
    %1353 = vst [vmem:[%s15 + $0xb0] sm:$0xff] %v1225
    %1354 = vst [vmem:[%s15 + $0xb8] sm:$0xff] %v1226
    %1355 = vst [vmem:[%s15 + $0xc0] sm:$0xff] %v1227
    %1356 = vst [vmem:[%s15 + $0xc8] sm:$0xff] %v1228
    %1357 = vst [vmem:[%s15 + $0xd0] sm:$0xff] %v1229
    %1358 = vst [vmem:[%s15 + $0xd8] sm:$0xff] %v1230
    %1359 = vst [vmem:[%s15 + $0xe0] sm:$0xff] %v1231
    %1360 = vst [vmem:[%s15 + $0xe8] sm:$0xff] %v1232
    %1361 = vst [vmem:[%s15 + $0xf0] sm:$0xff] %v1233
    %1362 = vst [vmem:[%s15 + $0xf8] sm:$0xff] %v1234
    %1363 = vst [vmem:[%s15 + $0x100] sm:$0xff] %v1235
    %1364 = vst [vmem:[%s15 + $0x108] sm:$0xff] %v1236
    %1365 = vst [vmem:[%s15 + $0x110] sm:$0xff] %v1237
    %1366 = vst [vmem:[%s15 + $0x118] sm:$0xff] %v1238
    %1367 = vst [vmem:[%s15 + $0x120] sm:$0xff] %v1239
    %1368 = vst [vmem:[%s15 + $0x128] sm:$0xff] %v1240
    %1369 = vst [vmem:[%s15 + $0x130] sm:$0xff] %v1241
    %1370 = vst [vmem:[%s15 + $0x138] sm:$0xff] %v1242
    %1371 = vst [vmem:[%s15 + $0x140] sm:$0xff] %v1243
    %1372 = vst [vmem:[%s15 + $0x148] sm:$0xff] %v1244
    %1373 = vst [vmem:[%s15 + $0x150] sm:$0xff] %v1245
    %1374 = vst [vmem:[%s15 + $0x158] sm:$0xff] %v1246
    %1375 = vst [vmem:[%s15 + $0x160] sm:$0xff] %v1247
    %1376 = vst [vmem:[%s15 + $0x168] sm:$0xff] %v1248
    %1377 = vst [vmem:[%s15 + $0x170] sm:$0xff] %v1249
    %1378 = vst [vmem:[%s15 + $0x178] sm:$0xff] %v1250
    %1379 = vst [vmem:[%s15 + $0x180] sm:$0xff] %v1251
    %1380 = vst [vmem:[%s15 + $0x188] sm:$0xff] %v1252
    %1381 = vst [vmem:[%s15 + $0x190] sm:$0xff] %v1253
    %1382 = vst [vmem:[%s15 + $0x198] sm:$0xff] %v1254
    %1383 = vst [vmem:[%s15 + $0x1a0] sm:$0xff] %v1255
    %1384 = vst [vmem:[%s15 + $0x1a8] sm:$0xff] %v1256
    %1385 = vst [vmem:[%s15 + $0x1b0] sm:$0xff] %v1257
    %1386 = vst [vmem:[%s15 + $0x1b8] sm:$0xff] %v1258
    %1387 = vst [vmem:[%s15 + $0x1c0] sm:$0xff] %v1259
    %1388 = vst [vmem:[%s15 + $0x1c8] sm:$0xff] %v1260
    %1389 = vst [vmem:[%s15 + $0x1d0] sm:$0xff] %v1261
    %1390 = vst [vmem:[%s15 + $0x1d8] sm:$0xff] %v1262
    %1391 = vst [vmem:[%s15 + $0x1e0] sm:$0xff] %v1263
    %1392 = vst [vmem:[%s15 + $0x1e8] sm:$0xff] %v1264
    %1393 = vst [vmem:[%s15 + $0x1f0] sm:$0xff] %v1265
    %1394 = vst [vmem:[%s15 + $0x1f8] sm:$0xff] %v1266
    %1395 = vst [vmem:[%s15 + $0x200] sm:$0xff] %v1267
    %1396 = vst [vmem:[%s15 + $0x208] sm:$0xff] %v1268
    %1397 = vst [vmem:[%s15 + $0x210] sm:$0xff] %v1269
    %1398 = vst [vmem:[%s15 + $0x218] sm:$0xff] %v1270
    %1399 = vst [vmem:[%s15 + $0x220] sm:$0xff] %v1271
    %1400 = vst [vmem:[%s15 + $0x228] sm:$0xff] %v1272
    %1401 = vst [vmem:[%s15 + $0x230] sm:$0xff] %v1273
    %1402 = vst [vmem:[%s15 + $0x238] sm:$0xff] %v1274
    %1403 = vst [vmem:[%s15 + $0x240] sm:$0xff] %v1275
    %1404 = vst [vmem:[%s15 + $0x248] sm:$0xff] %v1276
    %1405 = vst [vmem:[%s15 + $0x250] sm:$0xff] %v1277
    %1406 = vst [vmem:[%s15 + $0x258] sm:$0xff] %v1278
    %1407 = vst [vmem:[%s15 + $0x260] sm:$0xff] %v1279
    %1408 = vst [vmem:[%s15 + $0x268] sm:$0xff] %v1280
    %1409 = vst [vmem:[%s15 + $0x270] sm:$0xff] %v1281
    %1410 = vst [vmem:[%s15 + $0x278] sm:$0xff] %v1282
    %1411 = vst [vmem:[%s15 + $0x280] sm:$0xff] %v1283
    %1412 = vst [vmem:[%s15 + $0x288] sm:$0xff] %v1284
    %1413 = vst [vmem:[%s15 + $0x290] sm:$0xff] %v1285
    %1414 = vst [vmem:[%s15 + $0x298] sm:$0xff] %v1286
    %1415 = vst [vmem:[%s15 + $0x2a0] sm:$0xff] %v1287
    %1416 = vst [vmem:[%s15 + $0x2a8] sm:$0xff] %v1288
    %1417 = vst [vmem:[%s15 + $0x2b0] sm:$0xff] %v1289
    %1418 = vst [vmem:[%s15 + $0x2b8] sm:$0xff] %v1290
    %1419 = vst [vmem:[%s15 + $0x2c0] sm:$0xff] %v1291
    %1420 = vst [vmem:[%s15 + $0x2c8] sm:$0xff] %v1292
    %1421 = vst [vmem:[%s15 + $0x2d0] sm:$0xff] %v1293
    %1422 = vst [vmem:[%s15 + $0x2d8] sm:$0xff] %v1294
    %1423 = vst [vmem:[%s15 + $0x2e0] sm:$0xff] %v1295
    %1424 = vst [vmem:[%s15 + $0x2e8] sm:$0xff] %v1296
    %1425 = vst [vmem:[%s15 + $0x2f0] sm:$0xff] %v1297
    %1426 = vst [vmem:[%s15 + $0x2f8] sm:$0xff] %v1298
    %1427 = vst [vmem:[%s15 + $0x300] sm:$0xff] %v1299
    %1428 = vst [vmem:[%s15 + $0x308] sm:$0xff] %v1300
    %1429 = vst [vmem:[%s15 + $0x310] sm:$0xff] %v1301
    %1430 = vst [vmem:[%s15 + $0x318] sm:$0xff] %v1302
    %1431 = vst [vmem:[%s15 + $0x320] sm:$0xff] %v1303
    %1432 = vst [vmem:[%s15 + $0x328] sm:$0xff] %v1304
    %1433 = vst [vmem:[%s15 + $0x330] sm:$0xff] %v1305
    %1434 = vst [vmem:[%s15 + $0x338] sm:$0xff] %v1306
    %1435 = vst [vmem:[%s15 + $0x340] sm:$0xff] %v1307
    %1436 = vst [vmem:[%s15 + $0x348] sm:$0xff] %v1308
    %1437 = vst [vmem:[%s15 + $0x350] sm:$0xff] %v1309
    %1438 = vst [vmem:[%s15 + $0x358] sm:$0xff] %v1310
    %1439 = vst [vmem:[%s15 + $0x360] sm:$0xff] %v1311
    %1440 = vst [vmem:[%s15 + $0x368] sm:$0xff] %v1312
    %1441 = vst [vmem:[%s15 + $0x370] sm:$0xff] %v1313
    %1442 = vst [vmem:[%s15 + $0x378] sm:$0xff] %v1314
    %1443 = vst [vmem:[%s15 + $0x380] sm:$0xff] %v1315
    %1444 = vst [vmem:[%s15 + $0x388] sm:$0xff] %v1316
    %1445 = vst [vmem:[%s15 + $0x390] sm:$0xff] %v1317
    %1446 = vst [vmem:[%s15 + $0x398] sm:$0xff] %v1318
    %1447 = vst [vmem:[%s15 + $0x3a0] sm:$0xff] %v1319
    %1448 = vst [vmem:[%s15 + $0x3a8] sm:$0xff] %v1320
    %1449 = vst [vmem:[%s15 + $0x3b0] sm:$0xff] %v1321
    %1450 = vst [vmem:[%s15 + $0x3b8] sm:$0xff] %v1322
    %1451 = vst [vmem:[%s15 + $0x3c0] sm:$0xff] %v1323
    %1452 = vst [vmem:[%s15 + $0x3c8] sm:$0xff] %v1324
    %1453 = vst [vmem:[%s15 + $0x3d0] sm:$0xff] %v1325
    %1454 = vst [vmem:[%s15 + $0x3d8] sm:$0xff] %v1326
    %1455 = vst [vmem:[%s15 + $0x3e0] sm:$0xff] %v1327
    %1456 = vst [vmem:[%s15 + $0x3e8] sm:$0xff] %v1328
    %1457 = vst [vmem:[%s15 + $0x3f0] sm:$0xff] %v1329
    %1458 = vst [vmem:[%s15 + $0x3f8] sm:$0xff] %v1330
    %v1459 = vld [vmem:[%s5] sm:$0xff]
    %v1460 = vld [vmem:[%s5 + $0x8] sm:$0xff]
    %v1461 = vld [vmem:[%s5 + $0x10] sm:$0xff]
    %v1462 = vld [vmem:[%s5 + $0x18] sm:$0xff]
    %v1463 = vld [vmem:[%s5 + $0x20] sm:$0xff]
    %v1464 = vld [vmem:[%s5 + $0x28] sm:$0xff]
    %v1465 = vld [vmem:[%s5 + $0x30] sm:$0xff]
    %v1466 = vld [vmem:[%s5 + $0x38] sm:$0xff]
    %v1467 = vld [vmem:[%s5 + $0x40] sm:$0xff]
    %v1468 = vld [vmem:[%s5 + $0x48] sm:$0xff]
    %v1469 = vld [vmem:[%s5 + $0x50] sm:$0xff]
    %v1470 = vld [vmem:[%s5 + $0x58] sm:$0xff]
    %v1471 = vld [vmem:[%s5 + $0x60] sm:$0xff]
    %v1472 = vld [vmem:[%s5 + $0x68] sm:$0xff]
    %v1473 = vld [vmem:[%s5 + $0x70] sm:$0xff]
    %v1474 = vld [vmem:[%s5 + $0x78] sm:$0xff]
    %v1475 = vld [vmem:[%s9] sm:$0xff]
    %v1476 = vld [vmem:[%s9 + $0x8] sm:$0xff]
    %v1477 = vld [vmem:[%s9 + $0x10] sm:$0xff]
    %v1478 = vld [vmem:[%s9 + $0x18] sm:$0xff]
    %v1479 = vld [vmem:[%s9 + $0x20] sm:$0xff]
    %v1480 = vld [vmem:[%s9 + $0x28] sm:$0xff]
    %v1481 = vld [vmem:[%s9 + $0x30] sm:$0xff]
    %v1482 = vld [vmem:[%s9 + $0x38] sm:$0xff]
    %v1483 = vld [vmem:[%s9 + $0x40] sm:$0xff]
    %v1484 = vld [vmem:[%s9 + $0x48] sm:$0xff]
    %v1485 = vld [vmem:[%s9 + $0x50] sm:$0xff]
    %v1486 = vld [vmem:[%s9 + $0x58] sm:$0xff]
    %v1487 = vld [vmem:[%s9 + $0x60] sm:$0xff]
    %v1488 = vld [vmem:[%s9 + $0x68] sm:$0xff]
    %v1489 = vld [vmem:[%s9 + $0x70] sm:$0xff]
    %v1490 = vld [vmem:[%s9 + $0x78] sm:$0xff]
    %v1491 = vmul.f32 %v1475, 0.999
    %v1492 = vmul.f32 %v1476, 0.999
    %v1493 = vmul.f32 %v1477, 0.999
    %v1494 = vmul.f32 %v1478, 0.999
    %v1495 = vmul.f32 %v1479, 0.999
    %v1496 = vmul.f32 %v1480, 0.999
    %v1497 = vmul.f32 %v1481, 0.999
    %v1498 = vmul.f32 %v1482, 0.999
    %v1499 = vmul.f32 %v1483, 0.999
    %v1500 = vmul.f32 %v1484, 0.999
    %v1501 = vmul.f32 %v1485, 0.999
    %v1502 = vmul.f32 %v1486, 0.999
    %v1503 = vmul.f32 %v1487, 0.999
    %v1504 = vmul.f32 %v1488, 0.999
    %v1505 = vmul.f32 %v1489, 0.999
    %v1506 = vmul.f32 %v1490, 0.999
    %v1507 = vmul.f32 %v1459, 0.001
    %v1508 = vmul.f32 %v1460, 0.001
    %v1509 = vmul.f32 %v1461, 0.001
    %v1510 = vmul.f32 %v1462, 0.001
    %v1511 = vmul.f32 %v1463, 0.001
    %v1512 = vmul.f32 %v1464, 0.001
    %v1513 = vmul.f32 %v1465, 0.001
    %v1514 = vmul.f32 %v1466, 0.001
    %v1515 = vmul.f32 %v1467, 0.001
    %v1516 = vmul.f32 %v1468, 0.001
    %v1517 = vmul.f32 %v1469, 0.001
    %v1518 = vmul.f32 %v1470, 0.001
    %v1519 = vmul.f32 %v1471, 0.001
    %v1520 = vmul.f32 %v1472, 0.001
    %v1521 = vmul.f32 %v1473, 0.001
    %v1522 = vmul.f32 %v1474, 0.001
    %v1523 = vadd.f32 %v1491, %v1507
    %v1524 = vadd.f32 %v1492, %v1508
    %v1525 = vadd.f32 %v1493, %v1509
    %v1526 = vadd.f32 %v1494, %v1510
    %v1527 = vadd.f32 %v1495, %v1511
    %v1528 = vadd.f32 %v1496, %v1512
    %v1529 = vadd.f32 %v1497, %v1513
    %v1530 = vadd.f32 %v1498, %v1514
    %v1531 = vadd.f32 %v1499, %v1515
    %v1532 = vadd.f32 %v1500, %v1516
    %v1533 = vadd.f32 %v1501, %v1517
    %v1534 = vadd.f32 %v1502, %v1518
    %v1535 = vadd.f32 %v1503, %v1519
    %v1536 = vadd.f32 %v1504, %v1520
    %v1537 = vadd.f32 %v1505, %v1521
    %v1538 = vadd.f32 %v1506, %v1522
    %1539 = vst [vmem:[%s16] sm:$0xff] %v1523
    %1540 = vst [vmem:[%s16 + $0x8] sm:$0xff] %v1524
    %1541 = vst [vmem:[%s16 + $0x10] sm:$0xff] %v1525
    %1542 = vst [vmem:[%s16 + $0x18] sm:$0xff] %v1526
    %1543 = vst [vmem:[%s16 + $0x20] sm:$0xff] %v1527
    %1544 = vst [vmem:[%s16 + $0x28] sm:$0xff] %v1528
    %1545 = vst [vmem:[%s16 + $0x30] sm:$0xff] %v1529
    %1546 = vst [vmem:[%s16 + $0x38] sm:$0xff] %v1530
    %1547 = vst [vmem:[%s16 + $0x40] sm:$0xff] %v1531
    %1548 = vst [vmem:[%s16 + $0x48] sm:$0xff] %v1532
    %1549 = vst [vmem:[%s16 + $0x50] sm:$0xff] %v1533
    %1550 = vst [vmem:[%s16 + $0x58] sm:$0xff] %v1534
    %1551 = vst [vmem:[%s16 + $0x60] sm:$0xff] %v1535
    %1552 = vst [vmem:[%s16 + $0x68] sm:$0xff] %v1536
    %1553 = vst [vmem:[%s16 + $0x70] sm:$0xff] %v1537
    %1554 = vst [vmem:[%s16 + $0x78] sm:$0xff] %v1538
    %v1555 = vld [vmem:[%s6] sm:$0xff]
    %v1556 = vld [vmem:[%s6 + $0x8] sm:$0xff]
    %v1557 = vld [vmem:[%s6 + $0x10] sm:$0xff]
    %v1558 = vld [vmem:[%s6 + $0x18] sm:$0xff]
    %v1559 = vld [vmem:[%s6 + $0x20] sm:$0xff]
    %v1560 = vld [vmem:[%s6 + $0x28] sm:$0xff]
    %v1561 = vld [vmem:[%s6 + $0x30] sm:$0xff]
    %v1562 = vld [vmem:[%s6 + $0x38] sm:$0xff]
    %v1563 = vld [vmem:[%s6 + $0x40] sm:$0xff]
    %v1564 = vld [vmem:[%s6 + $0x48] sm:$0xff]
    %v1565 = vld [vmem:[%s6 + $0x50] sm:$0xff]
    %v1566 = vld [vmem:[%s6 + $0x58] sm:$0xff]
    %v1567 = vld [vmem:[%s6 + $0x60] sm:$0xff]
    %v1568 = vld [vmem:[%s6 + $0x68] sm:$0xff]
    %v1569 = vld [vmem:[%s6 + $0x70] sm:$0xff]
    %v1570 = vld [vmem:[%s6 + $0x78] sm:$0xff]
    %v1571 = vld [vmem:[%s10] sm:$0xff]
    %v1572 = vld [vmem:[%s10 + $0x8] sm:$0xff]
    %v1573 = vld [vmem:[%s10 + $0x10] sm:$0xff]
    %v1574 = vld [vmem:[%s10 + $0x18] sm:$0xff]
    %v1575 = vld [vmem:[%s10 + $0x20] sm:$0xff]
    %v1576 = vld [vmem:[%s10 + $0x28] sm:$0xff]
    %v1577 = vld [vmem:[%s10 + $0x30] sm:$0xff]
    %v1578 = vld [vmem:[%s10 + $0x38] sm:$0xff]
    %v1579 = vld [vmem:[%s10 + $0x40] sm:$0xff]
    %v1580 = vld [vmem:[%s10 + $0x48] sm:$0xff]
    %v1581 = vld [vmem:[%s10 + $0x50] sm:$0xff]
    %v1582 = vld [vmem:[%s10 + $0x58] sm:$0xff]
    %v1583 = vld [vmem:[%s10 + $0x60] sm:$0xff]
    %v1584 = vld [vmem:[%s10 + $0x68] sm:$0xff]
    %v1585 = vld [vmem:[%s10 + $0x70] sm:$0xff]
    %v1586 = vld [vmem:[%s10 + $0x78] sm:$0xff]
    %v1587 = vmul.f32 %v1571, 0.999
    %v1588 = vmul.f32 %v1572, 0.999
    %v1589 = vmul.f32 %v1573, 0.999
    %v1590 = vmul.f32 %v1574, 0.999
    %v1591 = vmul.f32 %v1575, 0.999
    %v1592 = vmul.f32 %v1576, 0.999
    %v1593 = vmul.f32 %v1577, 0.999
    %v1594 = vmul.f32 %v1578, 0.999
    %v1595 = vmul.f32 %v1579, 0.999
    %v1596 = vmul.f32 %v1580, 0.999
    %v1597 = vmul.f32 %v1581, 0.999
    %v1598 = vmul.f32 %v1582, 0.999
    %v1599 = vmul.f32 %v1583, 0.999
    %v1600 = vmul.f32 %v1584, 0.999
    %v1601 = vmul.f32 %v1585, 0.999
    %v1602 = vmul.f32 %v1586, 0.999
    %v1603 = vmul.f32 %v1555, 0.001
    %v1604 = vmul.f32 %v1556, 0.001
    %v1605 = vmul.f32 %v1557, 0.001
    %v1606 = vmul.f32 %v1558, 0.001
    %v1607 = vmul.f32 %v1559, 0.001
    %v1608 = vmul.f32 %v1560, 0.001
    %v1609 = vmul.f32 %v1561, 0.001
    %v1610 = vmul.f32 %v1562, 0.001
    %v1611 = vmul.f32 %v1563, 0.001
    %v1612 = vmul.f32 %v1564, 0.001
    %v1613 = vmul.f32 %v1565, 0.001
    %v1614 = vmul.f32 %v1566, 0.001
    %v1615 = vmul.f32 %v1567, 0.001
    %v1616 = vmul.f32 %v1568, 0.001
    %v1617 = vmul.f32 %v1569, 0.001
    %v1618 = vmul.f32 %v1570, 0.001
    %v1619 = vadd.f32 %v1587, %v1603
    %v1620 = vadd.f32 %v1588, %v1604
    %v1621 = vadd.f32 %v1589, %v1605
    %v1622 = vadd.f32 %v1590, %v1606
    %v1623 = vadd.f32 %v1591, %v1607
    %v1624 = vadd.f32 %v1592, %v1608
    %v1625 = vadd.f32 %v1593, %v1609
    %v1626 = vadd.f32 %v1594, %v1610
    %v1627 = vadd.f32 %v1595, %v1611
    %v1628 = vadd.f32 %v1596, %v1612
    %v1629 = vadd.f32 %v1597, %v1613
    %v1630 = vadd.f32 %v1598, %v1614
    %v1631 = vadd.f32 %v1599, %v1615
    %v1632 = vadd.f32 %v1600, %v1616
    %v1633 = vadd.f32 %v1601, %v1617
    %v1634 = vadd.f32 %v1602, %v1618
    %1635 = vst [vmem:[%s17] sm:$0xff] %v1619
    %1636 = vst [vmem:[%s17 + $0x8] sm:$0xff] %v1620
    %1637 = vst [vmem:[%s17 + $0x10] sm:$0xff] %v1621
    %1638 = vst [vmem:[%s17 + $0x18] sm:$0xff] %v1622
    %1639 = vst [vmem:[%s17 + $0x20] sm:$0xff] %v1623
    %1640 = vst [vmem:[%s17 + $0x28] sm:$0xff] %v1624
    %1641 = vst [vmem:[%s17 + $0x30] sm:$0xff] %v1625
    %1642 = vst [vmem:[%s17 + $0x38] sm:$0xff] %v1626
    %1643 = vst [vmem:[%s17 + $0x40] sm:$0xff] %v1627
    %1644 = vst [vmem:[%s17 + $0x48] sm:$0xff] %v1628
    %1645 = vst [vmem:[%s17 + $0x50] sm:$0xff] %v1629
    %1646 = vst [vmem:[%s17 + $0x58] sm:$0xff] %v1630
    %1647 = vst [vmem:[%s17 + $0x60] sm:$0xff] %v1631
    %1648 = vst [vmem:[%s17 + $0x68] sm:$0xff] %v1632
    %1649 = vst [vmem:[%s17 + $0x70] sm:$0xff] %v1633
    %1650 = vst [vmem:[%s17 + $0x78] sm:$0xff] %v1634
    %v1651 = vld [vmem:[%s11] sm:$0xff]
    %v1652 = vmul.f32 %v1651, 0.999
    %v1653 = vmul.f32 %v51, 0.001
    %v1654 = vadd.f32 %v1652, %v1653
    %1655 = vst [vmem:[%s18] sm:$0xff] %v1654
    %v1656 = vld [vmem:[%s1] sm:$0xff]
    %v1657 = vld [vmem:[%s1 + $0x8] sm:$0xff]
    %v1658 = vld [vmem:[%s1 + $0x10] sm:$0xff]
    %v1659 = vld [vmem:[%s1 + $0x18] sm:$0xff]
    %v1660 = vld [vmem:[%s1 + $0x20] sm:$0xff]
    %v1661 = vld [vmem:[%s1 + $0x28] sm:$0xff]
    %v1662 = vld [vmem:[%s1 + $0x30] sm:$0xff]
    %v1663 = vld [vmem:[%s1 + $0x38] sm:$0xff]
    %v1664 = vlaneseq
    %v1665 = vshrl.u32 %v1664, 7
    %v1666 = vsub.s32 0, %v1665
    %v1667 = vrot.slane %v1654, %v1666
    %1668 = vmatprep.subr.mxu0 0.0
    %1669 = vmatpush1.msra.mxu0 %v1203
    %1670 = vmatprep.subr.mxu0 0.0
    %1671 = vmatpush1.msra.mxu0 %v1204
    %1672 = vmatprep.subr.mxu0 0.0
    %1673 = vmatpush1.msra.mxu0 %v1205
    %1674 = vmatprep.subr.mxu0 0.0
    %1675 = vmatpush1.msra.mxu0 %v1206
    %1676 = vmatprep.subr.mxu0 0.0
    %1677 = vmatpush1.msra.mxu0 %v1207
    %1678 = vmatprep.subr.mxu0 0.0
    %1679 = vmatpush1.msra.mxu0 %v1208
    %1680 = vmatprep.subr.mxu0 0.0
    %1681 = vmatpush1.msra.mxu0 %v1209
    %1682 = vmatprep.subr.mxu0 0.0
    %1683 = vmatpush1.msra.mxu0 %v1210
    %1684 = vmatprep.subr.mxu0 0.0
    %1685 = vmatpush1.msra.mxu0 %v1211
    %1686 = vmatprep.subr.mxu0 0.0
    %1687 = vmatpush1.msra.mxu0 %v1212
    %1688 = vmatprep.subr.mxu0 0.0
    %1689 = vmatpush1.msra.mxu0 %v1213
    %1690 = vmatprep.subr.mxu0 0.0
    %1691 = vmatpush1.msra.mxu0 %v1214
    %1692 = vmatprep.subr.mxu0 0.0
    %1693 = vmatpush1.msra.mxu0 %v1215
    %1694 = vmatprep.subr.mxu0 0.0
    %1695 = vmatpush1.msra.mxu0 %v1216
    %1696 = vmatprep.subr.mxu0 0.0
    %1697 = vmatpush1.msra.mxu0 %v1217
    %1698 = vmatprep.subr.mxu0 0.0
    %1699 = vmatpush1.msra.mxu0 %v1218
    %1700 = vmatprep.subr.mxu0 0.0
    %1701 = vmatpush1.msra.mxu0 %v1219
    %1702 = vmatprep.subr.mxu0 0.0
    %1703 = vmatpush1.msra.mxu0 %v1220
    %1704 = vmatprep.subr.mxu0 0.0
    %1705 = vmatpush1.msra.mxu0 %v1221
    %1706 = vmatprep.subr.mxu0 0.0
    %1707 = vmatpush1.msra.mxu0 %v1222
    %1708 = vmatprep.subr.mxu0 0.0
    %1709 = vmatpush1.msra.mxu0 %v1223
    %1710 = vmatprep.subr.mxu0 0.0
    %1711 = vmatpush1.msra.mxu0 %v1224
    %1712 = vmatprep.subr.mxu0 0.0
    %1713 = vmatpush1.msra.mxu0 %v1225
    %1714 = vmatprep.subr.mxu0 0.0
    %1715 = vmatpush1.msra.mxu0 %v1226
    %1716 = vmatprep.subr.mxu0 0.0
    %1717 = vmatpush1.msra.mxu0 %v1227
    %1718 = vmatprep.subr.mxu0 0.0
    %1719 = vmatpush1.msra.mxu0 %v1228
    %1720 = vmatprep.subr.mxu0 0.0
    %1721 = vmatpush1.msra.mxu0 %v1229
    %1722 = vmatprep.subr.mxu0 0.0
    %1723 = vmatpush1.msra.mxu0 %v1230
    %1724 = vmatprep.subr.mxu0 0.0
    %1725 = vmatpush1.msra.mxu0 %v1231
    %1726 = vmatprep.subr.mxu0 0.0
    %1727 = vmatpush1.msra.mxu0 %v1232
    %1728 = vmatprep.subr.mxu0 0.0
    %1729 = vmatpush1.msra.mxu0 %v1233
    %1730 = vmatprep.subr.mxu0 0.0
    %1731 = vmatpush1.msra.mxu0 %v1234
    %1732 = vmatprep.mubr.f32.mxu0 %v1657
    %1733 = vmatmul.mubr.f32.gmra.mrb[0].mxu0 %v1656
    %v1734 = vpop.f32.mrb[0].mxu0
    %v1735 = vadd.f32 %v1667, %v1734
    %v1736 = vpop.f32.mrb[0].mxu0
    %1737 = vdwg.mxu0
    %1738 = vmatprep.subr.mxu0 0.0
    %1739 = vmatpush1.msra.mxu0 %v1235
    %1740 = vmatprep.subr.mxu0 0.0
    %1741 = vmatpush1.msra.mxu0 %v1236
    %1742 = vmatprep.subr.mxu0 0.0
    %1743 = vmatpush1.msra.mxu0 %v1237
    %1744 = vmatprep.subr.mxu0 0.0
    %1745 = vmatpush1.msra.mxu0 %v1238
    %1746 = vmatprep.subr.mxu0 0.0
    %1747 = vmatpush1.msra.mxu0 %v1239
    %1748 = vmatprep.subr.mxu0 0.0
    %1749 = vmatpush1.msra.mxu0 %v1240
    %1750 = vmatprep.subr.mxu0 0.0
    %1751 = vmatpush1.msra.mxu0 %v1241
    %1752 = vmatprep.subr.mxu0 0.0
    %1753 = vmatpush1.msra.mxu0 %v1242
    %1754 = vmatprep.subr.mxu0 0.0
    %1755 = vmatpush1.msra.mxu0 %v1243
    %1756 = vmatprep.subr.mxu0 0.0
    %1757 = vmatpush1.msra.mxu0 %v1244
    %1758 = vmatprep.subr.mxu0 0.0
    %1759 = vmatpush1.msra.mxu0 %v1245
    %1760 = vmatprep.subr.mxu0 0.0
    %1761 = vmatpush1.msra.mxu0 %v1246
    %1762 = vmatprep.subr.mxu0 0.0
    %1763 = vmatpush1.msra.mxu0 %v1247
    %1764 = vmatprep.subr.mxu0 0.0
    %1765 = vmatpush1.msra.mxu0 %v1248
    %1766 = vmatprep.subr.mxu0 0.0
    %1767 = vmatpush1.msra.mxu0 %v1249
    %1768 = vmatprep.subr.mxu0 0.0
    %1769 = vmatpush1.msra.mxu0 %v1250
    %1770 = vmatprep.subr.mxu0 0.0
    %1771 = vmatpush1.msra.mxu0 %v1251
    %1772 = vmatprep.subr.mxu0 0.0
    %1773 = vmatpush1.msra.mxu0 %v1252
    %1774 = vmatprep.subr.mxu0 0.0
    %1775 = vmatpush1.msra.mxu0 %v1253
    %1776 = vmatprep.subr.mxu0 0.0
    %1777 = vmatpush1.msra.mxu0 %v1254
    %1778 = vmatprep.subr.mxu0 0.0
    %1779 = vmatpush1.msra.mxu0 %v1255
    %1780 = vmatprep.subr.mxu0 0.0
    %1781 = vmatpush1.msra.mxu0 %v1256
    %1782 = vmatprep.subr.mxu0 0.0
    %1783 = vmatpush1.msra.mxu0 %v1257
    %1784 = vmatprep.subr.mxu0 0.0
    %1785 = vmatpush1.msra.mxu0 %v1258
    %1786 = vmatprep.subr.mxu0 0.0
    %1787 = vmatpush1.msra.mxu0 %v1259
    %1788 = vmatprep.subr.mxu0 0.0
    %1789 = vmatpush1.msra.mxu0 %v1260
    %1790 = vmatprep.subr.mxu0 0.0
    %1791 = vmatpush1.msra.mxu0 %v1261
    %1792 = vmatprep.subr.mxu0 0.0
    %1793 = vmatpush1.msra.mxu0 %v1262
    %1794 = vmatprep.subr.mxu0 0.0
    %1795 = vmatpush1.msra.mxu0 %v1263
    %1796 = vmatprep.subr.mxu0 0.0
    %1797 = vmatpush1.msra.mxu0 %v1264
    %1798 = vmatprep.subr.mxu0 0.0
    %1799 = vmatpush1.msra.mxu0 %v1265
    %1800 = vmatprep.subr.mxu0 0.0
    %1801 = vmatpush1.msra.mxu0 %v1266
    %1802 = vmatprep.mubr.f32.mxu0 %v1659
    %1803 = vmatmul.mubr.f32.gmra.mrb[0].mxu0 %v1658
    %v1804 = vpop.f32.mrb[0].mxu0
    %v1805 = vadd.f32 %v1735, %v1804
    %v1806 = vpop.f32.mrb[0].mxu0
    %1807 = vdwg.mxu0
    %1808 = vmatprep.subr.mxu0 0.0
    %1809 = vmatpush1.msra.mxu0 %v1267
    %1810 = vmatprep.subr.mxu0 0.0
    %1811 = vmatpush1.msra.mxu0 %v1268
    %1812 = vmatprep.subr.mxu0 0.0
    %1813 = vmatpush1.msra.mxu0 %v1269
    %1814 = vmatprep.subr.mxu0 0.0
    %1815 = vmatpush1.msra.mxu0 %v1270
    %1816 = vmatprep.subr.mxu0 0.0
    %1817 = vmatpush1.msra.mxu0 %v1271
    %1818 = vmatprep.subr.mxu0 0.0
    %1819 = vmatpush1.msra.mxu0 %v1272
    %1820 = vmatprep.subr.mxu0 0.0
    %1821 = vmatpush1.msra.mxu0 %v1273
    %1822 = vmatprep.subr.mxu0 0.0
    %1823 = vmatpush1.msra.mxu0 %v1274
    %1824 = vmatprep.subr.mxu0 0.0
    %1825 = vmatpush1.msra.mxu0 %v1275
    %1826 = vmatprep.subr.mxu0 0.0
    %1827 = vmatpush1.msra.mxu0 %v1276
    %1828 = vmatprep.subr.mxu0 0.0
    %1829 = vmatpush1.msra.mxu0 %v1277
    %1830 = vmatprep.subr.mxu0 0.0
    %1831 = vmatpush1.msra.mxu0 %v1278
    %1832 = vmatprep.subr.mxu0 0.0
    %1833 = vmatpush1.msra.mxu0 %v1279
    %1834 = vmatprep.subr.mxu0 0.0
    %1835 = vmatpush1.msra.mxu0 %v1280
    %1836 = vmatprep.subr.mxu0 0.0
    %1837 = vmatpush1.msra.mxu0 %v1281
    %1838 = vmatprep.subr.mxu0 0.0
    %1839 = vmatpush1.msra.mxu0 %v1282
    %1840 = vmatprep.subr.mxu0 0.0
    %1841 = vmatpush1.msra.mxu0 %v1283
    %1842 = vmatprep.subr.mxu0 0.0
    %1843 = vmatpush1.msra.mxu0 %v1284
    %1844 = vmatprep.subr.mxu0 0.0
    %1845 = vmatpush1.msra.mxu0 %v1285
    %1846 = vmatprep.subr.mxu0 0.0
    %1847 = vmatpush1.msra.mxu0 %v1286
    %1848 = vmatprep.subr.mxu0 0.0
    %1849 = vmatpush1.msra.mxu0 %v1287
    %1850 = vmatprep.subr.mxu0 0.0
    %1851 = vmatpush1.msra.mxu0 %v1288
    %1852 = vmatprep.subr.mxu0 0.0
    %1853 = vmatpush1.msra.mxu0 %v1289
    %1854 = vmatprep.subr.mxu0 0.0
    %1855 = vmatpush1.msra.mxu0 %v1290
    %1856 = vmatprep.subr.mxu0 0.0
    %1857 = vmatpush1.msra.mxu0 %v1291
    %1858 = vmatprep.subr.mxu0 0.0
    %1859 = vmatpush1.msra.mxu0 %v1292
    %1860 = vmatprep.subr.mxu0 0.0
    %1861 = vmatpush1.msra.mxu0 %v1293
    %1862 = vmatprep.subr.mxu0 0.0
    %1863 = vmatpush1.msra.mxu0 %v1294
    %1864 = vmatprep.subr.mxu0 0.0
    %1865 = vmatpush1.msra.mxu0 %v1295
    %1866 = vmatprep.subr.mxu0 0.0
    %1867 = vmatpush1.msra.mxu0 %v1296
    %1868 = vmatprep.subr.mxu0 0.0
    %1869 = vmatpush1.msra.mxu0 %v1297
    %1870 = vmatprep.subr.mxu0 0.0
    %1871 = vmatpush1.msra.mxu0 %v1298
    %1872 = vmatprep.mubr.f32.mxu0 %v1661
    %1873 = vmatmul.mubr.f32.gmra.mrb[0].mxu0 %v1660
    %v1874 = vpop.f32.mrb[0].mxu0
    %v1875 = vadd.f32 %v1805, %v1874
    %v1876 = vpop.f32.mrb[0].mxu0
    %1877 = vdwg.mxu0
    %1878 = vmatprep.subr.mxu0 0.0
    %1879 = vmatpush1.msra.mxu0 %v1299
    %1880 = vmatprep.subr.mxu0 0.0
    %1881 = vmatpush1.msra.mxu0 %v1300
    %1882 = vmatprep.subr.mxu0 0.0
    %1883 = vmatpush1.msra.mxu0 %v1301
    %1884 = vmatprep.subr.mxu0 0.0
    %1885 = vmatpush1.msra.mxu0 %v1302
    %1886 = vmatprep.subr.mxu0 0.0
    %1887 = vmatpush1.msra.mxu0 %v1303
    %1888 = vmatprep.subr.mxu0 0.0
    %1889 = vmatpush1.msra.mxu0 %v1304
    %1890 = vmatprep.subr.mxu0 0.0
    %1891 = vmatpush1.msra.mxu0 %v1305
    %1892 = vmatprep.subr.mxu0 0.0
    %1893 = vmatpush1.msra.mxu0 %v1306
    %1894 = vmatprep.subr.mxu0 0.0
    %1895 = vmatpush1.msra.mxu0 %v1307
    %1896 = vmatprep.subr.mxu0 0.0
    %1897 = vmatpush1.msra.mxu0 %v1308
    %1898 = vmatprep.subr.mxu0 0.0
    %1899 = vmatpush1.msra.mxu0 %v1309
    %1900 = vmatprep.subr.mxu0 0.0
    %1901 = vmatpush1.msra.mxu0 %v1310
    %1902 = vmatprep.subr.mxu0 0.0
    %1903 = vmatpush1.msra.mxu0 %v1311
    %1904 = vmatprep.subr.mxu0 0.0
    %1905 = vmatpush1.msra.mxu0 %v1312
    %1906 = vmatprep.subr.mxu0 0.0
    %1907 = vmatpush1.msra.mxu0 %v1313
    %1908 = vmatprep.subr.mxu0 0.0
    %1909 = vmatpush1.msra.mxu0 %v1314
    %1910 = vmatprep.subr.mxu0 0.0
    %1911 = vmatpush1.msra.mxu0 %v1315
    %1912 = vmatprep.subr.mxu0 0.0
    %1913 = vmatpush1.msra.mxu0 %v1316
    %1914 = vmatprep.subr.mxu0 0.0
    %1915 = vmatpush1.msra.mxu0 %v1317
    %1916 = vmatprep.subr.mxu0 0.0
    %1917 = vmatpush1.msra.mxu0 %v1318
    %1918 = vmatprep.subr.mxu0 0.0
    %1919 = vmatpush1.msra.mxu0 %v1319
    %1920 = vmatprep.subr.mxu0 0.0
    %1921 = vmatpush1.msra.mxu0 %v1320
    %1922 = vmatprep.subr.mxu0 0.0
    %1923 = vmatpush1.msra.mxu0 %v1321
    %1924 = vmatprep.subr.mxu0 0.0
    %1925 = vmatpush1.msra.mxu0 %v1322
    %1926 = vmatprep.subr.mxu0 0.0
    %1927 = vmatpush1.msra.mxu0 %v1323
    %1928 = vmatprep.subr.mxu0 0.0
    %1929 = vmatpush1.msra.mxu0 %v1324
    %1930 = vmatprep.subr.mxu0 0.0
    %1931 = vmatpush1.msra.mxu0 %v1325
    %1932 = vmatprep.subr.mxu0 0.0
    %1933 = vmatpush1.msra.mxu0 %v1326
    %1934 = vmatprep.subr.mxu0 0.0
    %1935 = vmatpush1.msra.mxu0 %v1327
    %1936 = vmatprep.subr.mxu0 0.0
    %1937 = vmatpush1.msra.mxu0 %v1328
    %1938 = vmatprep.subr.mxu0 0.0
    %1939 = vmatpush1.msra.mxu0 %v1329
    %1940 = vmatprep.subr.mxu0 0.0
    %1941 = vmatpush1.msra.mxu0 %v1330
    %1942 = vmatprep.mubr.f32.mxu0 %v1663
    %1943 = vmatmul.mubr.f32.gmra.mrb[0].mxu0 %v1662
    %v1944 = vpop.f32.mrb[0].mxu0
    %v1945 = vadd.f32 %v1875, %v1944
    %v1946 = vpop.f32.mrb[0].mxu0
    %1947 = vdwg.mxu0
    %v1948 = vmax.f32 %v1945, 0.0
    %v1949 = vlaneseq
    %v1950 = vshrl.u32 %v1949, 7
    %v1951 = vsub.s32 1, %v1950
    %v1952 = vrot.slane %v1654, %v1951
    %1953 = vmatprep.subr.mxu0 0.0
    %1954 = vmatpush1.msra.mxu0 %v1523
    %1955 = vmatprep.subr.mxu0 0.0
    %1956 = vmatpush1.msra.mxu0 %v1524
    %1957 = vmatprep.subr.mxu0 0.0
    %1958 = vmatpush1.msra.mxu0 %v1525
    %1959 = vmatprep.subr.mxu0 0.0
    %1960 = vmatpush1.msra.mxu0 %v1526
    %1961 = vmatprep.subr.mxu0 0.0
    %1962 = vmatpush1.msra.mxu0 %v1527
    %1963 = vmatprep.subr.mxu0 0.0
    %1964 = vmatpush1.msra.mxu0 %v1528
    %1965 = vmatprep.subr.mxu0 0.0
    %1966 = vmatpush1.msra.mxu0 %v1529
    %1967 = vmatprep.subr.mxu0 0.0
    %1968 = vmatpush1.msra.mxu0 %v1530
    %1969 = vmatprep.subr.mxu0 0.0
    %1970 = vmatpush1.msra.mxu0 %v1531
    %1971 = vmatprep.subr.mxu0 0.0
    %1972 = vmatpush1.msra.mxu0 %v1532
    %1973 = vmatprep.subr.mxu0 0.0
    %1974 = vmatpush1.msra.mxu0 %v1533
    %1975 = vmatprep.subr.mxu0 0.0
    %1976 = vmatpush1.msra.mxu0 %v1534
    %1977 = vmatprep.subr.mxu0 0.0
    %1978 = vmatpush1.msra.mxu0 %v1535
    %1979 = vmatprep.subr.mxu0 0.0
    %1980 = vmatpush1.msra.mxu0 %v1536
    %1981 = vmatprep.subr.mxu0 0.0
    %1982 = vmatpush1.msra.mxu0 %v1537
    %1983 = vmatprep.subr.mxu0 0.0
    %1984 = vmatpush1.msra.mxu0 %v1538
    %1985 = vmatprep.subr.mxu0 0.0
    %1986 = vmatpush1.msra.mxu0 0.0
    %1987 = vmatprep.subr.mxu0 0.0
    %1988 = vmatpush1.msra.mxu0 0.0
    %1989 = vmatprep.subr.mxu0 0.0
    %1990 = vmatpush1.msra.mxu0 0.0
    %1991 = vmatprep.subr.mxu0 0.0
    %1992 = vmatpush1.msra.mxu0 0.0
    %1993 = vmatprep.subr.mxu0 0.0
    %1994 = vmatpush1.msra.mxu0 0.0
    %1995 = vmatprep.subr.mxu0 0.0
    %1996 = vmatpush1.msra.mxu0 0.0
    %1997 = vmatprep.subr.mxu0 0.0
    %1998 = vmatpush1.msra.mxu0 0.0
    %1999 = vmatprep.subr.mxu0 0.0
    %2000 = vmatpush1.msra.mxu0 0.0
    %2001 = vmatprep.subr.mxu0 0.0
    %2002 = vmatpush1.msra.mxu0 0.0
    %2003 = vmatprep.subr.mxu0 0.0
    %2004 = vmatpush1.msra.mxu0 0.0
    %2005 = vmatprep.subr.mxu0 0.0
    %2006 = vmatpush1.msra.mxu0 0.0
    %2007 = vmatprep.subr.mxu0 0.0
    %2008 = vmatpush1.msra.mxu0 0.0
    %2009 = vmatprep.subr.mxu0 0.0
    %2010 = vmatpush1.msra.mxu0 0.0
    %2011 = vmatprep.subr.mxu0 0.0
    %2012 = vmatpush1.msra.mxu0 0.0
    %2013 = vmatprep.subr.mxu0 0.0
    %2014 = vmatpush1.msra.mxu0 0.0
    %2015 = vmatprep.subr.mxu0 0.0
    %2016 = vmatpush1.msra.mxu0 0.0
    %2017 = vmatprep.mubr.f32.mxu0 0.0
    %2018 = vmatmul.mubr.f32.gmra.mrb[0].mxu0 %v1948
    %v2019 = vpop.f32.mrb[0].mxu0
    %v2020 = vadd.f32 %v1952, %v2019
    %v2021 = vpop.f32.mrb[0].mxu0
    %2022 = vdwg.mxu0
    %v2023 = vrot.slane %v2020, 4
    %v2024 = vadd.f32 %v2020, %v2023
    %v2025 = vrot.slane %v2024, 2
    %v2026 = vadd.f32 %v2024, %v2025
    %v2027 = vrot.slane %v2026, 1
    %v2028 = vadd.f32 %v2026, %v2027
    %v2029 = vmul.f32 %v2028, %v586
    %v2030 = vsub.f32 %v2020, %v2029
    %v2031 = vmul.f32 %v2030, %v2030
    %v2032 = vrot.slane %v2031, 4
    %v2033 = vadd.f32 %v2031, %v2032
    %v2034 = vrot.slane %v2033, 2
    %v2035 = vadd.f32 %v2033, %v2034
    %v2036 = vrot.slane %v2035, 1
    %v2037 = vadd.f32 %v2035, %v2036
    %v2038 = vmul.f32 %v2037, %v586
    %v2039 = vadd.f32 %v2038, 1e-05
    %v2040 = vrsqrt.pop %v2039
    %v2041 = vmul.f32 %v2030, %v2040
    %v2042 = vlaneseq
    %v2043 = vshrl.u32 %v2042, 7
    %v2044 = vsub.s32 2, %v2043
    %v2045 = vrot.slane %v1654, %v2044
    %v2046 = vmul.f32 %v2041, %v2045
    %v2047 = vlaneseq
    %v2048 = vshrl.u32 %v2047, 7
    %v2049 = vsub.s32 3, %v2048
    %v2050 = vrot.slane %v1654, %v2049
    %v2051 = vadd.f32 %v2046, %v2050
    %v2052 = vmax.f32 %v2051, 0.0
    %v2053 = vlaneseq
    %v2054 = vshrl.u32 %v2053, 7
    %v2055 = vsub.s32 4, %v2054
    %v2056 = vrot.slane %v1654, %v2055
    %2057 = vmatprep.subr.mxu0 0.0
    %2058 = vmatpush1.msra.mxu0 %v1619
    %2059 = vmatprep.subr.mxu0 0.0
    %2060 = vmatpush1.msra.mxu0 %v1620
    %2061 = vmatprep.subr.mxu0 0.0
    %2062 = vmatpush1.msra.mxu0 %v1621
    %2063 = vmatprep.subr.mxu0 0.0
    %2064 = vmatpush1.msra.mxu0 %v1622
    %2065 = vmatprep.subr.mxu0 0.0
    %2066 = vmatpush1.msra.mxu0 %v1623
    %2067 = vmatprep.subr.mxu0 0.0
    %2068 = vmatpush1.msra.mxu0 %v1624
    %2069 = vmatprep.subr.mxu0 0.0
    %2070 = vmatpush1.msra.mxu0 %v1625
    %2071 = vmatprep.subr.mxu0 0.0
    %2072 = vmatpush1.msra.mxu0 %v1626
    %2073 = vmatprep.subr.mxu0 0.0
    %2074 = vmatpush1.msra.mxu0 %v1627
    %2075 = vmatprep.subr.mxu0 0.0
    %2076 = vmatpush1.msra.mxu0 %v1628
    %2077 = vmatprep.subr.mxu0 0.0
    %2078 = vmatpush1.msra.mxu0 %v1629
    %2079 = vmatprep.subr.mxu0 0.0
    %2080 = vmatpush1.msra.mxu0 %v1630
    %2081 = vmatprep.subr.mxu0 0.0
    %2082 = vmatpush1.msra.mxu0 %v1631
    %2083 = vmatprep.subr.mxu0 0.0
    %2084 = vmatpush1.msra.mxu0 %v1632
    %2085 = vmatprep.subr.mxu0 0.0
    %2086 = vmatpush1.msra.mxu0 %v1633
    %2087 = vmatprep.subr.mxu0 0.0
    %2088 = vmatpush1.msra.mxu0 %v1634
    %2089 = vmatprep.subr.mxu0 0.0
    %2090 = vmatpush1.msra.mxu0 0.0
    %2091 = vmatprep.subr.mxu0 0.0
    %2092 = vmatpush1.msra.mxu0 0.0
    %2093 = vmatprep.subr.mxu0 0.0
    %2094 = vmatpush1.msra.mxu0 0.0
    %2095 = vmatprep.subr.mxu0 0.0
    %2096 = vmatpush1.msra.mxu0 0.0
    %2097 = vmatprep.subr.mxu0 0.0
    %2098 = vmatpush1.msra.mxu0 0.0
    %2099 = vmatprep.subr.mxu0 0.0
    %2100 = vmatpush1.msra.mxu0 0.0
    %2101 = vmatprep.subr.mxu0 0.0
    %2102 = vmatpush1.msra.mxu0 0.0
    %2103 = vmatprep.subr.mxu0 0.0
    %2104 = vmatpush1.msra.mxu0 0.0
    %2105 = vmatprep.subr.mxu0 0.0
    %2106 = vmatpush1.msra.mxu0 0.0
    %2107 = vmatprep.subr.mxu0 0.0
    %2108 = vmatpush1.msra.mxu0 0.0
    %2109 = vmatprep.subr.mxu0 0.0
    %2110 = vmatpush1.msra.mxu0 0.0
    %2111 = vmatprep.subr.mxu0 0.0
    %2112 = vmatpush1.msra.mxu0 0.0
    %2113 = vmatprep.subr.mxu0 0.0
    %2114 = vmatpush1.msra.mxu0 0.0
    %2115 = vmatprep.subr.mxu0 0.0
    %2116 = vmatpush1.msra.mxu0 0.0
    %2117 = vmatprep.subr.mxu0 0.0
    %2118 = vmatpush1.msra.mxu0 0.0
    %2119 = vmatprep.subr.mxu0 0.0
    %2120 = vmatpush1.msra.mxu0 0.0
    %2121 = vmatprep.mubr.f32.mxu0 0.0
    %2122 = vmatmul.mubr.f32.gmra.mrb[0].mxu0 %v2052
    %v2123 = vpop.f32.mrb[0].mxu0
    %v2124 = vadd.f32 %v2056, %v2123
    %v2125 = vpop.f32.mrb[0].mxu0
    %2126 = vdwg.mxu0
    %v2127 = vmul.f32 %v2124, %v2124
    %2128 = vadd.xlane.f32.xlu0 %v2127
    %v2129 = vpop.xlane.xlu0 %2128
    %v2130 = vmax.f32 %v2129, 1e-24
    %v2131 = vrsqrt.pop %v2130
    %v2132 = vmul.f32 %v2124, %v2131
    %v2133 = vld [vmem:[%s3] sm:$0xff]
    %v2134 = vld [vmem:[%s3 + $0x8] sm:$0xff]
    %v2135 = vld [vmem:[%s3 + $0x10] sm:$0xff]
    %v2136 = vld [vmem:[%s3 + $0x18] sm:$0xff]
    %v2137 = vld [vmem:[%s3 + $0x20] sm:$0xff]
    %v2138 = vld [vmem:[%s3 + $0x28] sm:$0xff]
    %v2139 = vld [vmem:[%s3 + $0x30] sm:$0xff]
    %v2140 = vld [vmem:[%s3 + $0x38] sm:$0xff]
    %v2141 = vld [vmem:[%s3 + $0x40] sm:$0xff]
    %v2142 = vld [vmem:[%s3 + $0x48] sm:$0xff]
    %v2143 = vld [vmem:[%s3 + $0x50] sm:$0xff]
    %v2144 = vld [vmem:[%s3 + $0x58] sm:$0xff]
    %v2145 = vld [vmem:[%s3 + $0x60] sm:$0xff]
    %v2146 = vld [vmem:[%s3 + $0x68] sm:$0xff]
    %v2147 = vld [vmem:[%s3 + $0x70] sm:$0xff]
    %v2148 = vld [vmem:[%s3 + $0x78] sm:$0xff]
    %v2149 = vld [vmem:[%s3 + $0x80] sm:$0xff]
    %v2150 = vld [vmem:[%s3 + $0x88] sm:$0xff]
    %v2151 = vld [vmem:[%s3 + $0x90] sm:$0xff]
    %v2152 = vld [vmem:[%s3 + $0x98] sm:$0xff]
    %v2153 = vld [vmem:[%s3 + $0xa0] sm:$0xff]
    %v2154 = vld [vmem:[%s3 + $0xa8] sm:$0xff]
    %v2155 = vld [vmem:[%s3 + $0xb0] sm:$0xff]
    %v2156 = vld [vmem:[%s3 + $0xb8] sm:$0xff]
    %v2157 = vld [vmem:[%s3 + $0xc0] sm:$0xff]
    %v2158 = vld [vmem:[%s3 + $0xc8] sm:$0xff]
    %v2159 = vld [vmem:[%s3 + $0xd0] sm:$0xff]
    %v2160 = vld [vmem:[%s3 + $0xd8] sm:$0xff]
    %v2161 = vld [vmem:[%s3 + $0xe0] sm:$0xff]
    %v2162 = vld [vmem:[%s3 + $0xe8] sm:$0xff]
    %v2163 = vld [vmem:[%s3 + $0xf0] sm:$0xff]
    %v2164 = vld [vmem:[%s3 + $0xf8] sm:$0xff]
    %v2165 = vld [vmem:[%s3 + $0x100] sm:$0xff]
    %v2166 = vld [vmem:[%s3 + $0x108] sm:$0xff]
    %v2167 = vld [vmem:[%s3 + $0x110] sm:$0xff]
    %v2168 = vld [vmem:[%s3 + $0x118] sm:$0xff]
    %v2169 = vld [vmem:[%s3 + $0x120] sm:$0xff]
    %v2170 = vld [vmem:[%s3 + $0x128] sm:$0xff]
    %v2171 = vld [vmem:[%s3 + $0x130] sm:$0xff]
    %v2172 = vld [vmem:[%s3 + $0x138] sm:$0xff]
    %v2173 = vld [vmem:[%s3 + $0x140] sm:$0xff]
    %v2174 = vld [vmem:[%s3 + $0x148] sm:$0xff]
    %v2175 = vld [vmem:[%s3 + $0x150] sm:$0xff]
    %v2176 = vld [vmem:[%s3 + $0x158] sm:$0xff]
    %v2177 = vld [vmem:[%s3 + $0x160] sm:$0xff]
    %v2178 = vld [vmem:[%s3 + $0x168] sm:$0xff]
    %v2179 = vld [vmem:[%s3 + $0x170] sm:$0xff]
    %v2180 = vld [vmem:[%s3 + $0x178] sm:$0xff]
    %v2181 = vmul.f32 %v690, %v2132
    %2182 = vadd.xlane.f32.xlu0 %v2181
    %v2183 = vpop.xlane.xlu0 %2182
    %2184 = vmatprep.subr.mxu0 0.0
    %2185 = vmatpush1.xpose.msra.mxu0 %v2133
    %2186 = vmatprep.subr.mxu0 0.0
    %2187 = vmatpush1.xpose.msra.mxu0 %v2134
    %2188 = vmatprep.subr.mxu0 0.0
    %2189 = vmatpush1.xpose.msra.mxu0 %v2135
    %2190 = vmatprep.subr.mxu0 0.0
    %2191 = vmatpush1.xpose.msra.mxu0 %v2136
    %2192 = vmatprep.subr.mxu0 0.0
    %2193 = vmatpush1.xpose.msra.mxu0 %v2137
    %2194 = vmatprep.subr.mxu0 0.0
    %2195 = vmatpush1.xpose.msra.mxu0 %v2138
    %2196 = vmatprep.subr.mxu0 0.0
    %2197 = vmatpush1.xpose.msra.mxu0 %v2139
    %2198 = vmatprep.subr.mxu0 0.0
    %2199 = vmatpush1.xpose.msra.mxu0 %v2140
    %2200 = vmatprep.subr.mxu0 0.0
    %2201 = vmatpush1.xpose.msra.mxu0 %v2141
    %2202 = vmatprep.subr.mxu0 0.0
    %2203 = vmatpush1.xpose.msra.mxu0 %v2142
    %2204 = vmatprep.subr.mxu0 0.0
    %2205 = vmatpush1.xpose.msra.mxu0 %v2143
    %2206 = vmatprep.subr.mxu0 0.0
    %2207 = vmatpush1.xpose.msra.mxu0 %v2144
    %2208 = vmatprep.subr.mxu0 0.0
    %2209 = vmatpush1.xpose.msra.mxu0 %v2145
    %2210 = vmatprep.subr.mxu0 0.0
    %2211 = vmatpush1.xpose.msra.mxu0 %v2146
    %2212 = vmatprep.subr.mxu0 0.0
    %2213 = vmatpush1.xpose.msra.mxu0 %v2147
    %2214 = vmatprep.subr.mxu0 0.0
    %2215 = vmatpush1.xpose.msra.mxu0 %v2148
    %2216 = vmatprep.subr.mxu0 0.0
    %2217 = vmatpush1.xpose.msra.mxu0 %v2149
    %2218 = vmatprep.subr.mxu0 0.0
    %2219 = vmatpush1.xpose.msra.mxu0 %v2150
    %2220 = vmatprep.subr.mxu0 0.0
    %2221 = vmatpush1.xpose.msra.mxu0 %v2151
    %2222 = vmatprep.subr.mxu0 0.0
    %2223 = vmatpush1.xpose.msra.mxu0 %v2152
    %2224 = vmatprep.subr.mxu0 0.0
    %2225 = vmatpush1.xpose.msra.mxu0 %v2153
    %2226 = vmatprep.subr.mxu0 0.0
    %2227 = vmatpush1.xpose.msra.mxu0 %v2154
    %2228 = vmatprep.subr.mxu0 0.0
    %2229 = vmatpush1.xpose.msra.mxu0 %v2155
    %2230 = vmatprep.subr.mxu0 0.0
    %2231 = vmatpush1.xpose.msra.mxu0 %v2156
    %2232 = vmatprep.subr.mxu0 0.0
    %2233 = vmatpush1.xpose.msra.mxu0 %v2157
    %2234 = vmatprep.subr.mxu0 0.0
    %2235 = vmatpush1.xpose.msra.mxu0 %v2158
    %2236 = vmatprep.subr.mxu0 0.0
    %2237 = vmatpush1.xpose.msra.mxu0 %v2159
    %2238 = vmatprep.subr.mxu0 0.0
    %2239 = vmatpush1.xpose.msra.mxu0 %v2160
    %2240 = vmatprep.subr.mxu0 0.0
    %2241 = vmatpush1.xpose.msra.mxu0 %v2161
    %2242 = vmatprep.subr.mxu0 0.0
    %2243 = vmatpush1.xpose.msra.mxu0 %v2162
    %2244 = vmatprep.subr.mxu0 0.0
    %2245 = vmatpush1.xpose.msra.mxu0 %v2163
    %2246 = vmatprep.subr.mxu0 0.0
    %2247 = vmatpush1.xpose.msra.mxu0 %v2164
    %2248 = vmatprep.mubr.f32.mxu0 0.0
    %2249 = vmatmul.mubr.f32.gmra.mrb[0].mxu0 %v690
    %v2250 = vpop.f32.mrb[0].mxu0
    %v2251 = vadd.f32 0.0, %v2250
    %v2252 = vpop.f32.mrb[0].mxu0
    %v2253 = vadd.f32 0.0, %v2252
    %2254 = vdwg.mxu0
    %2255 = vmatprep.subr.mxu0 0.0
    %2256 = vmatpush1.xpose.msra.mxu0 %v2165
    %2257 = vmatprep.subr.mxu0 0.0
    %2258 = vmatpush1.xpose.msra.mxu0 %v2166
    %2259 = vmatprep.subr.mxu0 0.0
    %2260 = vmatpush1.xpose.msra.mxu0 %v2167
    %2261 = vmatprep.subr.mxu0 0.0
    %2262 = vmatpush1.xpose.msra.mxu0 %v2168
    %2263 = vmatprep.subr.mxu0 0.0
    %2264 = vmatpush1.xpose.msra.mxu0 %v2169
    %2265 = vmatprep.subr.mxu0 0.0
    %2266 = vmatpush1.xpose.msra.mxu0 %v2170
    %2267 = vmatprep.subr.mxu0 0.0
    %2268 = vmatpush1.xpose.msra.mxu0 %v2171
    %2269 = vmatprep.subr.mxu0 0.0
    %2270 = vmatpush1.xpose.msra.mxu0 %v2172
    %2271 = vmatprep.subr.mxu0 0.0
    %2272 = vmatpush1.xpose.msra.mxu0 %v2173
    %2273 = vmatprep.subr.mxu0 0.0
    %2274 = vmatpush1.xpose.msra.mxu0 %v2174
    %2275 = vmatprep.subr.mxu0 0.0
    %2276 = vmatpush1.xpose.msra.mxu0 %v2175
    %2277 = vmatprep.subr.mxu0 0.0
    %2278 = vmatpush1.xpose.msra.mxu0 %v2176
    %2279 = vmatprep.subr.mxu0 0.0
    %2280 = vmatpush1.xpose.msra.mxu0 %v2177
    %2281 = vmatprep.subr.mxu0 0.0
    %2282 = vmatpush1.xpose.msra.mxu0 %v2178
    %2283 = vmatprep.subr.mxu0 0.0
    %2284 = vmatpush1.xpose.msra.mxu0 %v2179
    %2285 = vmatprep.subr.mxu0 0.0
    %2286 = vmatpush1.xpose.msra.mxu0 %v2180
    %2287 = vmatprep.subr.mxu0 0.0
    %2288 = vmatpush1.xpose.msra.mxu0 0.0
    %2289 = vmatprep.subr.mxu0 0.0
    %2290 = vmatpush1.xpose.msra.mxu0 0.0
    %2291 = vmatprep.subr.mxu0 0.0
    %2292 = vmatpush1.xpose.msra.mxu0 0.0
    %2293 = vmatprep.subr.mxu0 0.0
    %2294 = vmatpush1.xpose.msra.mxu0 0.0
    %2295 = vmatprep.subr.mxu0 0.0
    %2296 = vmatpush1.xpose.msra.mxu0 0.0
    %2297 = vmatprep.subr.mxu0 0.0
    %2298 = vmatpush1.xpose.msra.mxu0 0.0
    %2299 = vmatprep.subr.mxu0 0.0
    %2300 = vmatpush1.xpose.msra.mxu0 0.0
    %2301 = vmatprep.subr.mxu0 0.0
    %2302 = vmatpush1.xpose.msra.mxu0 0.0
    %2303 = vmatprep.subr.mxu0 0.0
    %2304 = vmatpush1.xpose.msra.mxu0 0.0
    %2305 = vmatprep.subr.mxu0 0.0
    %2306 = vmatpush1.xpose.msra.mxu0 0.0
    %2307 = vmatprep.subr.mxu0 0.0
    %2308 = vmatpush1.xpose.msra.mxu0 0.0
    %2309 = vmatprep.subr.mxu0 0.0
    %2310 = vmatpush1.xpose.msra.mxu0 0.0
    %2311 = vmatprep.subr.mxu0 0.0
    %2312 = vmatpush1.xpose.msra.mxu0 0.0
    %2313 = vmatprep.subr.mxu0 0.0
    %2314 = vmatpush1.xpose.msra.mxu0 0.0
    %2315 = vmatprep.subr.mxu0 0.0
    %2316 = vmatpush1.xpose.msra.mxu0 0.0
    %2317 = vmatprep.subr.mxu0 0.0
    %2318 = vmatpush1.xpose.msra.mxu0 0.0
    %2319 = vmatprep.mubr.f32.mxu0 0.0
    %2320 = vmatmul.mubr.f32.gmra.mrb[0].mxu0 %v690
    %v2321 = vpop.f32.mrb[0].mxu0
    %v2322 = vadd.f32 0.0, %v2321
    %v2323 = vpop.f32.mrb[0].mxu0
    %2324 = vdwg.mxu0
    %v2325 = vlaneseq
    %v2326 = vand.u32 %v2325, 127
    %v2327 = vadd.s32 %v2326, 128
    %v2328 = vadd.s32 %v2326, 256
    %vm2329 = vcmp.eq.s32.totalorder %v2326, 0
    %vm2330 = vcmp.eq.s32.totalorder %v2327, 0
    %vm2331 = vcmp.eq.s32.totalorder %v2328, 0
    %v2332 = vsel %vm2329, %v2183, %v2251
    %v2333 = vsel %vm2330, %v2183, %v2253
    %v2334 = vsel %vm2331, %v2183, %v2322
    %v2335 = vmul.f32 %v2332, 5.0
    %v2336 = vmul.f32 %v2333, 5.0
    %v2337 = vmul.f32 %v2334, 5.0
    %2338 = vst [vmem:[#allocation5] sm:$0xff] %v2335
    %2339 = vst [vmem:[#allocation5 + $0x8] sm:$0xff] %v2336
    %2340 = vst [vmem:[#allocation5 + $0x10] sm:$0xff] %v2337
    %s2341 = sld [smem:[#allocation2]]
    %s2342 = sadd.s32 %s2341, 1
    %v2343 = vlaneseq
    %v2344 = vshrl.u32 %v2343, 7
    %v2345 = vstv %s2342
    %v2346 = vadd.s32 %v2344, %v2345
    %vm2347 = vcmp.eq.s32.totalorder %v2326, %v2346
    %vm2348 = vcmp.eq.s32.totalorder %v2327, %v2346
    %vm2349 = vcmp.eq.s32.totalorder %v2328, %v2346
    %v2350 = vsel %vm2347, 1, 0
    %v2351 = vsel %vm2348, 1, 0
    %v2352 = vsel %vm2349, 1, 0
    %v2353 = vcvt.s32.f32 %v2350
    %v2354 = vcvt.s32.f32 %v2351
    %v2355 = vcvt.s32.f32 %v2352
    %2356 = vxpose.xlu0.b32.start [1/16] %v2353, 128
    %2357 = vxpose.xlu0.b32.cont [2/16] 0.0, 128
    %2358 = vxpose.xlu0.b32.cont [3/16] 0.0, 128
    %2359 = vxpose.xlu0.b32.cont [4/16] 0.0, 128
    %2360 = vxpose.xlu0.b32.cont [5/16] 0.0, 128
    %2361 = vxpose.xlu0.b32.cont [6/16] 0.0, 128
    %2362 = vxpose.xlu0.b32.cont [7/16] 0.0, 128
    %2363 = vxpose.xlu0.b32.cont [8/16] 0.0, 128
    %2364 = vxpose.xlu0.b32.cont [9/16] 0.0, 128
    %2365 = vxpose.xlu0.b32.cont [10/16] 0.0, 128
    %2366 = vxpose.xlu0.b32.cont [11/16] 0.0, 128
    %2367 = vxpose.xlu0.b32.cont [12/16] 0.0, 128
    %2368 = vxpose.xlu0.b32.cont [13/16] 0.0, 128
    %2369 = vxpose.xlu0.b32.cont [14/16] 0.0, 128
    %2370 = vxpose.xlu0.b32.cont [15/16] 0.0, 128
    %2371 = vxpose.xlu0.b32.end [16/16] 0.0, 128
    %v2372 = vpop.trf.xlu0
    %v2373 = vpop.trf.xlu0
    %v2374 = vpop.trf.xlu0
    %v2375 = vpop.trf.xlu0
    %v2376 = vpop.trf.xlu0
    %v2377 = vpop.trf.xlu0
    %v2378 = vpop.trf.xlu0
    %v2379 = vpop.trf.xlu0
    %v2380 = vpop.trf.xlu0
    %v2381 = vpop.trf.xlu0
    %v2382 = vpop.trf.xlu0
    %v2383 = vpop.trf.xlu0
    %v2384 = vpop.trf.xlu0
    %v2385 = vpop.trf.xlu0
    %v2386 = vpop.trf.xlu0
    %v2387 = vpop.trf.xlu0
    %2388 = vxpose.xlu0.b32.start [1/16] %v2354, 128
    %2389 = vxpose.xlu0.b32.cont [2/16] 0.0, 128
    %2390 = vxpose.xlu0.b32.cont [3/16] 0.0, 128
    %2391 = vxpose.xlu0.b32.cont [4/16] 0.0, 128
    %2392 = vxpose.xlu0.b32.cont [5/16] 0.0, 128
    %2393 = vxpose.xlu0.b32.cont [6/16] 0.0, 128
    %2394 = vxpose.xlu0.b32.cont [7/16] 0.0, 128
    %2395 = vxpose.xlu0.b32.cont [8/16] 0.0, 128
    %2396 = vxpose.xlu0.b32.cont [9/16] 0.0, 128
    %2397 = vxpose.xlu0.b32.cont [10/16] 0.0, 128
    %2398 = vxpose.xlu0.b32.cont [11/16] 0.0, 128
    %2399 = vxpose.xlu0.b32.cont [12/16] 0.0, 128
    %2400 = vxpose.xlu0.b32.cont [13/16] 0.0, 128
    %2401 = vxpose.xlu0.b32.cont [14/16] 0.0, 128
    %2402 = vxpose.xlu0.b32.cont [15/16] 0.0, 128
    %2403 = vxpose.xlu0.b32.end [16/16] 0.0, 128
    %v2404 = vpop.trf.xlu0
    %v2405 = vpop.trf.xlu0
    %v2406 = vpop.trf.xlu0
    %v2407 = vpop.trf.xlu0
    %v2408 = vpop.trf.xlu0
    %v2409 = vpop.trf.xlu0
    %v2410 = vpop.trf.xlu0
    %v2411 = vpop.trf.xlu0
    %v2412 = vpop.trf.xlu0
    %v2413 = vpop.trf.xlu0
    %v2414 = vpop.trf.xlu0
    %v2415 = vpop.trf.xlu0
    %v2416 = vpop.trf.xlu0
    %v2417 = vpop.trf.xlu0
    %v2418 = vpop.trf.xlu0
    %v2419 = vpop.trf.xlu0
    %2420 = vxpose.xlu0.b32.start [1/16] %v2355, 128
    %2421 = vxpose.xlu0.b32.cont [2/16] 0.0, 128
    %2422 = vxpose.xlu0.b32.cont [3/16] 0.0, 128
    %2423 = vxpose.xlu0.b32.cont [4/16] 0.0, 128
    %2424 = vxpose.xlu0.b32.cont [5/16] 0.0, 128
    %2425 = vxpose.xlu0.b32.cont [6/16] 0.0, 128
    %2426 = vxpose.xlu0.b32.cont [7/16] 0.0, 128
    %2427 = vxpose.xlu0.b32.cont [8/16] 0.0, 128
    %2428 = vxpose.xlu0.b32.cont [9/16] 0.0, 128
    %2429 = vxpose.xlu0.b32.cont [10/16] 0.0, 128
    %2430 = vxpose.xlu0.b32.cont [11/16] 0.0, 128
    %2431 = vxpose.xlu0.b32.cont [12/16] 0.0, 128
    %2432 = vxpose.xlu0.b32.cont [13/16] 0.0, 128
    %2433 = vxpose.xlu0.b32.cont [14/16] 0.0, 128
    %2434 = vxpose.xlu0.b32.cont [15/16] 0.0, 128
    %2435 = vxpose.xlu0.b32.end [16/16] 0.0, 128
    %v2436 = vpop.trf.xlu0
    %v2437 = vpop.trf.xlu0
    %v2438 = vpop.trf.xlu0
    %v2439 = vpop.trf.xlu0
    %v2440 = vpop.trf.xlu0
    %v2441 = vpop.trf.xlu0
    %v2442 = vpop.trf.xlu0
    %v2443 = vpop.trf.xlu0
    %v2444 = vpop.trf.xlu0
    %v2445 = vpop.trf.xlu0
    %v2446 = vpop.trf.xlu0
    %v2447 = vpop.trf.xlu0
    %v2448 = vpop.trf.xlu0
    %v2449 = vpop.trf.xlu0
    %v2450 = vpop.trf.xlu0
    %v2451 = vpop.trf.xlu0
    %vm2452 = vcmask 64512
    %v2454 = vsel %vm2452, %v2372, 0
    %v2457 = vsel %vm2452, %v2373, 0
    %v2460 = vsel %vm2452, %v2374, 0
    %v2463 = vsel %vm2452, %v2375, 0
    %v2466 = vsel %vm2452, %v2376, 0
    %v2469 = vsel %vm2452, %v2377, 0
    %v2472 = vsel %vm2452, %v2378, 0
    %v2475 = vsel %vm2452, %v2379, 0
    %v2478 = vsel %vm2452, %v2380, 0
    %v2481 = vsel %vm2452, %v2381, 0
    %v2484 = vsel %vm2452, %v2382, 0
    %v2487 = vsel %vm2452, %v2383, 0
    %v2490 = vsel %vm2452, %v2384, 0
    %v2493 = vsel %vm2452, %v2385, 0
    %v2496 = vsel %vm2452, %v2386, 0
    %v2499 = vsel %vm2452, %v2387, 0
    %v2502 = vsel %vm2452, %v2404, 0
    %v2505 = vsel %vm2452, %v2405, 0
    %v2508 = vsel %vm2452, %v2406, 0
    %v2511 = vsel %vm2452, %v2407, 0
    %v2514 = vsel %vm2452, %v2408, 0
    %v2517 = vsel %vm2452, %v2409, 0
    %v2520 = vsel %vm2452, %v2410, 0
    %v2523 = vsel %vm2452, %v2411, 0
    %v2526 = vsel %vm2452, %v2412, 0
    %v2529 = vsel %vm2452, %v2413, 0
    %v2532 = vsel %vm2452, %v2414, 0
    %v2535 = vsel %vm2452, %v2415, 0
    %v2538 = vsel %vm2452, %v2416, 0
    %v2541 = vsel %vm2452, %v2417, 0
    %v2544 = vsel %vm2452, %v2418, 0
    %v2547 = vsel %vm2452, %v2419, 0
    %v2550 = vsel %vm2452, %v2436, 0
    %v2553 = vsel %vm2452, %v2437, 0
    %v2556 = vsel %vm2452, %v2438, 0
    %v2559 = vsel %vm2452, %v2439, 0
    %v2562 = vsel %vm2452, %v2440, 0
    %v2565 = vsel %vm2452, %v2441, 0
    %v2568 = vsel %vm2452, %v2442, 0
    %v2571 = vsel %vm2452, %v2443, 0
    %v2574 = vsel %vm2452, %v2444, 0
    %v2577 = vsel %vm2452, %v2445, 0
    %v2580 = vsel %vm2452, %v2446, 0
    %v2583 = vsel %vm2452, %v2447, 0
    %v2586 = vsel %vm2452, %v2448, 0
    %v2589 = vsel %vm2452, %v2449, 0
    %v2592 = vsel %vm2452, %v2450, 0
    %v2595 = vsel %vm2452, %v2451, 0
    %2597 = vmatprep.subr.mxu0 0.0
    %2598 = vmatpush1.msra.mxu0 %v2132
    %2599 = vmatprep.subr.mxu0 0.0
    %2600 = vmatpush1.msra.mxu0 0.0
    %2601 = vmatprep.subr.mxu0 0.0
    %2602 = vmatpush1.msra.mxu0 0.0
    %2603 = vmatprep.subr.mxu0 0.0
    %2604 = vmatpush1.msra.mxu0 0.0
    %2605 = vmatprep.subr.mxu0 0.0
    %2606 = vmatpush1.msra.mxu0 0.0
    %2607 = vmatprep.subr.mxu0 0.0
    %2608 = vmatpush1.msra.mxu0 0.0
    %2609 = vmatprep.subr.mxu0 0.0
    %2610 = vmatpush1.msra.mxu0 0.0
    %2611 = vmatprep.subr.mxu0 0.0
    %2612 = vmatpush1.msra.mxu0 0.0
    %2613 = vmatprep.subr.mxu0 0.0
    %2614 = vmatpush1.msra.mxu0 0.0
    %2615 = vmatprep.subr.mxu0 0.0
    %2616 = vmatpush1.msra.mxu0 0.0
    %2617 = vmatprep.subr.mxu0 0.0
    %2618 = vmatpush1.msra.mxu0 0.0
    %2619 = vmatprep.subr.mxu0 0.0
    %2620 = vmatpush1.msra.mxu0 0.0
    %2621 = vmatprep.subr.mxu0 0.0
    %2622 = vmatpush1.msra.mxu0 0.0
    %2623 = vmatprep.subr.mxu0 0.0
    %2624 = vmatpush1.msra.mxu0 0.0
    %2625 = vmatprep.subr.mxu0 0.0
    %2626 = vmatpush1.msra.mxu0 0.0
    %2627 = vmatprep.subr.mxu0 0.0
    %2628 = vmatpush1.msra.mxu0 0.0
    %2629 = vmatprep.subr.mxu0 0.0
    %2630 = vmatpush1.msra.mxu0 0.0
    %2631 = vmatprep.subr.mxu0 0.0
    %2632 = vmatpush1.msra.mxu0 0.0
    %2633 = vmatprep.subr.mxu0 0.0
    %2634 = vmatpush1.msra.mxu0 0.0
    %2635 = vmatprep.subr.mxu0 0.0
    %2636 = vmatpush1.msra.mxu0 0.0
    %2637 = vmatprep.subr.mxu0 0.0
    %2638 = vmatpush1.msra.mxu0 0.0
    %2639 = vmatprep.subr.mxu0 0.0
    %2640 = vmatpush1.msra.mxu0 0.0
    %2641 = vmatprep.subr.mxu0 0.0
    %2642 = vmatpush1.msra.mxu0 0.0
    %2643 = vmatprep.subr.mxu0 0.0
    %2644 = vmatpush1.msra.mxu0 0.0
    %2645 = vmatprep.subr.mxu0 0.0
    %2646 = vmatpush1.msra.mxu0 0.0
    %2647 = vmatprep.subr.mxu0 0.0
    %2648 = vmatpush1.msra.mxu0 0.0
    %2649 = vmatprep.subr.mxu0 0.0
    %2650 = vmatpush1.msra.mxu0 0.0
    %2651 = vmatprep.subr.mxu0 0.0
    %2652 = vmatpush1.msra.mxu0 0.0
    %2653 = vmatprep.subr.mxu0 0.0
    %2654 = vmatpush1.msra.mxu0 0.0
    %2655 = vmatprep.subr.mxu0 0.0
    %2656 = vmatpush1.msra.mxu0 0.0
    %2657 = vmatprep.subr.mxu0 0.0
    %2658 = vmatpush1.msra.mxu0 0.0
    %2659 = vmatprep.subr.mxu0 0.0
    %2660 = vmatpush1.msra.mxu0 0.0
    %2661 = vmatprep.mubr.f32.mxu0 0.0
    %2662 = vmatmul.mubr.f32.gmra.mrb[0].mxu0 %v2454
    %v2663 = vpop.f32.mrb[0].mxu0
    %v2664 = vadd.f32 0.0, %v2663
    %v2665 = vpop.f32.mrb[0].mxu0
    %2666 = vmatprep.mubr.f32.mxu0 0.0
    %2667 = vmatmul.mubr.f32.gmra.mrb[0].mxu0 %v2457
    %v2668 = vpop.f32.mrb[0].mxu0
    %v2669 = vadd.f32 0.0, %v2668
    %v2670 = vpop.f32.mrb[0].mxu0
    %2671 = vmatprep.mubr.f32.mxu0 0.0
    %2672 = vmatmul.mubr.f32.gmra.mrb[0].mxu0 %v2460
    %v2673 = vpop.f32.mrb[0].mxu0
    %v2674 = vadd.f32 0.0, %v2673
    %v2675 = vpop.f32.mrb[0].mxu0
    %2676 = vmatprep.mubr.f32.mxu0 0.0
    %2677 = vmatmul.mubr.f32.gmra.mrb[0].mxu0 %v2463
    %v2678 = vpop.f32.mrb[0].mxu0
    %v2679 = vadd.f32 0.0, %v2678
    %v2680 = vpop.f32.mrb[0].mxu0
    %2681 = vmatprep.mubr.f32.mxu0 0.0
    %2682 = vmatmul.mubr.f32.gmra.mrb[0].mxu0 %v2466
    %v2683 = vpop.f32.mrb[0].mxu0
    %v2684 = vadd.f32 0.0, %v2683
    %v2685 = vpop.f32.mrb[0].mxu0
    %2686 = vmatprep.mubr.f32.mxu0 0.0
    %2687 = vmatmul.mubr.f32.gmra.mrb[0].mxu0 %v2469
    %v2688 = vpop.f32.mrb[0].mxu0
    %v2689 = vadd.f32 0.0, %v2688
    %v2690 = vpop.f32.mrb[0].mxu0
    %2691 = vmatprep.mubr.f32.mxu0 0.0
    %2692 = vmatmul.mubr.f32.gmra.mrb[0].mxu0 %v2472
    %v2693 = vpop.f32.mrb[0].mxu0
    %v2694 = vadd.f32 0.0, %v2693
    %v2695 = vpop.f32.mrb[0].mxu0
    %2696 = vmatprep.mubr.f32.mxu0 0.0
    %2697 = vmatmul.mubr.f32.gmra.mrb[0].mxu0 %v2475
    %v2698 = vpop.f32.mrb[0].mxu0
    %v2699 = vadd.f32 0.0, %v2698
    %v2700 = vpop.f32.mrb[0].mxu0
    %2701 = vmatprep.mubr.f32.mxu0 0.0
    %2702 = vmatmul.mubr.f32.gmra.mrb[0].mxu0 %v2478
    %v2703 = vpop.f32.mrb[0].mxu0
    %v2704 = vadd.f32 0.0, %v2703
    %v2705 = vpop.f32.mrb[0].mxu0
    %2706 = vmatprep.mubr.f32.mxu0 0.0
    %2707 = vmatmul.mubr.f32.gmra.mrb[0].mxu0 %v2481
    %v2708 = vpop.f32.mrb[0].mxu0
    %v2709 = vadd.f32 0.0, %v2708
    %v2710 = vpop.f32.mrb[0].mxu0
    %2711 = vmatprep.mubr.f32.mxu0 0.0
    %2712 = vmatmul.mubr.f32.gmra.mrb[0].mxu0 %v2484
    %v2713 = vpop.f32.mrb[0].mxu0
    %v2714 = vadd.f32 0.0, %v2713
    %v2715 = vpop.f32.mrb[0].mxu0
    %2716 = vmatprep.mubr.f32.mxu0 0.0
    %2717 = vmatmul.mubr.f32.gmra.mrb[0].mxu0 %v2487
    %v2718 = vpop.f32.mrb[0].mxu0
    %v2719 = vadd.f32 0.0, %v2718
    %v2720 = vpop.f32.mrb[0].mxu0
    %2721 = vmatprep.mubr.f32.mxu0 0.0
    %2722 = vmatmul.mubr.f32.gmra.mrb[0].mxu0 %v2490
    %v2723 = vpop.f32.mrb[0].mxu0
    %v2724 = vadd.f32 0.0, %v2723
    %v2725 = vpop.f32.mrb[0].mxu0
    %2726 = vmatprep.mubr.f32.mxu0 0.0
    %2727 = vmatmul.mubr.f32.gmra.mrb[0].mxu0 %v2493
    %v2728 = vpop.f32.mrb[0].mxu0
    %v2729 = vadd.f32 0.0, %v2728
    %v2730 = vpop.f32.mrb[0].mxu0
    %2731 = vmatprep.mubr.f32.mxu0 0.0
    %2732 = vmatmul.mubr.f32.gmra.mrb[0].mxu0 %v2496
    %v2733 = vpop.f32.mrb[0].mxu0
    %v2734 = vadd.f32 0.0, %v2733
    %v2735 = vpop.f32.mrb[0].mxu0
    %2736 = vmatprep.mubr.f32.mxu0 0.0
    %2737 = vmatmul.mubr.f32.gmra.mrb[0].mxu0 %v2499
    %v2738 = vpop.f32.mrb[0].mxu0
    %v2739 = vadd.f32 0.0, %v2738
    %v2740 = vpop.f32.mrb[0].mxu0
    %2741 = vmatprep.mubr.f32.mxu0 0.0
    %2742 = vmatmul.mubr.f32.gmra.mrb[0].mxu0 %v2502
    %v2743 = vpop.f32.mrb[0].mxu0
    %v2744 = vadd.f32 0.0, %v2743
    %v2745 = vpop.f32.mrb[0].mxu0
    %2746 = vmatprep.mubr.f32.mxu0 0.0
    %2747 = vmatmul.mubr.f32.gmra.mrb[0].mxu0 %v2505
    %v2748 = vpop.f32.mrb[0].mxu0
    %v2749 = vadd.f32 0.0, %v2748
    %v2750 = vpop.f32.mrb[0].mxu0
    %2751 = vmatprep.mubr.f32.mxu0 0.0
    %2752 = vmatmul.mubr.f32.gmra.mrb[0].mxu0 %v2508
    %v2753 = vpop.f32.mrb[0].mxu0
    %v2754 = vadd.f32 0.0, %v2753
    %v2755 = vpop.f32.mrb[0].mxu0
    %2756 = vmatprep.mubr.f32.mxu0 0.0
    %2757 = vmatmul.mubr.f32.gmra.mrb[0].mxu0 %v2511
    %v2758 = vpop.f32.mrb[0].mxu0
    %v2759 = vadd.f32 0.0, %v2758
    %v2760 = vpop.f32.mrb[0].mxu0
    %2761 = vmatprep.mubr.f32.mxu0 0.0
    %2762 = vmatmul.mubr.f32.gmra.mrb[0].mxu0 %v2514
    %v2763 = vpop.f32.mrb[0].mxu0
    %v2764 = vadd.f32 0.0, %v2763
    %v2765 = vpop.f32.mrb[0].mxu0
    %2766 = vmatprep.mubr.f32.mxu0 0.0
    %2767 = vmatmul.mubr.f32.gmra.mrb[0].mxu0 %v2517
    %v2768 = vpop.f32.mrb[0].mxu0
    %v2769 = vadd.f32 0.0, %v2768
    %v2770 = vpop.f32.mrb[0].mxu0
    %2771 = vmatprep.mubr.f32.mxu0 0.0
    %2772 = vmatmul.mubr.f32.gmra.mrb[0].mxu0 %v2520
    %v2773 = vpop.f32.mrb[0].mxu0
    %v2774 = vadd.f32 0.0, %v2773
    %v2775 = vpop.f32.mrb[0].mxu0
    %2776 = vmatprep.mubr.f32.mxu0 0.0
    %2777 = vmatmul.mubr.f32.gmra.mrb[0].mxu0 %v2523
    %v2778 = vpop.f32.mrb[0].mxu0
    %v2779 = vadd.f32 0.0, %v2778
    %v2780 = vpop.f32.mrb[0].mxu0
    %2781 = vmatprep.mubr.f32.mxu0 0.0
    %2782 = vmatmul.mubr.f32.gmra.mrb[0].mxu0 %v2526
    %v2783 = vpop.f32.mrb[0].mxu0
    %v2784 = vadd.f32 0.0, %v2783
    %v2785 = vpop.f32.mrb[0].mxu0
    %2786 = vmatprep.mubr.f32.mxu0 0.0
    %2787 = vmatmul.mubr.f32.gmra.mrb[0].mxu0 %v2529
    %v2788 = vpop.f32.mrb[0].mxu0
    %v2789 = vadd.f32 0.0, %v2788
    %v2790 = vpop.f32.mrb[0].mxu0
    %2791 = vmatprep.mubr.f32.mxu0 0.0
    %2792 = vmatmul.mubr.f32.gmra.mrb[0].mxu0 %v2532
    %v2793 = vpop.f32.mrb[0].mxu0
    %v2794 = vadd.f32 0.0, %v2793
    %v2795 = vpop.f32.mrb[0].mxu0
    %2796 = vmatprep.mubr.f32.mxu0 0.0
    %2797 = vmatmul.mubr.f32.gmra.mrb[0].mxu0 %v2535
    %v2798 = vpop.f32.mrb[0].mxu0
    %v2799 = vadd.f32 0.0, %v2798
    %v2800 = vpop.f32.mrb[0].mxu0
    %2801 = vmatprep.mubr.f32.mxu0 0.0
    %2802 = vmatmul.mubr.f32.gmra.mrb[0].mxu0 %v2538
    %v2803 = vpop.f32.mrb[0].mxu0
    %v2804 = vadd.f32 0.0, %v2803
    %v2805 = vpop.f32.mrb[0].mxu0
    %2806 = vmatprep.mubr.f32.mxu0 0.0
    %2807 = vmatmul.mubr.f32.gmra.mrb[0].mxu0 %v2541
    %v2808 = vpop.f32.mrb[0].mxu0
    %v2809 = vadd.f32 0.0, %v2808
    %v2810 = vpop.f32.mrb[0].mxu0
    %2811 = vmatprep.mubr.f32.mxu0 0.0
    %2812 = vmatmul.mubr.f32.gmra.mrb[0].mxu0 %v2544
    %v2813 = vpop.f32.mrb[0].mxu0
    %v2814 = vadd.f32 0.0, %v2813
    %v2815 = vpop.f32.mrb[0].mxu0
    %2816 = vmatprep.mubr.f32.mxu0 0.0
    %2817 = vmatmul.mubr.f32.gmra.mrb[0].mxu0 %v2547
    %v2818 = vpop.f32.mrb[0].mxu0
    %v2819 = vadd.f32 0.0, %v2818
    %v2820 = vpop.f32.mrb[0].mxu0
    %2821 = vmatprep.mubr.f32.mxu0 0.0
    %2822 = vmatmul.mubr.f32.gmra.mrb[0].mxu0 %v2550
    %v2823 = vpop.f32.mrb[0].mxu0
    %v2824 = vadd.f32 0.0, %v2823
    %v2825 = vpop.f32.mrb[0].mxu0
    %2826 = vmatprep.mubr.f32.mxu0 0.0
    %2827 = vmatmul.mubr.f32.gmra.mrb[0].mxu0 %v2553
    %v2828 = vpop.f32.mrb[0].mxu0
    %v2829 = vadd.f32 0.0, %v2828
    %v2830 = vpop.f32.mrb[0].mxu0
    %2831 = vmatprep.mubr.f32.mxu0 0.0
    %2832 = vmatmul.mubr.f32.gmra.mrb[0].mxu0 %v2556
    %v2833 = vpop.f32.mrb[0].mxu0
    %v2834 = vadd.f32 0.0, %v2833
    %v2835 = vpop.f32.mrb[0].mxu0
    %2836 = vmatprep.mubr.f32.mxu0 0.0
    %2837 = vmatmul.mubr.f32.gmra.mrb[0].mxu0 %v2559
    %v2838 = vpop.f32.mrb[0].mxu0
    %v2839 = vadd.f32 0.0, %v2838
    %v2840 = vpop.f32.mrb[0].mxu0
    %2841 = vmatprep.mubr.f32.mxu0 0.0
    %2842 = vmatmul.mubr.f32.gmra.mrb[0].mxu0 %v2562
    %v2843 = vpop.f32.mrb[0].mxu0
    %v2844 = vadd.f32 0.0, %v2843
    %v2845 = vpop.f32.mrb[0].mxu0
    %2846 = vmatprep.mubr.f32.mxu0 0.0
    %2847 = vmatmul.mubr.f32.gmra.mrb[0].mxu0 %v2565
    %v2848 = vpop.f32.mrb[0].mxu0
    %v2849 = vadd.f32 0.0, %v2848
    %v2850 = vpop.f32.mrb[0].mxu0
    %2851 = vmatprep.mubr.f32.mxu0 0.0
    %2852 = vmatmul.mubr.f32.gmra.mrb[0].mxu0 %v2568
    %v2853 = vpop.f32.mrb[0].mxu0
    %v2854 = vadd.f32 0.0, %v2853
    %v2855 = vpop.f32.mrb[0].mxu0
    %2856 = vmatprep.mubr.f32.mxu0 0.0
    %2857 = vmatmul.mubr.f32.gmra.mrb[0].mxu0 %v2571
    %v2858 = vpop.f32.mrb[0].mxu0
    %v2859 = vadd.f32 0.0, %v2858
    %v2860 = vpop.f32.mrb[0].mxu0
    %2861 = vmatprep.mubr.f32.mxu0 0.0
    %2862 = vmatmul.mubr.f32.gmra.mrb[0].mxu0 %v2574
    %v2863 = vpop.f32.mrb[0].mxu0
    %v2864 = vadd.f32 0.0, %v2863
    %v2865 = vpop.f32.mrb[0].mxu0
    %2866 = vmatprep.mubr.f32.mxu0 0.0
    %2867 = vmatmul.mubr.f32.gmra.mrb[0].mxu0 %v2577
    %v2868 = vpop.f32.mrb[0].mxu0
    %v2869 = vadd.f32 0.0, %v2868
    %v2870 = vpop.f32.mrb[0].mxu0
    %2871 = vmatprep.mubr.f32.mxu0 0.0
    %2872 = vmatmul.mubr.f32.gmra.mrb[0].mxu0 %v2580
    %v2873 = vpop.f32.mrb[0].mxu0
    %v2874 = vadd.f32 0.0, %v2873
    %v2875 = vpop.f32.mrb[0].mxu0
    %2876 = vmatprep.mubr.f32.mxu0 0.0
    %2877 = vmatmul.mubr.f32.gmra.mrb[0].mxu0 %v2583
    %v2878 = vpop.f32.mrb[0].mxu0
    %v2879 = vadd.f32 0.0, %v2878
    %v2880 = vpop.f32.mrb[0].mxu0
    %2881 = vmatprep.mubr.f32.mxu0 0.0
    %2882 = vmatmul.mubr.f32.gmra.mrb[0].mxu0 %v2586
    %v2883 = vpop.f32.mrb[0].mxu0
    %v2884 = vadd.f32 0.0, %v2883
    %v2885 = vpop.f32.mrb[0].mxu0
    %2886 = vmatprep.mubr.f32.mxu0 0.0
    %2887 = vmatmul.mubr.f32.gmra.mrb[0].mxu0 %v2589
    %v2888 = vpop.f32.mrb[0].mxu0
    %v2889 = vadd.f32 0.0, %v2888
    %v2890 = vpop.f32.mrb[0].mxu0
    %2891 = vmatprep.mubr.f32.mxu0 0.0
    %2892 = vmatmul.mubr.f32.gmra.mrb[0].mxu0 %v2592
    %v2893 = vpop.f32.mrb[0].mxu0
    %v2894 = vadd.f32 0.0, %v2893
    %v2895 = vpop.f32.mrb[0].mxu0
    %2896 = vmatprep.mubr.f32.mxu0 0.0
    %2897 = vmatmul.mubr.f32.gmra.mrb[0].mxu0 %v2595
    %v2898 = vpop.f32.mrb[0].mxu0
    %v2899 = vadd.f32 0.0, %v2898
    %v2900 = vpop.f32.mrb[0].mxu0
    %2901 = vdwg.mxu0
    %v2902 = vadd.s32 %v2344, 8
    %v2903 = vadd.s32 %v2344, 16
    %v2904 = vadd.s32 %v2344, 24
    %v2905 = vadd.s32 %v2344, 32
    %v2906 = vadd.s32 %v2344, 40
    %v2907 = vadd.s32 %v2344, 48
    %v2908 = vadd.s32 %v2344, 56
    %v2909 = vadd.s32 %v2344, 64
    %v2910 = vadd.s32 %v2344, 72
    %v2911 = vadd.s32 %v2344, 80
    %v2912 = vadd.s32 %v2344, 88
    %v2913 = vadd.s32 %v2344, 96
    %v2914 = vadd.s32 %v2344, 104
    %v2915 = vadd.s32 %v2344, 112
    %v2916 = vadd.s32 %v2344, 120
    %v2917 = vadd.s32 %v2344, 128
    %v2918 = vadd.s32 %v2344, 136
    %v2919 = vadd.s32 %v2344, 144
    %v2920 = vadd.s32 %v2344, 152
    %v2921 = vadd.s32 %v2344, 160
    %v2922 = vadd.s32 %v2344, 168
    %v2923 = vadd.s32 %v2344, 176
    %v2924 = vadd.s32 %v2344, 184
    %v2925 = vadd.s32 %v2344, 192
    %v2926 = vadd.s32 %v2344, 200
    %v2927 = vadd.s32 %v2344, 208
    %v2928 = vadd.s32 %v2344, 216
    %v2929 = vadd.s32 %v2344, 224
    %v2930 = vadd.s32 %v2344, 232
    %v2931 = vadd.s32 %v2344, 240
    %v2932 = vadd.s32 %v2344, 248
    %v2933 = vadd.s32 %v2344, 256
    %v2934 = vadd.s32 %v2344, 264
    %v2935 = vadd.s32 %v2344, 272
    %v2936 = vadd.s32 %v2344, 280
    %v2937 = vadd.s32 %v2344, 288
    %v2938 = vadd.s32 %v2344, 296
    %v2939 = vadd.s32 %v2344, 304
    %v2940 = vadd.s32 %v2344, 312
    %v2941 = vadd.s32 %v2344, 320
    %v2942 = vadd.s32 %v2344, 328
    %v2943 = vadd.s32 %v2344, 336
    %v2944 = vadd.s32 %v2344, 344
    %v2945 = vadd.s32 %v2344, 352
    %v2946 = vadd.s32 %v2344, 360
    %v2947 = vadd.s32 %v2344, 368
    %v2948 = vadd.s32 %v2344, 376
    %vm2949 = vcmp.ge.s32.totalorder %v2344, %v2345
    %vm2950 = vcmp.ge.s32.totalorder %v2902, %v2345
    %vm2951 = vcmp.ge.s32.totalorder %v2903, %v2345
    %vm2952 = vcmp.ge.s32.totalorder %v2904, %v2345
    %vm2953 = vcmp.ge.s32.totalorder %v2905, %v2345
    %vm2954 = vcmp.ge.s32.totalorder %v2906, %v2345
    %vm2955 = vcmp.ge.s32.totalorder %v2907, %v2345
    %vm2956 = vcmp.ge.s32.totalorder %v2908, %v2345
    %vm2957 = vcmp.ge.s32.totalorder %v2909, %v2345
    %vm2958 = vcmp.ge.s32.totalorder %v2910, %v2345
    %vm2959 = vcmp.ge.s32.totalorder %v2911, %v2345
    %vm2960 = vcmp.ge.s32.totalorder %v2912, %v2345
    %vm2961 = vcmp.ge.s32.totalorder %v2913, %v2345
    %vm2962 = vcmp.ge.s32.totalorder %v2914, %v2345
    %vm2963 = vcmp.ge.s32.totalorder %v2915, %v2345
    %vm2964 = vcmp.ge.s32.totalorder %v2916, %v2345
    %vm2965 = vcmp.ge.s32.totalorder %v2917, %v2345
    %vm2966 = vcmp.ge.s32.totalorder %v2918, %v2345
    %vm2967 = vcmp.ge.s32.totalorder %v2919, %v2345
    %vm2968 = vcmp.ge.s32.totalorder %v2920, %v2345
    %vm2969 = vcmp.ge.s32.totalorder %v2921, %v2345
    %vm2970 = vcmp.ge.s32.totalorder %v2922, %v2345
    %vm2971 = vcmp.ge.s32.totalorder %v2923, %v2345
    %vm2972 = vcmp.ge.s32.totalorder %v2924, %v2345
    %vm2973 = vcmp.ge.s32.totalorder %v2925, %v2345
    %vm2974 = vcmp.ge.s32.totalorder %v2926, %v2345
    %vm2975 = vcmp.ge.s32.totalorder %v2927, %v2345
    %vm2976 = vcmp.ge.s32.totalorder %v2928, %v2345
    %vm2977 = vcmp.ge.s32.totalorder %v2929, %v2345
    %vm2978 = vcmp.ge.s32.totalorder %v2930, %v2345
    %vm2979 = vcmp.ge.s32.totalorder %v2931, %v2345
    %vm2980 = vcmp.ge.s32.totalorder %v2932, %v2345
    %vm2981 = vcmp.ge.s32.totalorder %v2933, %v2345
    %vm2982 = vcmp.ge.s32.totalorder %v2934, %v2345
    %vm2983 = vcmp.ge.s32.totalorder %v2935, %v2345
    %vm2984 = vcmp.ge.s32.totalorder %v2936, %v2345
    %vm2985 = vcmp.ge.s32.totalorder %v2937, %v2345
    %vm2986 = vcmp.ge.s32.totalorder %v2938, %v2345
    %vm2987 = vcmp.ge.s32.totalorder %v2939, %v2345
    %vm2988 = vcmp.ge.s32.totalorder %v2940, %v2345
    %vm2989 = vcmp.ge.s32.totalorder %v2941, %v2345
    %vm2990 = vcmp.ge.s32.totalorder %v2942, %v2345
    %vm2991 = vcmp.ge.s32.totalorder %v2943, %v2345
    %vm2992 = vcmp.ge.s32.totalorder %v2944, %v2345
    %vm2993 = vcmp.ge.s32.totalorder %v2945, %v2345
    %vm2994 = vcmp.ge.s32.totalorder %v2946, %v2345
    %vm2995 = vcmp.ge.s32.totalorder %v2947, %v2345
    %vm2996 = vcmp.ge.s32.totalorder %v2948, %v2345
    %s2997 = sadd.s32 %s2341, 9
    %v2998 = vstv %s2997
    %vm2999 = vcmp.lt.s32.totalorder %v2344, %v2998
    %vm3000 = vcmp.lt.s32.totalorder %v2902, %v2998
    %vm3001 = vcmp.lt.s32.totalorder %v2903, %v2998
    %vm3002 = vcmp.lt.s32.totalorder %v2904, %v2998
    %vm3003 = vcmp.lt.s32.totalorder %v2905, %v2998
    %vm3004 = vcmp.lt.s32.totalorder %v2906, %v2998
    %vm3005 = vcmp.lt.s32.totalorder %v2907, %v2998
    %vm3006 = vcmp.lt.s32.totalorder %v2908, %v2998
    %vm3007 = vcmp.lt.s32.totalorder %v2909, %v2998
    %vm3008 = vcmp.lt.s32.totalorder %v2910, %v2998
    %vm3009 = vcmp.lt.s32.totalorder %v2911, %v2998
    %vm3010 = vcmp.lt.s32.totalorder %v2912, %v2998
    %vm3011 = vcmp.lt.s32.totalorder %v2913, %v2998
    %vm3012 = vcmp.lt.s32.totalorder %v2914, %v2998
    %vm3013 = vcmp.lt.s32.totalorder %v2915, %v2998
    %vm3014 = vcmp.lt.s32.totalorder %v2916, %v2998
    %vm3015 = vcmp.lt.s32.totalorder %v2917, %v2998
    %vm3016 = vcmp.lt.s32.totalorder %v2918, %v2998
    %vm3017 = vcmp.lt.s32.totalorder %v2919, %v2998
    %vm3018 = vcmp.lt.s32.totalorder %v2920, %v2998
    %vm3019 = vcmp.lt.s32.totalorder %v2921, %v2998
    %vm3020 = vcmp.lt.s32.totalorder %v2922, %v2998
    %vm3021 = vcmp.lt.s32.totalorder %v2923, %v2998
    %vm3022 = vcmp.lt.s32.totalorder %v2924, %v2998
    %vm3023 = vcmp.lt.s32.totalorder %v2925, %v2998
    %vm3024 = vcmp.lt.s32.totalorder %v2926, %v2998
    %vm3025 = vcmp.lt.s32.totalorder %v2927, %v2998
    %vm3026 = vcmp.lt.s32.totalorder %v2928, %v2998
    %vm3027 = vcmp.lt.s32.totalorder %v2929, %v2998
    %vm3028 = vcmp.lt.s32.totalorder %v2930, %v2998
    %vm3029 = vcmp.lt.s32.totalorder %v2931, %v2998
    %vm3030 = vcmp.lt.s32.totalorder %v2932, %v2998
    %vm3031 = vcmp.lt.s32.totalorder %v2933, %v2998
    %vm3032 = vcmp.lt.s32.totalorder %v2934, %v2998
    %vm3033 = vcmp.lt.s32.totalorder %v2935, %v2998
    %vm3034 = vcmp.lt.s32.totalorder %v2936, %v2998
    %vm3035 = vcmp.lt.s32.totalorder %v2937, %v2998
    %vm3036 = vcmp.lt.s32.totalorder %v2938, %v2998
    %vm3037 = vcmp.lt.s32.totalorder %v2939, %v2998
    %vm3038 = vcmp.lt.s32.totalorder %v2940, %v2998
    %vm3039 = vcmp.lt.s32.totalorder %v2941, %v2998
    %vm3040 = vcmp.lt.s32.totalorder %v2942, %v2998
    %vm3041 = vcmp.lt.s32.totalorder %v2943, %v2998
    %vm3042 = vcmp.lt.s32.totalorder %v2944, %v2998
    %vm3043 = vcmp.lt.s32.totalorder %v2945, %v2998
    %vm3044 = vcmp.lt.s32.totalorder %v2946, %v2998
    %vm3045 = vcmp.lt.s32.totalorder %v2947, %v2998
    %vm3046 = vcmp.lt.s32.totalorder %v2948, %v2998
    %vm3047 = vmand %vm2949, %vm2999
    %vm3048 = vmand %vm2950, %vm3000
    %vm3049 = vmand %vm2951, %vm3001
    %vm3050 = vmand %vm2952, %vm3002
    %vm3051 = vmand %vm2953, %vm3003
    %vm3052 = vmand %vm2954, %vm3004
    %vm3053 = vmand %vm2955, %vm3005
    %vm3054 = vmand %vm2956, %vm3006
    %vm3055 = vmand %vm2957, %vm3007
    %vm3056 = vmand %vm2958, %vm3008
    %vm3057 = vmand %vm2959, %vm3009
    %vm3058 = vmand %vm2960, %vm3010
    %vm3059 = vmand %vm2961, %vm3011
    %vm3060 = vmand %vm2962, %vm3012
    %vm3061 = vmand %vm2963, %vm3013
    %vm3062 = vmand %vm2964, %vm3014
    %vm3063 = vmand %vm2965, %vm3015
    %vm3064 = vmand %vm2966, %vm3016
    %vm3065 = vmand %vm2967, %vm3017
    %vm3066 = vmand %vm2968, %vm3018
    %vm3067 = vmand %vm2969, %vm3019
    %vm3068 = vmand %vm2970, %vm3020
    %vm3069 = vmand %vm2971, %vm3021
    %vm3070 = vmand %vm2972, %vm3022
    %vm3071 = vmand %vm2973, %vm3023
    %vm3072 = vmand %vm2974, %vm3024
    %vm3073 = vmand %vm2975, %vm3025
    %vm3074 = vmand %vm2976, %vm3026
    %vm3075 = vmand %vm2977, %vm3027
    %vm3076 = vmand %vm2978, %vm3028
    %vm3077 = vmand %vm2979, %vm3029
    %vm3078 = vmand %vm2980, %vm3030
    %vm3079 = vmand %vm2981, %vm3031
    %vm3080 = vmand %vm2982, %vm3032
    %vm3081 = vmand %vm2983, %vm3033
    %vm3082 = vmand %vm2984, %vm3034
    %vm3083 = vmand %vm2985, %vm3035
    %vm3084 = vmand %vm2986, %vm3036
    %vm3085 = vmand %vm2987, %vm3037
    %vm3086 = vmand %vm2988, %vm3038
    %vm3087 = vmand %vm2989, %vm3039
    %vm3088 = vmand %vm2990, %vm3040
    %vm3089 = vmand %vm2991, %vm3041
    %vm3090 = vmand %vm2992, %vm3042
    %vm3091 = vmand %vm2993, %vm3043
    %vm3092 = vmand %vm2994, %vm3044
    %vm3093 = vmand %vm2995, %vm3045
    %vm3094 = vmand %vm2996, %vm3046
    %v3095 = vsel %vm3047, 1, 0
    %v3096 = vsel %vm3048, 1, 0
    %v3097 = vsel %vm3049, 1, 0
    %v3098 = vsel %vm3050, 1, 0
    %v3099 = vsel %vm3051, 1, 0
    %v3100 = vsel %vm3052, 1, 0
    %v3101 = vsel %vm3053, 1, 0
    %v3102 = vsel %vm3054, 1, 0
    %v3103 = vsel %vm3055, 1, 0
    %v3104 = vsel %vm3056, 1, 0
    %v3105 = vsel %vm3057, 1, 0
    %v3106 = vsel %vm3058, 1, 0
    %v3107 = vsel %vm3059, 1, 0
    %v3108 = vsel %vm3060, 1, 0
    %v3109 = vsel %vm3061, 1, 0
    %v3110 = vsel %vm3062, 1, 0
    %v3111 = vsel %vm3063, 1, 0
    %v3112 = vsel %vm3064, 1, 0
    %v3113 = vsel %vm3065, 1, 0
    %v3114 = vsel %vm3066, 1, 0
    %v3115 = vsel %vm3067, 1, 0
    %v3116 = vsel %vm3068, 1, 0
    %v3117 = vsel %vm3069, 1, 0
    %v3118 = vsel %vm3070, 1, 0
    %v3119 = vsel %vm3071, 1, 0
    %v3120 = vsel %vm3072, 1, 0
    %v3121 = vsel %vm3073, 1, 0
    %v3122 = vsel %vm3074, 1, 0
    %v3123 = vsel %vm3075, 1, 0
    %v3124 = vsel %vm3076, 1, 0
    %v3125 = vsel %vm3077, 1, 0
    %v3126 = vsel %vm3078, 1, 0
    %v3127 = vsel %vm3079, 1, 0
    %v3128 = vsel %vm3080, 1, 0
    %v3129 = vsel %vm3081, 1, 0
    %v3130 = vsel %vm3082, 1, 0
    %v3131 = vsel %vm3083, 1, 0
    %v3132 = vsel %vm3084, 1, 0
    %v3133 = vsel %vm3085, 1, 0
    %v3134 = vsel %vm3086, 1, 0
    %v3135 = vsel %vm3087, 1, 0
    %v3136 = vsel %vm3088, 1, 0
    %v3137 = vsel %vm3089, 1, 0
    %v3138 = vsel %vm3090, 1, 0
    %v3139 = vsel %vm3091, 1, 0
    %v3140 = vsel %vm3092, 1, 0
    %v3141 = vsel %vm3093, 1, 0
    %v3142 = vsel %vm3094, 1, 0
    %vm3143 = vcmp.eq.s32.totalorder %v3095, 1
    %vm3144 = vcmp.eq.s32.totalorder %v3096, 1
    %vm3145 = vcmp.eq.s32.totalorder %v3097, 1
    %vm3146 = vcmp.eq.s32.totalorder %v3098, 1
    %vm3147 = vcmp.eq.s32.totalorder %v3099, 1
    %vm3148 = vcmp.eq.s32.totalorder %v3100, 1
    %vm3149 = vcmp.eq.s32.totalorder %v3101, 1
    %vm3150 = vcmp.eq.s32.totalorder %v3102, 1
    %vm3151 = vcmp.eq.s32.totalorder %v3103, 1
    %vm3152 = vcmp.eq.s32.totalorder %v3104, 1
    %vm3153 = vcmp.eq.s32.totalorder %v3105, 1
    %vm3154 = vcmp.eq.s32.totalorder %v3106, 1
    %vm3155 = vcmp.eq.s32.totalorder %v3107, 1
    %vm3156 = vcmp.eq.s32.totalorder %v3108, 1
    %vm3157 = vcmp.eq.s32.totalorder %v3109, 1
    %vm3158 = vcmp.eq.s32.totalorder %v3110, 1
    %vm3159 = vcmp.eq.s32.totalorder %v3111, 1
    %vm3160 = vcmp.eq.s32.totalorder %v3112, 1
    %vm3161 = vcmp.eq.s32.totalorder %v3113, 1
    %vm3162 = vcmp.eq.s32.totalorder %v3114, 1
    %vm3163 = vcmp.eq.s32.totalorder %v3115, 1
    %vm3164 = vcmp.eq.s32.totalorder %v3116, 1
    %vm3165 = vcmp.eq.s32.totalorder %v3117, 1
    %vm3166 = vcmp.eq.s32.totalorder %v3118, 1
    %vm3167 = vcmp.eq.s32.totalorder %v3119, 1
    %vm3168 = vcmp.eq.s32.totalorder %v3120, 1
    %vm3169 = vcmp.eq.s32.totalorder %v3121, 1
    %vm3170 = vcmp.eq.s32.totalorder %v3122, 1
    %vm3171 = vcmp.eq.s32.totalorder %v3123, 1
    %vm3172 = vcmp.eq.s32.totalorder %v3124, 1
    %vm3173 = vcmp.eq.s32.totalorder %v3125, 1
    %vm3174 = vcmp.eq.s32.totalorder %v3126, 1
    %vm3175 = vcmp.eq.s32.totalorder %v3127, 1
    %vm3176 = vcmp.eq.s32.totalorder %v3128, 1
    %vm3177 = vcmp.eq.s32.totalorder %v3129, 1
    %vm3178 = vcmp.eq.s32.totalorder %v3130, 1
    %vm3179 = vcmp.eq.s32.totalorder %v3131, 1
    %vm3180 = vcmp.eq.s32.totalorder %v3132, 1
    %vm3181 = vcmp.eq.s32.totalorder %v3133, 1
    %vm3182 = vcmp.eq.s32.totalorder %v3134, 1
    %vm3183 = vcmp.eq.s32.totalorder %v3135, 1
    %vm3184 = vcmp.eq.s32.totalorder %v3136, 1
    %vm3185 = vcmp.eq.s32.totalorder %v3137, 1
    %vm3186 = vcmp.eq.s32.totalorder %v3138, 1
    %vm3187 = vcmp.eq.s32.totalorder %v3139, 1
    %vm3188 = vcmp.eq.s32.totalorder %v3140, 1
    %vm3189 = vcmp.eq.s32.totalorder %v3141, 1
    %vm3190 = vcmp.eq.s32.totalorder %v3142, 1
    %v3191 = vsel %vm3143, %v2664, %v2133
    %v3192 = vsel %vm3144, %v2669, %v2134
    %v3193 = vsel %vm3145, %v2674, %v2135
    %v3194 = vsel %vm3146, %v2679, %v2136
    %v3195 = vsel %vm3147, %v2684, %v2137
    %v3196 = vsel %vm3148, %v2689, %v2138
    %v3197 = vsel %vm3149, %v2694, %v2139
    %v3198 = vsel %vm3150, %v2699, %v2140
    %v3199 = vsel %vm3151, %v2704, %v2141
    %v3200 = vsel %vm3152, %v2709, %v2142
    %v3201 = vsel %vm3153, %v2714, %v2143
    %v3202 = vsel %vm3154, %v2719, %v2144
    %v3203 = vsel %vm3155, %v2724, %v2145
    %v3204 = vsel %vm3156, %v2729, %v2146
    %v3205 = vsel %vm3157, %v2734, %v2147
    %v3206 = vsel %vm3158, %v2739, %v2148
    %v3207 = vsel %vm3159, %v2744, %v2149
    %v3208 = vsel %vm3160, %v2749, %v2150
    %v3209 = vsel %vm3161, %v2754, %v2151
    %v3210 = vsel %vm3162, %v2759, %v2152
    %v3211 = vsel %vm3163, %v2764, %v2153
    %v3212 = vsel %vm3164, %v2769, %v2154
    %v3213 = vsel %vm3165, %v2774, %v2155
    %v3214 = vsel %vm3166, %v2779, %v2156
    %v3215 = vsel %vm3167, %v2784, %v2157
    %v3216 = vsel %vm3168, %v2789, %v2158
    %v3217 = vsel %vm3169, %v2794, %v2159
    %v3218 = vsel %vm3170, %v2799, %v2160
    %v3219 = vsel %vm3171, %v2804, %v2161
    %v3220 = vsel %vm3172, %v2809, %v2162
    %v3221 = vsel %vm3173, %v2814, %v2163
    %v3222 = vsel %vm3174, %v2819, %v2164
    %v3223 = vsel %vm3175, %v2824, %v2165
    %v3224 = vsel %vm3176, %v2829, %v2166
    %v3225 = vsel %vm3177, %v2834, %v2167
    %v3226 = vsel %vm3178, %v2839, %v2168
    %v3227 = vsel %vm3179, %v2844, %v2169
    %v3228 = vsel %vm3180, %v2849, %v2170
    %v3229 = vsel %vm3181, %v2854, %v2171
    %v3230 = vsel %vm3182, %v2859, %v2172
    %v3231 = vsel %vm3183, %v2864, %v2173
    %v3232 = vsel %vm3184, %v2869, %v2174
    %v3233 = vsel %vm3185, %v2874, %v2175
    %v3234 = vsel %vm3186, %v2879, %v2176
    %v3235 = vsel %vm3187, %v2884, %v2177
    %v3236 = vsel %vm3188, %v2889, %v2178
    %v3237 = vsel %vm3189, %v2894, %v2179
    %v3238 = vsel %vm3190, %v2899, %v2180
    %3239 = vst [vmem:[%s14] sm:$0xff] %v3191
    %3240 = vst [vmem:[%s14 + $0x8] sm:$0xff] %v3192
    %3241 = vst [vmem:[%s14 + $0x10] sm:$0xff] %v3193
    %3242 = vst [vmem:[%s14 + $0x18] sm:$0xff] %v3194
    %3243 = vst [vmem:[%s14 + $0x20] sm:$0xff] %v3195
    %3244 = vst [vmem:[%s14 + $0x28] sm:$0xff] %v3196
    %3245 = vst [vmem:[%s14 + $0x30] sm:$0xff] %v3197
    %3246 = vst [vmem:[%s14 + $0x38] sm:$0xff] %v3198
    %3247 = vst [vmem:[%s14 + $0x40] sm:$0xff] %v3199
    %3248 = vst [vmem:[%s14 + $0x48] sm:$0xff] %v3200
    %3249 = vst [vmem:[%s14 + $0x50] sm:$0xff] %v3201
    %3250 = vst [vmem:[%s14 + $0x58] sm:$0xff] %v3202
    %3251 = vst [vmem:[%s14 + $0x60] sm:$0xff] %v3203
    %3252 = vst [vmem:[%s14 + $0x68] sm:$0xff] %v3204
    %3253 = vst [vmem:[%s14 + $0x70] sm:$0xff] %v3205
    %3254 = vst [vmem:[%s14 + $0x78] sm:$0xff] %v3206
    %3255 = vst [vmem:[%s14 + $0x80] sm:$0xff] %v3207
    %3256 = vst [vmem:[%s14 + $0x88] sm:$0xff] %v3208
    %3257 = vst [vmem:[%s14 + $0x90] sm:$0xff] %v3209
    %3258 = vst [vmem:[%s14 + $0x98] sm:$0xff] %v3210
    %3259 = vst [vmem:[%s14 + $0xa0] sm:$0xff] %v3211
    %3260 = vst [vmem:[%s14 + $0xa8] sm:$0xff] %v3212
    %3261 = vst [vmem:[%s14 + $0xb0] sm:$0xff] %v3213
    %3262 = vst [vmem:[%s14 + $0xb8] sm:$0xff] %v3214
    %3263 = vst [vmem:[%s14 + $0xc0] sm:$0xff] %v3215
    %3264 = vst [vmem:[%s14 + $0xc8] sm:$0xff] %v3216
    %3265 = vst [vmem:[%s14 + $0xd0] sm:$0xff] %v3217
    %3266 = vst [vmem:[%s14 + $0xd8] sm:$0xff] %v3218
    %3267 = vst [vmem:[%s14 + $0xe0] sm:$0xff] %v3219
    %3268 = vst [vmem:[%s14 + $0xe8] sm:$0xff] %v3220
    %3269 = vst [vmem:[%s14 + $0xf0] sm:$0xff] %v3221
    %3270 = vst [vmem:[%s14 + $0xf8] sm:$0xff] %v3222
    %3271 = vst [vmem:[%s14 + $0x100] sm:$0xff] %v3223
    %3272 = vst [vmem:[%s14 + $0x108] sm:$0xff] %v3224
    %3273 = vst [vmem:[%s14 + $0x110] sm:$0xff] %v3225
    %3274 = vst [vmem:[%s14 + $0x118] sm:$0xff] %v3226
    %3275 = vst [vmem:[%s14 + $0x120] sm:$0xff] %v3227
    %3276 = vst [vmem:[%s14 + $0x128] sm:$0xff] %v3228
    %3277 = vst [vmem:[%s14 + $0x130] sm:$0xff] %v3229
    %3278 = vst [vmem:[%s14 + $0x138] sm:$0xff] %v3230
    %3279 = vst [vmem:[%s14 + $0x140] sm:$0xff] %v3231
    %3280 = vst [vmem:[%s14 + $0x148] sm:$0xff] %v3232
    %3281 = vst [vmem:[%s14 + $0x150] sm:$0xff] %v3233
    %3282 = vst [vmem:[%s14 + $0x158] sm:$0xff] %v3234
    %3283 = vst [vmem:[%s14 + $0x160] sm:$0xff] %v3235
    %3284 = vst [vmem:[%s14 + $0x168] sm:$0xff] %v3236
    %3285 = vst [vmem:[%s14 + $0x170] sm:$0xff] %v3237
    %3286 = vst [vmem:[%s14 + $0x178] sm:$0xff] %v3238
    // Predicated region
    $region50: #{mocov2_forward.1} parent=1 // pred_check
      _
    $region51: #{mocov2_forward.1} parent=1 // pred_check_branch
      %3288 = sbr.rel (0) target = $region53
    $region52: #{mocov2_forward.1} parent=1 // pred_region
      %s3290 = ssub.s32 128, 128
      %3291 = vsyncadd [#allocation4], %s3290
      %s3293 = sshll.u32 [#allocation3], 4
      %s3294 = int_to_ptr.vmem [resolvable:$true] %s3293
      %3296 = dma.vmem_to_hbm [thread:$0]  %s3294, 128, %s12, [#allocation4]
    $region53: #{mocov2_forward.1} parent=1 // pred_fallthru
      _
    // Predicated region
    $region54: #{mocov2_forward.1} parent=1 // pred_check
      _
    $region55: #{mocov2_forward.1} parent=1 // pred_check_branch
      %3298 = sbr.rel (0) target = $region57
    $region56: #{mocov2_forward.1} parent=1 // pred_region
      %s3300 = ssub.s32 384, 384
      %3301 = vsyncadd [#allocation6], %s3300
      %s3303 = sshll.u32 [#allocation5], 4
      %s3304 = int_to_ptr.vmem [resolvable:$true] %s3303
      %3306 = dma.vmem_to_hbm [thread:$0]  %s3304, 384, %s13, [#allocation6]
    $region57: #{mocov2_forward.1} parent=1 // pred_fallthru
      _
    // Predicated region
    $region58: #{mocov2_forward.1} parent=1 // pred_check
      _
    $region59: #{mocov2_forward.1} parent=1 // pred_check_branch
      %3308 = sbr.rel (0) target = $region61
    $region60: #{mocov2_forward.1} parent=1 // pred_region
      _
    $region61: #{mocov2_forward.1} parent=1 // pred_fallthru
      _
    // Predicated region
    $region62: #{mocov2_forward.1} parent=1 // pred_check
      _
    $region63: #{mocov2_forward.1} parent=1 // pred_check_branch
      %3310 = sbr.rel (0) target = $region65
    $region64: #{mocov2_forward.1} parent=1 // pred_region
      _
    $region65: #{mocov2_forward.1} parent=1 // pred_fallthru
      _
    // Predicated region
    $region66: #{mocov2_forward.1} parent=1 // pred_check
      _
    $region67: #{mocov2_forward.1} parent=1 // pred_check_branch
      %3312 = sbr.rel (0) target = $region69
    $region68: #{mocov2_forward.1} parent=1 // pred_region
      _
    $region69: #{mocov2_forward.1} parent=1 // pred_fallthru
      _
    // Predicated region
    $region70: #{mocov2_forward.1} parent=1 // pred_check
      _
    $region71: #{mocov2_forward.1} parent=1 // pred_check_branch
      %3314 = sbr.rel (0) target = $region73
    $region72: #{mocov2_forward.1} parent=1 // pred_region
      _
    $region73: #{mocov2_forward.1} parent=1 // pred_fallthru
      _
    // Predicated region
    $region74: #{mocov2_forward.1} parent=1 // pred_check
      _
    $region75: #{mocov2_forward.1} parent=1 // pred_check_branch
      %3316 = sbr.rel (0) target = $region77
    $region76: #{mocov2_forward.1} parent=1 // pred_region
      _
    $region77: #{mocov2_forward.1} parent=1 // pred_fallthru
      _
    // Predicated region
    $region78: #{mocov2_forward.1} parent=1 // pred_check
      _
    $region79: #{mocov2_forward.1} parent=1 // pred_check_branch
      %3318 = sbr.rel (0) target = $region81
    $region80: #{mocov2_forward.1} parent=1 // pred_region
      %3319 = dma.done [#allocation4], 128
    $region81: #{mocov2_forward.1} parent=1 // pred_fallthru
      _
    // Predicated region
    $region82: #{mocov2_forward.1} parent=1 // pred_check
      _
    $region83: #{mocov2_forward.1} parent=1 // pred_check_branch
      %3321 = sbr.rel (0) target = $region85
    $region84: #{mocov2_forward.1} parent=1 // pred_region
      %3322 = dma.done [#allocation6], 384
    $region85: #{mocov2_forward.1} parent=1 // pred_fallthru
      _
    // Predicated region
    $region86: #{mocov2_forward.1} parent=1 // pred_check
      _
    $region87: #{mocov2_forward.1} parent=1 // pred_check_branch
      %3324 = sbr.rel (0) target = $region89
    $region88: #{mocov2_forward.1} parent=1 // pred_region
      _
    $region89: #{mocov2_forward.1} parent=1 // pred_fallthru
      _
    // Predicated region
    $region90: #{mocov2_forward.1} parent=1 // pred_check
      _
    $region91: #{mocov2_forward.1} parent=1 // pred_check_branch
      %3326 = sbr.rel (0) target = $region93
    $region92: #{mocov2_forward.1} parent=1 // pred_region
      _
    $region93: #{mocov2_forward.1} parent=1 // pred_fallthru
      _
    // Predicated region
    $region94: #{mocov2_forward.1} parent=1 // pred_check
      _
    $region95: #{mocov2_forward.1} parent=1 // pred_check_branch
      %3328 = sbr.rel (0) target = $region97
    $region96: #{mocov2_forward.1} parent=1 // pred_region
      _
    $region97: #{mocov2_forward.1} parent=1 // pred_fallthru
      _
    // Predicated region
    $region98: #{mocov2_forward.1} parent=1 // pred_check
      _
    $region99: #{mocov2_forward.1} parent=1 // pred_check_branch
      %3330 = sbr.rel (0) target = $region101
    $region100: #{mocov2_forward.1} parent=1 // pred_region
      _
    $region101: #{mocov2_forward.1} parent=1 // pred_fallthru
      _
    // Predicated region
    $region102: #{mocov2_forward.1} parent=1 // pred_check
      _
    $region103: #{mocov2_forward.1} parent=1 // pred_check_branch
      %3332 = sbr.rel (0) target = $region105
    $region104: #{mocov2_forward.1} parent=1 // pred_region
      _
    $region105: #{mocov2_forward.1} parent=1 // pred_fallthru
      _
    %3333 = vsyncpa [#allocation4], 1
    %3334 = vsyncpa [#allocation6], 1

</llo_original>
